<compile_context>
chip_gen: v5e
topology: v5e:2x2
jax: 0.10.0
libtpu: 0.0.40
codegen_flags: <defaults>
</compile_context>

<pallas_src>
import functools

import jax
import jax.numpy as jnp
from jax.experimental import pallas as pl
from jax.experimental.pallas import tpu as pltpu

ALPHA = 0.2
BN_EPS = 1e-5
IMAGE_SIZE = 32
K_SIZE = 4
CHANNELS = 3
CONV_DIM = 64
NUM_CLASSES = 10
VMEM_LIMIT = 32 * 1024 * 1024  # explicit scoped-VMEM cap; safe on v5e/v6e/v7x


def _round_up(x, m):
    return ((x + m - 1) // m) * m


def _matmul_tiles(m, k):
    """Tile sizes: 128-lane output tiles, K in <=512 chunks, M in <=256 row blocks."""
    tm = min(256, _round_up(m, 8))
    tk = min(512, _round_up(k, 128))
    tn = 128
    return tm, tk, tn


# ---------------------------------------------------------------------------
# Pallas kernels
# ---------------------------------------------------------------------------
def _matmul_bias_act_kernel(a_ref, b_ref, bias_ref, o_ref, acc_ref, *, act):
    # a: [tm, tk] bf16, b: [tk, tn] bf16, bias: [1, tn] f32, acc: [tm, tn] f32.
    @pl.when(pl.program_id(2) == 0)
    def _init():
        acc_ref[...] = jnp.zeros_like(acc_ref)

    acc_ref[...] += jnp.dot(a_ref[...], b_ref[...],
                            preferred_element_type=jnp.float32)

    @pl.when(pl.program_id(2) == pl.num_programs(2) - 1)
    def _finalize():
        acc = acc_ref[...] + bias_ref[...]
        if act == "leaky":
            acc = jnp.where(acc >= 0.0, acc, ALPHA * acc)
        elif act == "sigmoid":
            # exp and approximate reciprocal both run on the EUP slot.
            acc = pl.reciprocal(1.0 + jnp.exp(-acc), approx=True)
        o_ref[...] = acc.astype(o_ref.dtype)


def _bn_leaky_kernel(x_ref, gamma_ref, beta_ref, o_ref, *, inv_m):
    # x: [M, 128] (one channel tile).  Training-mode BatchNorm2d: biased batch
    # statistics over the M = N*OH*OW rows, per channel.  One pass over x:
    # accumulate sum and sum-of-squares, var = E[x^2] - mean^2.
    x = x_ref[...].astype(jnp.float32)
    s1 = jnp.sum(x, axis=0, keepdims=True)
    s2 = jnp.sum(x * x, axis=0, keepdims=True)
    mean = s1 * inv_m
    var = s2 * inv_m - mean * mean
    scale = gamma_ref[...] * jax.lax.rsqrt(var + BN_EPS)
    shift = beta_ref[...] - mean * scale
    y = x * scale + shift
    o_ref[...] = jnp.where(y >= 0.0, y, ALPHA * y).astype(o_ref.dtype)


# ---------------------------------------------------------------------------
# Pallas wrappers
# ---------------------------------------------------------------------------
def matmul_bias_act(a, b_packed, bias_row, n_out, act, out_dtype):
    """act((a @ b) + bias) with a tiled, pipelined Pallas matmul.

    a:        [M, K]  (any float dtype; cast to bf16)
    b_packed: [Kp, Np] bf16, pre-padded to tile multiples at param-pack time
    bias_row: [1, Np]  f32
    returns   [M, n_out] in out_dtype
    """
    M, K = a.shape
    Kp, Np = b_packed.shape
    tm, tk, tn = _matmul_tiles(M, K)
    assert Kp % tk == 0 and Np % tn == 0
    Mp = _round_up(M, tm)

    a = a.astype(jnp.bfloat16)
    if (Mp, Kp) != (M, K):
        a = jnp.pad(a, ((0, Mp - M), (0, Kp - K)))

    grid = (Mp // tm, Np // tn, Kp // tk)
    out = pl.pallas_call(
        functools.partial(_matmul_bias_act_kernel, act=act),
        grid=grid,
        in_specs=[
            pl.BlockSpec((tm, tk), lambda i, j, k: (i, k)),
            pl.BlockSpec((tk, tn), lambda i, j, k: (k, j)),
            pl.BlockSpec((1, tn), lambda i, j, k: (0, j)),
        ],
        out_specs=pl.BlockSpec((tm, tn), lambda i, j, k: (i, j)),
        out_shape=jax.ShapeDtypeStruct((Mp, Np), out_dtype),
        scratch_shapes=[pltpu.VMEM((tm, tn), jnp.float32)],
        compiler_params=pltpu.CompilerParams(
            dimension_semantics=("parallel", "parallel", "arbitrary"),
            vmem_limit_bytes=VMEM_LIMIT),
    )(a, b_packed, bias_row)
    return out[:M, :n_out]


def batchnorm_leaky(x2d, gamma_row, beta_row):
    """leaky_relu(batchnorm(x)), batch statistics computed in-kernel, per 128-ch tile."""
    M, C = x2d.shape
    assert C % 128 == 0 and M % 8 == 0
    # TODO(synk): fuse BN statistics into the preceding conv matmul kernel to save
    #             one HBM round trip of the activation.
    return pl.pallas_call(
        functools.partial(_bn_leaky_kernel, inv_m=1.0 / M),
        grid=(C // 128,),
        in_specs=[
            pl.BlockSpec((M, 128), lambda c: (0, c)),
            pl.BlockSpec((1, 128), lambda c: (0, c)),
            pl.BlockSpec((1, 128), lambda c: (0, c)),
        ],
        out_specs=pl.BlockSpec((M, 128), lambda c: (0, c)),
        out_shape=jax.ShapeDtypeStruct((M, C), jnp.bfloat16),
        compiler_params=pltpu.CompilerParams(
            dimension_semantics=("parallel",),
            vmem_limit_bytes=VMEM_LIMIT),
    )(x2d.astype(jnp.bfloat16), gamma_row, beta_row)


# ---------------------------------------------------------------------------
# im2col glue (bf16, fused by XLA under jit) + conv wrapper
# ---------------------------------------------------------------------------
def _im2col(x_nhwc, kh, kw, stride, pad):
    N, H, W, C = x_nhwc.shape
    xp = jnp.pad(x_nhwc, ((0, 0), (pad, pad), (pad, pad), (0, 0)))
    OH = (H + 2 * pad - kh) // stride + 1
    OW = (W + 2 * pad - kw) // stride + 1
    cols = []
    for i in range(kh):
        for j in range(kw):
            cols.append(xp[:, i:i + stride * OH:stride, j:j + stride * OW:stride, :])
    patches = jnp.stack(cols, axis=3)  # [N, OH, OW, kh*kw, C]  (bf16)
    # TODO(synk): fold the kh*kw loop into the matmul grid (strided-window index_map)
    #             to avoid materializing the 16x-inflated patch matrix in HBM.
    return patches.reshape(N * OH * OW, kh * kw * C), OH, OW


def conv2d_pallas(x_nhwc, w_packed, bias_row, cout, stride, pad, act, out_dtype):
    N = x_nhwc.shape[0]
    patches, OH, OW = _im2col(x_nhwc, K_SIZE, K_SIZE, stride, pad)
    out = matmul_bias_act(patches, w_packed, bias_row, cout, act, out_dtype)
    return out.reshape(N, OH, OW, cout)


# ---------------------------------------------------------------------------
# Parameters: create torch-style weights, then pack ONCE for the MXU
# ---------------------------------------------------------------------------
def _pack_weight(w_oihw):
    cout, cin, kh, kw = w_oihw.shape
    k = kh * kw * cin
    _, tk, tn = _matmul_tiles(8, k)       # tk/tn depend only on K
    kp = _round_up(k, tk)
    np_ = _round_up(cout, tn)
    # PyTorch [Cout, Cin, KH, KW] -> [KH, KW, Cin, Cout] -> [K, Cout]  (bf16, padded)
    w_mat = jnp.transpose(w_oihw, (2, 3, 1, 0)).reshape(k, cout).astype(jnp.bfloat16)
    return jnp.zeros((kp, np_), jnp.bfloat16).at[:k, :cout].set(w_mat)


def _pack_bias(bias_vec, cout):
    np_ = _round_up(cout, 128)
    return jnp.zeros((1, np_), jnp.float32).at[0, :cout].set(bias_vec.astype(jnp.float32))


def make_params(key, num_classes=NUM_CLASSES, channels=CHANNELS, conv_dim=CONV_DIM):
    ks = jax.random.split(key, 7)

    def conv_w(k, cout, cin):
        return 0.02 * jax.random.normal(k, (cout, cin, K_SIZE, K_SIZE), jnp.float32)

    w1 = conv_w(ks[1], conv_dim, channels + 1)
    b1 = 0.01 * jax.random.normal(ks[2], (conv_dim,), jnp.float32)
    w2 = conv_w(ks[3], conv_dim * 2, conv_dim)
    w3 = conv_w(ks[4], conv_dim * 4, conv_dim * 2)
    w4 = conv_w(ks[5], 1, conv_dim * 4)
    b4 = 0.01 * jax.random.normal(ks[6], (1,), jnp.float32)

    return {
        "emb": jax.random.normal(ks[0], (num_classes, IMAGE_SIZE * IMAGE_SIZE), jnp.float32),
        # packed (bf16, tile-padded) weight matrices + f32 bias rows (done once here)
        "w1": _pack_weight(w1), "b1": _pack_bias(b1, conv_dim),
        "w2": _pack_weight(w2), "b2": _pack_bias(jnp.zeros((conv_dim * 2,)), conv_dim * 2),
        "w3": _pack_weight(w3), "b3": _pack_bias(jnp.zeros((conv_dim * 4,)), conv_dim * 4),
        "w4": _pack_weight(w4), "b4": _pack_bias(b4, 1),
        # BatchNorm affine params (gamma=1, beta=0 as in the torch init), stored as rows
        "g2": jnp.ones((1, conv_dim * 2), jnp.float32),
        "bt2": jnp.zeros((1, conv_dim * 2), jnp.float32),
        "g3": jnp.ones((1, conv_dim * 4), jnp.float32),
        "bt3": jnp.zeros((1, conv_dim * 4), jnp.float32),
    }


# ---------------------------------------------------------------------------
# Discriminator forward (jit'ed end-to-end)
# ---------------------------------------------------------------------------
@jax.jit
def discriminator_forward(params, x_nchw, label):
    N = x_nchw.shape[0]
    # Embedding lookup -> [N, 1, 32, 32], concat on channel axis (NCHW), go NHWC bf16.
    emb = jnp.take(params["emb"], label, axis=0).reshape(N, 1, IMAGE_SIZE, IMAGE_SIZE)
    x = jnp.concatenate([x_nchw, emb], axis=1)                    # [N, 4, 32, 32]
    x = jnp.transpose(x, (0, 2, 3, 1)).astype(jnp.bfloat16)       # NHWC, bf16 for MXU

    # conv1 (bias, no BN) + leaky relu fused in the matmul epilogue
    x = conv2d_pallas(x, params["w1"], params["b1"], CONV_DIM,
                      stride=2, pad=1, act="leaky", out_dtype=jnp.bfloat16)   # [N,16,16,64]

    # conv2 (no bias) -> BN(batch stats) + leaky relu kernel
    h = conv2d_pallas(x, params["w2"], params["b2"], CONV_DIM * 2,
                      stride=2, pad=1, act="none", out_dtype=jnp.bfloat16)    # [N,8,8,128]
    n2, oh2, ow2, c2 = h.shape
    h = batchnorm_leaky(h.reshape(-1, c2), params["g2"], params["bt2"]).reshape(n2, oh2, ow2, c2)

    # conv3 (no bias) -> BN(batch stats) + leaky relu kernel
    h = conv2d_pallas(h, params["w3"], params["b3"], CONV_DIM * 4,
                      stride=2, pad=1, act="none", out_dtype=jnp.bfloat16)    # [N,4,4,256]
    n3, oh3, ow3, c3 = h.shape
    h = batchnorm_leaky(h.reshape(-1, c3), params["g3"], params["bt3"]).reshape(n3, oh3, ow3, c3)

    # conv4 (bias, no BN) + sigmoid fused in the matmul epilogue -> [N,1,1,1]
    h = conv2d_pallas(h, params["w4"], params["b4"], 1,
                      stride=1, pad=0, act="sigmoid", out_dtype=jnp.float32)

    # torch.squeeze on [N,1,1,1] -> [N]  (N > 1)
    return h.reshape(N)


if __name__ == "__main__":
    key = jax.random.PRNGKey(0)
    kp, kx, kl = jax.random.split(key, 3)

    params = make_params(kp)

    # Module hard-codes image_size=32; small batch of 2, channels=3.
    x = jax.random.normal(kx, (2, CHANNELS, IMAGE_SIZE, IMAGE_SIZE), jnp.float32)
    label = jax.random.randint(kl, (2,), 0, NUM_CLASSES, dtype=jnp.int32)

    out = jax.block_until_ready(discriminator_forward(params, x, label))

    assert out.shape == (2,), out.shape
    assert bool(jnp.all(jnp.isfinite(out)))
    assert bool(jnp.all((out > -1e-3) & (out < 1.0 + 1e-3)))
    print("KERNEL_OK")
</pallas_src>

<mosaic_0001>
module attributes {stable_mosaic.version = 11 : i64} {
  func.func @_matmul_bias_act_kernel(%arg0: i32, %arg1: i32, %arg2: i32, %arg3: memref<256x128xbf16, #tpu.memory_space<vmem>>, %arg4: memref<128x128xbf16, #tpu.memory_space<vmem>>, %arg5: memref<1x128xf32, #tpu.memory_space<vmem>>, %arg6: memref<256x128xbf16, #tpu.memory_space<vmem>>, %arg7: memref<256x128xf32, #tpu.memory_space<vmem>>) attributes {dimension_semantics = [#tpu.dimension_semantics<parallel>, #tpu.dimension_semantics<parallel>, #tpu.dimension_semantics<arbitrary>], iteration_bounds = array<i64: 2, 1, 1>, scalar_prefetch = 0 : i64, scratch_operands = 1 : i64, tpu.core_type = #tpu.core_type<tc>, window_params = [{transform_indices = @transform_0, window_bounds = array<i64: 256, 128>}, {transform_indices = @transform_1, window_bounds = array<i64: 128, 128>}, {transform_indices = @transform_2, window_bounds = array<i64: 1, 128>}, {transform_indices = @transform_3, window_bounds = array<i64: 256, 128>}]} {
    %c0_i32 = arith.constant 0 : i32
    %0 = arith.cmpi eq, %arg2, %c0_i32 : i32
    %1 = arith.extui %0 : i1 to i32
    %c0_i32_0 = arith.constant 0 : i32
    %2 = arith.cmpi ne, %1, %c0_i32_0 : i32
    scf.if %2 {
      %cst_10 = arith.constant 0.000000e+00 : f32
      %12 = vector.broadcast %cst_10 : f32 to vector<256x128xf32>
      %c0_11 = arith.constant 0 : index
      %c0_12 = arith.constant 0 : index
      %13 = vector.load %arg7[%c0_11, %c0_12] : memref<256x128xf32, #tpu.memory_space<vmem>>, vector<256x128xf32>
      tpu.vector_store %arg7[%c0_11, %c0_12], %12 {strides = array<i32>} : memref<256x128xf32, #tpu.memory_space<vmem>>, vector<256x128xf32>,
    } else {
    }
    %c0 = arith.constant 0 : index
    %c0_1 = arith.constant 0 : index
    %3 = vector.load %arg7[%c0, %c0_1] : memref<256x128xf32, #tpu.memory_space<vmem>>, vector<256x128xf32>
    %c0_2 = arith.constant 0 : index
    %c0_3 = arith.constant 0 : index
    %4 = vector.load %arg3[%c0_2, %c0_3] : memref<256x128xbf16, #tpu.memory_space<vmem>>, vector<256x128xbf16>
    %c0_4 = arith.constant 0 : index
    %c0_5 = arith.constant 0 : index
    %5 = vector.load %arg4[%c0_4, %c0_5] : memref<128x128xbf16, #tpu.memory_space<vmem>>, vector<128x128xbf16>
    %cst = arith.constant dense<0.000000e+00> : vector<256x128xf32>
    %6 = tpu.matmul %4, %5, %cst {dimension_numbers = #tpu.dot_dimension_numbers<[1], [0], [0], [1], [0, 0, 1, 1], [], []>} : vector<256x128xbf16>, vector<128x128xbf16>, vector<256x128xf32> -> vector<256x128xf32>
    %7 = arith.addf %3, %6 : vector<256x128xf32>
    %c0_6 = arith.constant 0 : index
    %c0_7 = arith.constant 0 : index
    %8 = vector.load %arg7[%c0_6, %c0_7] : memref<256x128xf32, #tpu.memory_space<vmem>>, vector<256x128xf32>
    tpu.vector_store %arg7[%c0_6, %c0_7], %7 {strides = array<i32>} : memref<256x128xf32, #tpu.memory_space<vmem>>, vector<256x128xf32>,
    %c0_i32_8 = arith.constant 0 : i32
    %9 = arith.cmpi eq, %arg2, %c0_i32_8 : i32
    %10 = arith.extui %9 : i1 to i32
    %c0_i32_9 = arith.constant 0 : i32
    %11 = arith.cmpi ne, %10, %c0_i32_9 : i32
    scf.if %11 {
      %c0_10 = arith.constant 0 : index
      %c0_11 = arith.constant 0 : index
      %12 = vector.load %arg7[%c0_10, %c0_11] : memref<256x128xf32, #tpu.memory_space<vmem>>, vector<256x128xf32>
      %c0_12 = arith.constant 0 : index
      %c0_13 = arith.constant 0 : index
      %13 = vector.load %arg5[%c0_12, %c0_13] : memref<1x128xf32, #tpu.memory_space<vmem>>, vector<1x128xf32>
      %14 = vector.broadcast %13 : vector<1x128xf32> to vector<256x128xf32>
      %15 = arith.addf %12, %14 : vector<256x128xf32>
      %cst_14 = arith.constant 0.000000e+00 : f32
      %16 = vector.broadcast %cst_14 : f32 to vector<256x128xf32>
      %17 = arith.cmpf oge, %15, %16 : vector<256x128xf32>
      %cst_15 = arith.constant 2.000000e-01 : f32
      %18 = vector.broadcast %cst_15 : f32 to vector<256x128xf32>
      %19 = arith.mulf %18, %15 : vector<256x128xf32>
      %20 = arith.select %17, %15, %19 : vector<256x128xi1>, vector<256x128xf32>
      %21 = arith.truncf %20 : vector<256x128xf32> to vector<256x128xbf16>
      %c0_16 = arith.constant 0 : index
      %c0_17 = arith.constant 0 : index
      %22 = vector.load %arg6[%c0_16, %c0_17] : memref<256x128xbf16, #tpu.memory_space<vmem>>, vector<256x128xbf16>
      tpu.vector_store %arg6[%c0_16, %c0_17], %21 {strides = array<i32>} : memref<256x128xbf16, #tpu.memory_space<vmem>>, vector<256x128xbf16>,
    } else {
    }
    return
  }
  func.func @transform_0(%arg0: i32, %arg1: i32, %arg2: i32) -> (i32, i32) {
    %c0_i32 = arith.constant 0 : i32
    return %arg0, %arg2 : i32, i32
  }
  func.func @transform_1(%arg0: i32, %arg1: i32, %arg2: i32) -> (i32, i32) {
    %c0_i32 = arith.constant 0 : i32
    return %arg2, %arg1 : i32, i32
  }
  func.func @transform_2(%arg0: i32, %arg1: i32, %arg2: i32) -> (i32, i32) {
    %c0_i32 = arith.constant 0 : i32
    %c0_i32_0 = arith.constant 0 : i32
    return %c0_i32, %arg1 : i32, i32
  }
  func.func @transform_3(%arg0: i32, %arg1: i32, %arg2: i32) -> (i32, i32) {
    %c0_i32 = arith.constant 0 : i32
    return %arg0, %arg1 : i32, i32
  }
}

module attributes {stable_mosaic.version = 11 : i64} {
  func.func @_matmul_bias_act_kernel(%arg0: i32, %arg1: i32, %arg2: i32, %arg3: memref<128x512xbf16, #tpu.memory_space<vmem>>, %arg4: memref<512x128xbf16, #tpu.memory_space<vmem>>, %arg5: memref<1x128xf32, #tpu.memory_space<vmem>>, %arg6: memref<128x128xbf16, #tpu.memory_space<vmem>>, %arg7: memref<128x128xf32, #tpu.memory_space<vmem>>) attributes {dimension_semantics = [#tpu.dimension_semantics<parallel>, #tpu.dimension_semantics<parallel>, #tpu.dimension_semantics<arbitrary>], iteration_bounds = array<i64: 1, 1, 2>, scalar_prefetch = 0 : i64, scratch_operands = 1 : i64, tpu.core_type = #tpu.core_type<tc>, window_params = [{transform_indices = @transform_0, window_bounds = array<i64: 128, 512>}, {transform_indices = @transform_1, window_bounds = array<i64: 512, 128>}, {transform_indices = @transform_2, window_bounds = array<i64: 1, 128>}, {transform_indices = @transform_3, window_bounds = array<i64: 128, 128>}]} {
    %c0_i32 = arith.constant 0 : i32
    %0 = arith.cmpi eq, %arg2, %c0_i32 : i32
    %1 = arith.extui %0 : i1 to i32
    %c0_i32_0 = arith.constant 0 : i32
    %2 = arith.cmpi ne, %1, %c0_i32_0 : i32
    scf.if %2 {
      %cst_9 = arith.constant 0.000000e+00 : f32
      %12 = vector.broadcast %cst_9 : f32 to vector<128x128xf32>
      %c0_10 = arith.constant 0 : index
      %c0_11 = arith.constant 0 : index
      %13 = vector.load %arg7[%c0_10, %c0_11] : memref<128x128xf32, #tpu.memory_space<vmem>>, vector<128x128xf32>
      tpu.vector_store %arg7[%c0_10, %c0_11], %12 {strides = array<i32>} : memref<128x128xf32, #tpu.memory_space<vmem>>, vector<128x128xf32>,
    } else {
    }
    %c0 = arith.constant 0 : index
    %c0_1 = arith.constant 0 : index
    %3 = vector.load %arg7[%c0, %c0_1] : memref<128x128xf32, #tpu.memory_space<vmem>>, vector<128x128xf32>
    %c0_2 = arith.constant 0 : index
    %c0_3 = arith.constant 0 : index
    %4 = vector.load %arg3[%c0_2, %c0_3] : memref<128x512xbf16, #tpu.memory_space<vmem>>, vector<128x512xbf16>
    %c0_4 = arith.constant 0 : index
    %c0_5 = arith.constant 0 : index
    %5 = vector.load %arg4[%c0_4, %c0_5] : memref<512x128xbf16, #tpu.memory_space<vmem>>, vector<512x128xbf16>
    %cst = arith.constant dense<0.000000e+00> : vector<128x128xf32>
    %6 = tpu.matmul %4, %5, %cst {dimension_numbers = #tpu.dot_dimension_numbers<[1], [0], [0], [1], [0, 0, 1, 1], [], []>} : vector<128x512xbf16>, vector<512x128xbf16>, vector<128x128xf32> -> vector<128x128xf32>
    %7 = arith.addf %3, %6 : vector<128x128xf32>
    %c0_6 = arith.constant 0 : index
    %c0_7 = arith.constant 0 : index
    %8 = vector.load %arg7[%c0_6, %c0_7] : memref<128x128xf32, #tpu.memory_space<vmem>>, vector<128x128xf32>
    tpu.vector_store %arg7[%c0_6, %c0_7], %7 {strides = array<i32>} : memref<128x128xf32, #tpu.memory_space<vmem>>, vector<128x128xf32>,
    %c1_i32 = arith.constant 1 : i32
    %9 = arith.cmpi eq, %arg2, %c1_i32 : i32
    %10 = arith.extui %9 : i1 to i32
    %c0_i32_8 = arith.constant 0 : i32
    %11 = arith.cmpi ne, %10, %c0_i32_8 : i32
    scf.if %11 {
      %c0_9 = arith.constant 0 : index
      %c0_10 = arith.constant 0 : index
      %12 = vector.load %arg7[%c0_9, %c0_10] : memref<128x128xf32, #tpu.memory_space<vmem>>, vector<128x128xf32>
      %c0_11 = arith.constant 0 : index
      %c0_12 = arith.constant 0 : index
      %13 = vector.load %arg5[%c0_11, %c0_12] : memref<1x128xf32, #tpu.memory_space<vmem>>, vector<1x128xf32>
      %14 = vector.broadcast %13 : vector<1x128xf32> to vector<128x128xf32>
      %15 = arith.addf %12, %14 : vector<128x128xf32>
      %16 = arith.truncf %15 : vector<128x128xf32> to vector<128x128xbf16>
      %c0_13 = arith.constant 0 : index
      %c0_14 = arith.constant 0 : index
      %17 = vector.load %arg6[%c0_13, %c0_14] : memref<128x128xbf16, #tpu.memory_space<vmem>>, vector<128x128xbf16>
      tpu.vector_store %arg6[%c0_13, %c0_14], %16 {strides = array<i32>} : memref<128x128xbf16, #tpu.memory_space<vmem>>, vector<128x128xbf16>,
    } else {
    }
    return
  }
  func.func @transform_0(%arg0: i32, %arg1: i32, %arg2: i32) -> (i32, i32) {
    %c0_i32 = arith.constant 0 : i32
    return %arg0, %arg2 : i32, i32
  }
  func.func @transform_1(%arg0: i32, %arg1: i32, %arg2: i32) -> (i32, i32) {
    %c0_i32 = arith.constant 0 : i32
    return %arg2, %arg1 : i32, i32
  }
  func.func @transform_2(%arg0: i32, %arg1: i32, %arg2: i32) -> (i32, i32) {
    %c0_i32 = arith.constant 0 : i32
    %c0_i32_0 = arith.constant 0 : i32
    return %c0_i32, %arg1 : i32, i32
  }
  func.func @transform_3(%arg0: i32, %arg1: i32, %arg2: i32) -> (i32, i32) {
    %c0_i32 = arith.constant 0 : i32
    return %arg0, %arg1 : i32, i32
  }
}

module attributes {stable_mosaic.version = 11 : i64} {
  func.func @_bn_leaky_kernel(%arg0: i32, %arg1: memref<128x128xbf16, #tpu.memory_space<vmem>>, %arg2: memref<1x128xf32, #tpu.memory_space<vmem>>, %arg3: memref<1x128xf32, #tpu.memory_space<vmem>>, %arg4: memref<128x128xbf16, #tpu.memory_space<vmem>>) attributes {dimension_semantics = [#tpu.dimension_semantics<parallel>], iteration_bounds = array<i64: 1>, scalar_prefetch = 0 : i64, scratch_operands = 0 : i64, tpu.core_type = #tpu.core_type<tc>, window_params = [{transform_indices = @transform_0, window_bounds = array<i64: 128, 128>}, {transform_indices = @transform_1, window_bounds = array<i64: 1, 128>}, {transform_indices = @transform_2, window_bounds = array<i64: 1, 128>}, {transform_indices = @transform_3, window_bounds = array<i64: 128, 128>}]} {
    %c0 = arith.constant 0 : index
    %c0_0 = arith.constant 0 : index
    %0 = vector.load %arg1[%c0, %c0_0] : memref<128x128xbf16, #tpu.memory_space<vmem>>, vector<128x128xbf16>
    %1 = arith.extf %0 : vector<128x128xbf16> to vector<128x128xf32>
    %cst = arith.constant dense<0.000000e+00> : vector<128xf32>
    %2 = vector.multi_reduction <add>, %1, %cst [0] : vector<128x128xf32> to vector<128xf32>
    %3 = vector.shape_cast %2 : vector<128xf32> to vector<1x128xf32>
    %4 = arith.mulf %1, %1 : vector<128x128xf32>
    %cst_1 = arith.constant dense<0.000000e+00> : vector<128xf32>
    %5 = vector.multi_reduction <add>, %4, %cst_1 [0] : vector<128x128xf32> to vector<128xf32>
    %6 = vector.shape_cast %5 : vector<128xf32> to vector<1x128xf32>
    %cst_2 = arith.constant 7.812500e-03 : f32
    %7 = vector.broadcast %cst_2 : f32 to vector<1x128xf32>
    %8 = arith.mulf %3, %7 : vector<1x128xf32>
    %cst_3 = arith.constant 7.812500e-03 : f32
    %9 = vector.broadcast %cst_3 : f32 to vector<1x128xf32>
    %10 = arith.mulf %6, %9 : vector<1x128xf32>
    %11 = arith.mulf %8, %8 : vector<1x128xf32>
    %12 = arith.subf %10, %11 : vector<1x128xf32>
    %c0_4 = arith.constant 0 : index
    %c0_5 = arith.constant 0 : index
    %13 = vector.load %arg2[%c0_4, %c0_5] : memref<1x128xf32, #tpu.memory_space<vmem>>, vector<1x128xf32>
    %cst_6 = arith.constant 9.99999974E-6 : f32
    %14 = vector.broadcast %cst_6 : f32 to vector<1x128xf32>
    %15 = arith.addf %12, %14 : vector<1x128xf32>
    %16 = math.rsqrt %15 : vector<1x128xf32>
    %17 = arith.mulf %13, %16 : vector<1x128xf32>
    %c0_7 = arith.constant 0 : index
    %c0_8 = arith.constant 0 : index
    %18 = vector.load %arg3[%c0_7, %c0_8] : memref<1x128xf32, #tpu.memory_space<vmem>>, vector<1x128xf32>
    %19 = arith.mulf %8, %17 : vector<1x128xf32>
    %20 = arith.subf %18, %19 : vector<1x128xf32>
    %21 = vector.broadcast %17 : vector<1x128xf32> to vector<128x128xf32>
    %22 = arith.mulf %1, %21 : vector<128x128xf32>
    %23 = vector.broadcast %20 : vector<1x128xf32> to vector<128x128xf32>
    %24 = arith.addf %22, %23 : vector<128x128xf32>
    %cst_9 = arith.constant 0.000000e+00 : f32
    %25 = vector.broadcast %cst_9 : f32 to vector<128x128xf32>
    %26 = arith.cmpf oge, %24, %25 : vector<128x128xf32>
    %cst_10 = arith.constant 2.000000e-01 : f32
    %27 = vector.broadcast %cst_10 : f32 to vector<128x128xf32>
    %28 = arith.mulf %27, %24 : vector<128x128xf32>
    %29 = arith.select %26, %24, %28 : vector<128x128xi1>, vector<128x128xf32>
    %30 = arith.truncf %29 : vector<128x128xf32> to vector<128x128xbf16>
    %c0_11 = arith.constant 0 : index
    %c0_12 = arith.constant 0 : index
    %31 = vector.load %arg4[%c0_11, %c0_12] : memref<128x128xbf16, #tpu.memory_space<vmem>>, vector<128x128xbf16>
    tpu.vector_store %arg4[%c0_11, %c0_12], %30 {strides = array<i32>} : memref<128x128xbf16, #tpu.memory_space<vmem>>, vector<128x128xbf16>,
    return
  }
  func.func @transform_0(%arg0: i32) -> (i32, i32) {
    %c0_i32 = arith.constant 0 : i32
    %c0_i32_0 = arith.constant 0 : i32
    return %c0_i32, %arg0 : i32, i32
  }
  func.func @transform_1(%arg0: i32) -> (i32, i32) {
    %c0_i32 = arith.constant 0 : i32
    %c0_i32_0 = arith.constant 0 : i32
    return %c0_i32, %arg0 : i32, i32
  }
  func.func @transform_2(%arg0: i32) -> (i32, i32) {
    %c0_i32 = arith.constant 0 : i32
    %c0_i32_0 = arith.constant 0 : i32
    return %c0_i32, %arg0 : i32, i32
  }
  func.func @transform_3(%arg0: i32) -> (i32, i32) {
    %c0_i32 = arith.constant 0 : i32
    %c0_i32_0 = arith.constant 0 : i32
    return %c0_i32, %arg0 : i32, i32
  }
}

module attributes {stable_mosaic.version = 11 : i64} {
  func.func @_bn_leaky_kernel(%arg0: i32, %arg1: memref<32x128xbf16, #tpu.memory_space<vmem>>, %arg2: memref<1x128xf32, #tpu.memory_space<vmem>>, %arg3: memref<1x128xf32, #tpu.memory_space<vmem>>, %arg4: memref<32x128xbf16, #tpu.memory_space<vmem>>) attributes {dimension_semantics = [#tpu.dimension_semantics<parallel>], iteration_bounds = array<i64: 2>, scalar_prefetch = 0 : i64, scratch_operands = 0 : i64, tpu.core_type = #tpu.core_type<tc>, window_params = [{transform_indices = @transform_0, window_bounds = array<i64: 32, 128>}, {transform_indices = @transform_1, window_bounds = array<i64: 1, 128>}, {transform_indices = @transform_2, window_bounds = array<i64: 1, 128>}, {transform_indices = @transform_3, window_bounds = array<i64: 32, 128>}]} {
    %c0 = arith.constant 0 : index
    %c0_0 = arith.constant 0 : index
    %0 = vector.load %arg1[%c0, %c0_0] : memref<32x128xbf16, #tpu.memory_space<vmem>>, vector<32x128xbf16>
    %1 = arith.extf %0 : vector<32x128xbf16> to vector<32x128xf32>
    %cst = arith.constant dense<0.000000e+00> : vector<128xf32>
    %2 = vector.multi_reduction <add>, %1, %cst [0] : vector<32x128xf32> to vector<128xf32>
    %3 = vector.shape_cast %2 : vector<128xf32> to vector<1x128xf32>
    %4 = arith.mulf %1, %1 : vector<32x128xf32>
    %cst_1 = arith.constant dense<0.000000e+00> : vector<128xf32>
    %5 = vector.multi_reduction <add>, %4, %cst_1 [0] : vector<32x128xf32> to vector<128xf32>
    %6 = vector.shape_cast %5 : vector<128xf32> to vector<1x128xf32>
    %cst_2 = arith.constant 3.125000e-02 : f32
    %7 = vector.broadcast %cst_2 : f32 to vector<1x128xf32>
    %8 = arith.mulf %3, %7 : vector<1x128xf32>
    %cst_3 = arith.constant 3.125000e-02 : f32
    %9 = vector.broadcast %cst_3 : f32 to vector<1x128xf32>
    %10 = arith.mulf %6, %9 : vector<1x128xf32>
    %11 = arith.mulf %8, %8 : vector<1x128xf32>
    %12 = arith.subf %10, %11 : vector<1x128xf32>
    %c0_4 = arith.constant 0 : index
    %c0_5 = arith.constant 0 : index
    %13 = vector.load %arg2[%c0_4, %c0_5] : memref<1x128xf32, #tpu.memory_space<vmem>>, vector<1x128xf32>
    %cst_6 = arith.constant 9.99999974E-6 : f32
    %14 = vector.broadcast %cst_6 : f32 to vector<1x128xf32>
    %15 = arith.addf %12, %14 : vector<1x128xf32>
    %16 = math.rsqrt %15 : vector<1x128xf32>
    %17 = arith.mulf %13, %16 : vector<1x128xf32>
    %c0_7 = arith.constant 0 : index
    %c0_8 = arith.constant 0 : index
    %18 = vector.load %arg3[%c0_7, %c0_8] : memref<1x128xf32, #tpu.memory_space<vmem>>, vector<1x128xf32>
    %19 = arith.mulf %8, %17 : vector<1x128xf32>
    %20 = arith.subf %18, %19 : vector<1x128xf32>
    %21 = vector.broadcast %17 : vector<1x128xf32> to vector<32x128xf32>
    %22 = arith.mulf %1, %21 : vector<32x128xf32>
    %23 = vector.broadcast %20 : vector<1x128xf32> to vector<32x128xf32>
    %24 = arith.addf %22, %23 : vector<32x128xf32>
    %cst_9 = arith.constant 0.000000e+00 : f32
    %25 = vector.broadcast %cst_9 : f32 to vector<32x128xf32>
    %26 = arith.cmpf oge, %24, %25 : vector<32x128xf32>
    %cst_10 = arith.constant 2.000000e-01 : f32
    %27 = vector.broadcast %cst_10 : f32 to vector<32x128xf32>
    %28 = arith.mulf %27, %24 : vector<32x128xf32>
    %29 = arith.select %26, %24, %28 : vector<32x128xi1>, vector<32x128xf32>
    %30 = arith.truncf %29 : vector<32x128xf32> to vector<32x128xbf16>
    %c0_11 = arith.constant 0 : index
    %c0_12 = arith.constant 0 : index
    %31 = vector.load %arg4[%c0_11, %c0_12] : memref<32x128xbf16, #tpu.memory_space<vmem>>, vector<32x128xbf16>
    tpu.vector_store %arg4[%c0_11, %c0_12], %30 {strides = array<i32>} : memref<32x128xbf16, #tpu.memory_space<vmem>>, vector<32x128xbf16>,
    return
  }
  func.func @transform_0(%arg0: i32) -> (i32, i32) {
    %c0_i32 = arith.constant 0 : i32
    %c0_i32_0 = arith.constant 0 : i32
    return %c0_i32, %arg0 : i32, i32
  }
  func.func @transform_1(%arg0: i32) -> (i32, i32) {
    %c0_i32 = arith.constant 0 : i32
    %c0_i32_0 = arith.constant 0 : i32
    return %c0_i32, %arg0 : i32, i32
  }
  func.func @transform_2(%arg0: i32) -> (i32, i32) {
    %c0_i32 = arith.constant 0 : i32
    %c0_i32_0 = arith.constant 0 : i32
    return %c0_i32, %arg0 : i32, i32
  }
  func.func @transform_3(%arg0: i32) -> (i32, i32) {
    %c0_i32 = arith.constant 0 : i32
    %c0_i32_0 = arith.constant 0 : i32
    return %c0_i32, %arg0 : i32, i32
  }
}

module attributes {stable_mosaic.version = 11 : i64} {
  func.func @_matmul_bias_act_kernel(%arg0: i32, %arg1: i32, %arg2: i32, %arg3: memref<32x512xbf16, #tpu.memory_space<vmem>>, %arg4: memref<512x128xbf16, #tpu.memory_space<vmem>>, %arg5: memref<1x128xf32, #tpu.memory_space<vmem>>, %arg6: memref<32x128xbf16, #tpu.memory_space<vmem>>, %arg7: memref<32x128xf32, #tpu.memory_space<vmem>>) attributes {dimension_semantics = [#tpu.dimension_semantics<parallel>, #tpu.dimension_semantics<parallel>, #tpu.dimension_semantics<arbitrary>], iteration_bounds = array<i64: 1, 2, 4>, scalar_prefetch = 0 : i64, scratch_operands = 1 : i64, tpu.core_type = #tpu.core_type<tc>, window_params = [{transform_indices = @transform_0, window_bounds = array<i64: 32, 512>}, {transform_indices = @transform_1, window_bounds = array<i64: 512, 128>}, {transform_indices = @transform_2, window_bounds = array<i64: 1, 128>}, {transform_indices = @transform_3, window_bounds = array<i64: 32, 128>}]} {
    %c0_i32 = arith.constant 0 : i32
    %0 = arith.cmpi eq, %arg2, %c0_i32 : i32
    %1 = arith.extui %0 : i1 to i32
    %c0_i32_0 = arith.constant 0 : i32
    %2 = arith.cmpi ne, %1, %c0_i32_0 : i32
    scf.if %2 {
      %cst_9 = arith.constant 0.000000e+00 : f32
      %12 = vector.broadcast %cst_9 : f32 to vector<32x128xf32>
      %c0_10 = arith.constant 0 : index
      %c0_11 = arith.constant 0 : index
      %13 = vector.load %arg7[%c0_10, %c0_11] : memref<32x128xf32, #tpu.memory_space<vmem>>, vector<32x128xf32>
      tpu.vector_store %arg7[%c0_10, %c0_11], %12 {strides = array<i32>} : memref<32x128xf32, #tpu.memory_space<vmem>>, vector<32x128xf32>,
    } else {
    }
    %c0 = arith.constant 0 : index
    %c0_1 = arith.constant 0 : index
    %3 = vector.load %arg7[%c0, %c0_1] : memref<32x128xf32, #tpu.memory_space<vmem>>, vector<32x128xf32>
    %c0_2 = arith.constant 0 : index
    %c0_3 = arith.constant 0 : index
    %4 = vector.load %arg3[%c0_2, %c0_3] : memref<32x512xbf16, #tpu.memory_space<vmem>>, vector<32x512xbf16>
    %c0_4 = arith.constant 0 : index
    %c0_5 = arith.constant 0 : index
    %5 = vector.load %arg4[%c0_4, %c0_5] : memref<512x128xbf16, #tpu.memory_space<vmem>>, vector<512x128xbf16>
    %cst = arith.constant dense<0.000000e+00> : vector<32x128xf32>
    %6 = tpu.matmul %4, %5, %cst {dimension_numbers = #tpu.dot_dimension_numbers<[1], [0], [0], [1], [0, 0, 1, 1], [], []>} : vector<32x512xbf16>, vector<512x128xbf16>, vector<32x128xf32> -> vector<32x128xf32>
    %7 = arith.addf %3, %6 : vector<32x128xf32>
    %c0_6 = arith.constant 0 : index
    %c0_7 = arith.constant 0 : index
    %8 = vector.load %arg7[%c0_6, %c0_7] : memref<32x128xf32, #tpu.memory_space<vmem>>, vector<32x128xf32>
    tpu.vector_store %arg7[%c0_6, %c0_7], %7 {strides = array<i32>} : memref<32x128xf32, #tpu.memory_space<vmem>>, vector<32x128xf32>,
    %c3_i32 = arith.constant 3 : i32
    %9 = arith.cmpi eq, %arg2, %c3_i32 : i32
    %10 = arith.extui %9 : i1 to i32
    %c0_i32_8 = arith.constant 0 : i32
    %11 = arith.cmpi ne, %10, %c0_i32_8 : i32
    scf.if %11 {
      %c0_9 = arith.constant 0 : index
      %c0_10 = arith.constant 0 : index
      %12 = vector.load %arg7[%c0_9, %c0_10] : memref<32x128xf32, #tpu.memory_space<vmem>>, vector<32x128xf32>
      %c0_11 = arith.constant 0 : index
      %c0_12 = arith.constant 0 : index
      %13 = vector.load %arg5[%c0_11, %c0_12] : memref<1x128xf32, #tpu.memory_space<vmem>>, vector<1x128xf32>
      %14 = vector.broadcast %13 : vector<1x128xf32> to vector<32x128xf32>
      %15 = arith.addf %12, %14 : vector<32x128xf32>
      %16 = arith.truncf %15 : vector<32x128xf32> to vector<32x128xbf16>
      %c0_13 = arith.constant 0 : index
      %c0_14 = arith.constant 0 : index
      %17 = vector.load %arg6[%c0_13, %c0_14] : memref<32x128xbf16, #tpu.memory_space<vmem>>, vector<32x128xbf16>
      tpu.vector_store %arg6[%c0_13, %c0_14], %16 {strides = array<i32>} : memref<32x128xbf16, #tpu.memory_space<vmem>>, vector<32x128xbf16>,
    } else {
    }
    return
  }
  func.func @transform_0(%arg0: i32, %arg1: i32, %arg2: i32) -> (i32, i32) {
    %c0_i32 = arith.constant 0 : i32
    return %arg0, %arg2 : i32, i32
  }
  func.func @transform_1(%arg0: i32, %arg1: i32, %arg2: i32) -> (i32, i32) {
    %c0_i32 = arith.constant 0 : i32
    return %arg2, %arg1 : i32, i32
  }
  func.func @transform_2(%arg0: i32, %arg1: i32, %arg2: i32) -> (i32, i32) {
    %c0_i32 = arith.constant 0 : i32
    %c0_i32_0 = arith.constant 0 : i32
    return %c0_i32, %arg1 : i32, i32
  }
  func.func @transform_3(%arg0: i32, %arg1: i32, %arg2: i32) -> (i32, i32) {
    %c0_i32 = arith.constant 0 : i32
    return %arg0, %arg1 : i32, i32
  }
}

module attributes {stable_mosaic.version = 11 : i64} {
  func.func @_matmul_bias_act_kernel(%arg0: i32, %arg1: i32, %arg2: i32, %arg3: memref<8x512xbf16, #tpu.memory_space<vmem>>, %arg4: memref<512x128xbf16, #tpu.memory_space<vmem>>, %arg5: memref<1x128xf32, #tpu.memory_space<vmem>>, %arg6: memref<8x128xf32, #tpu.memory_space<vmem>>, %arg7: memref<8x128xf32, #tpu.memory_space<vmem>>) attributes {dimension_semantics = [#tpu.dimension_semantics<parallel>, #tpu.dimension_semantics<parallel>, #tpu.dimension_semantics<arbitrary>], iteration_bounds = array<i64: 1, 1, 8>, scalar_prefetch = 0 : i64, scratch_operands = 1 : i64, tpu.core_type = #tpu.core_type<tc>, window_params = [{transform_indices = @transform_0, window_bounds = array<i64: 8, 512>}, {transform_indices = @transform_1, window_bounds = array<i64: 512, 128>}, {transform_indices = @transform_2, window_bounds = array<i64: 1, 128>}, {transform_indices = @transform_3, window_bounds = array<i64: 8, 128>}]} {
    %c0_i32 = arith.constant 0 : i32
    %0 = arith.cmpi eq, %arg2, %c0_i32 : i32
    %1 = arith.extui %0 : i1 to i32
    %c0_i32_0 = arith.constant 0 : i32
    %2 = arith.cmpi ne, %1, %c0_i32_0 : i32
    scf.if %2 {
      %cst_9 = arith.constant 0.000000e+00 : f32
      %12 = vector.broadcast %cst_9 : f32 to vector<8x128xf32>
      %c0_10 = arith.constant 0 : index
      %c0_11 = arith.constant 0 : index
      %13 = vector.load %arg7[%c0_10, %c0_11] : memref<8x128xf32, #tpu.memory_space<vmem>>, vector<8x128xf32>
      tpu.vector_store %arg7[%c0_10, %c0_11], %12 {strides = array<i32>} : memref<8x128xf32, #tpu.memory_space<vmem>>, vector<8x128xf32>,
    } else {
    }
    %c0 = arith.constant 0 : index
    %c0_1 = arith.constant 0 : index
    %3 = vector.load %arg7[%c0, %c0_1] : memref<8x128xf32, #tpu.memory_space<vmem>>, vector<8x128xf32>
    %c0_2 = arith.constant 0 : index
    %c0_3 = arith.constant 0 : index
    %4 = vector.load %arg3[%c0_2, %c0_3] : memref<8x512xbf16, #tpu.memory_space<vmem>>, vector<8x512xbf16>
    %c0_4 = arith.constant 0 : index
    %c0_5 = arith.constant 0 : index
    %5 = vector.load %arg4[%c0_4, %c0_5] : memref<512x128xbf16, #tpu.memory_space<vmem>>, vector<512x128xbf16>
    %cst = arith.constant dense<0.000000e+00> : vector<8x128xf32>
    %6 = tpu.matmul %4, %5, %cst {dimension_numbers = #tpu.dot_dimension_numbers<[1], [0], [0], [1], [0, 0, 1, 1], [], []>} : vector<8x512xbf16>, vector<512x128xbf16>, vector<8x128xf32> -> vector<8x128xf32>
    %7 = arith.addf %3, %6 : vector<8x128xf32>
    %c0_6 = arith.constant 0 : index
    %c0_7 = arith.constant 0 : index
    %8 = vector.load %arg7[%c0_6, %c0_7] : memref<8x128xf32, #tpu.memory_space<vmem>>, vector<8x128xf32>
    tpu.vector_store %arg7[%c0_6, %c0_7], %7 {strides = array<i32>} : memref<8x128xf32, #tpu.memory_space<vmem>>, vector<8x128xf32>,
    %c7_i32 = arith.constant 7 : i32
    %9 = arith.cmpi eq, %arg2, %c7_i32 : i32
    %10 = arith.extui %9 : i1 to i32
    %c0_i32_8 = arith.constant 0 : i32
    %11 = arith.cmpi ne, %10, %c0_i32_8 : i32
    scf.if %11 {
      %c0_9 = arith.constant 0 : index
      %c0_10 = arith.constant 0 : index
      %12 = vector.load %arg7[%c0_9, %c0_10] : memref<8x128xf32, #tpu.memory_space<vmem>>, vector<8x128xf32>
      %c0_11 = arith.constant 0 : index
      %c0_12 = arith.constant 0 : index
      %13 = vector.load %arg5[%c0_11, %c0_12] : memref<1x128xf32, #tpu.memory_space<vmem>>, vector<1x128xf32>
      %14 = vector.broadcast %13 : vector<1x128xf32> to vector<8x128xf32>
      %15 = arith.addf %12, %14 : vector<8x128xf32>
      %cst_13 = arith.constant 0.000000e+00 : f32
      %16 = vector.broadcast %cst_13 : f32 to vector<8x128xf32>
      %17 = arith.subf %16, %15 : vector<8x128xf32>
      %18 = math.exp %17 : vector<8x128xf32>
      %cst_14 = arith.constant 1.000000e+00 : f32
      %19 = vector.broadcast %cst_14 : f32 to vector<8x128xf32>
      %20 = arith.addf %19, %18 : vector<8x128xf32>
      %21 = tpu.reciprocal %20 {approx = true} : vector<8x128xf32> -> vector<8x128xf32>
      %c0_15 = arith.constant 0 : index
      %c0_16 = arith.constant 0 : index
      %22 = vector.load %arg6[%c0_15, %c0_16] : memref<8x128xf32, #tpu.memory_space<vmem>>, vector<8x128xf32>
      tpu.vector_store %arg6[%c0_15, %c0_16], %21 {strides = array<i32>} : memref<8x128xf32, #tpu.memory_space<vmem>>, vector<8x128xf32>,
    } else {
    }
    return
  }
  func.func @transform_0(%arg0: i32, %arg1: i32, %arg2: i32) -> (i32, i32) {
    %c0_i32 = arith.constant 0 : i32
    return %arg0, %arg2 : i32, i32
  }
  func.func @transform_1(%arg0: i32, %arg1: i32, %arg2: i32) -> (i32, i32) {
    %c0_i32 = arith.constant 0 : i32
    return %arg2, %arg1 : i32, i32
  }
  func.func @transform_2(%arg0: i32, %arg1: i32, %arg2: i32) -> (i32, i32) {
    %c0_i32 = arith.constant 0 : i32
    %c0_i32_0 = arith.constant 0 : i32
    return %c0_i32, %arg1 : i32, i32
  }
  func.func @transform_3(%arg0: i32, %arg1: i32, %arg2: i32) -> (i32, i32) {
    %c0_i32 = arith.constant 0 : i32
    return %arg0, %arg1 : i32, i32
  }
}

</mosaic_0001>

<llo_original>
// kernel: discriminator_forward.6
$region0: #{discriminator_forward.6}
  #allocation0 [shape = 'u32[]', space=smem, size = 0x4, offset = 0x4, fixed_abs, tag = 'smem constant byte address 0x4 - core index']
  #allocation1 [shape = 'u32[72,128]{1,0:T(1,128)}', space=vmem, size = 0x9000, scoped, tag = 'internal scratch']
  #allocation2 [shape = 'f32[256,128]{1,0:T(8,128)}', space=vmem, size = 0x20000, scoped, tag = 'scratch operand']
  %s0 = inlined_call_operand.vmem [shape: bf16[512,128], index: 0, kind: input, shape index: {}]
  %s1 = inlined_call_operand.vmem [shape: bf16[128,128], index: 1, kind: input, shape index: {}]
  %s2 = inlined_call_operand.vmem [shape: f32[1,128], index: 2, kind: input, shape index: {}]
  %s3 = inlined_call_operand.vmem [shape: bf16[512,128], index: 3, kind: output, shape index: {}]
  %s4 = sld [smem:[#allocation0]]
  $region53: #{discriminator_forward.6} parent=0
    _
  %s6 = ssub.s32 1, %s4
  %s7 = scalar_select 0, %s6, %s4
  loop: start=0, step=1, limit=4
  $region2: #{discriminator_forward.6} parent=0 // loop_pre_header
    _
  $region3: #{discriminator_forward.6} parent=0 // loop_header
    %s9 = sphi 0, %s13
    %p10 = scmp.ge.s32.totalorder %s9, 4
    %s16 = sphi 0, %s35
    %s17 = sphi 0, %s31
    %s18 = sphi 0, %s27
    %s19 = sphi 0, %s16
    %s20 = sphi 0, %s17
    %s21 = sphi 0, %s18
    %s22 = sphi 0, %s19
    %s23 = sphi 0, %s20
    %s24 = sphi 0, %s21
    %s40 = sphi 0, %s42
    %s43 = sphi 0, %s40
    %s44 = sphi 0, %s43
    %s60 = sphi 0, %s44
    %s68 = sphi 0, %s70
    %s71 = sphi 0, %s68
    %s72 = sphi 0, %s71
    %s88 = sphi 0, %s72
    %s94 = sphi 0, %s96
    %s97 = sphi 0, %s94
    %s98 = sphi 0, %s97
    %s114 = sphi 0, %s98
    %s122 = sphi 0, %s124
    %s125 = sphi 0, %s122
    %s126 = sphi 0, %s125
    %s142 = sphi 0, %s126
  $region4: #{discriminator_forward.6} parent=0 // loop_header_branch
    %12 = sbr.rel (%p10) target = $region8
  $region5: #{discriminator_forward.6} parent=0 // loop_body
    %s14 = ssub.s32 %s9, 1
    %s15 = ssub.s32 %s9, 2
    %s25 = sadd.s32 1, %s18
    %p26 = scmp.ge.s32.totalorder %s25, 1
    %s27 = scalar_select %p26, 0, %s25
    %s28 = sadd.s32 1, %s17
    %s29 = scalar_select %p26, %s28, %s17
    %p30 = scmp.ge.s32.totalorder %s29, 1
    %s31 = scalar_select %p30, 0, %s29
    %s32 = sadd.s32 1, %s16
    %s33 = scalar_select %p30, %s32, %s16
    %p34 = scmp.ge.s32.totalorder %s33, 2
    %s35 = scalar_select %p34, 0, %s33
    %s36 = ssub.s32 %s16, %s35
    %s37 = ssub.s32 %s18, %s27
    %s38 = sor.u32 %s36, %s37
    %p39 = scmp.eq.s32.totalorder %s38, 0
    %s41 = sadd.s32 %s40, 1
    %s42 = scalar_select %p39, %s40, %s41
    %p45 = pneg %p39
    %p46 = scmp.eq.s32.totalorder %s9, 1
    %p47 = por %p45, %p46
    %p48 = scmp.ne.s32.totalorder %s40, %s43
    %p49 = scmp.eq.s32.totalorder %s9, 0
    %p50 = por %p48, %p49
    %p51 = scmp.ne.s32.totalorder %s40, %s43
    %p52 = scmp.eq.s32.totalorder %s14, 1
    %p53 = por %p51, %p52
    %p54 = scmp.ne.s32.totalorder %s43, %s44
    %p55 = scmp.eq.s32.totalorder %s14, 0
    %p56 = por %p54, %p55
    %p57 = scmp.ne.s32.totalorder %s43, %s44
    %p58 = scmp.eq.s32.totalorder %s15, 1
    %p59 = por %p57, %p58
    %p61 = scmp.ne.s32.totalorder %s44, %s60
    %p62 = scmp.eq.s32.totalorder %s15, 0
    %p63 = por %p61, %p62
    %s64 = ssub.s32 %s18, %s27
    %s65 = ssub.s32 %s17, %s31
    %s66 = sor.u32 %s64, %s65
    %p67 = scmp.eq.s32.totalorder %s66, 0
    %s69 = sadd.s32 %s68, 1
    %s70 = scalar_select %p67, %s68, %s69
    %p73 = pneg %p67
    %p74 = scmp.eq.s32.totalorder %s9, 1
    %p75 = por %p73, %p74
    %p76 = scmp.ne.s32.totalorder %s68, %s71
    %p77 = scmp.eq.s32.totalorder %s9, 0
    %p78 = por %p76, %p77
    %p79 = scmp.ne.s32.totalorder %s68, %s71
    %p80 = scmp.eq.s32.totalorder %s14, 1
    %p81 = por %p79, %p80
    %p82 = scmp.ne.s32.totalorder %s71, %s72
    %p83 = scmp.eq.s32.totalorder %s14, 0
    %p84 = por %p82, %p83
    %p85 = scmp.ne.s32.totalorder %s71, %s72
    %p86 = scmp.eq.s32.totalorder %s15, 1
    %p87 = por %p85, %p86
    %p89 = scmp.ne.s32.totalorder %s72, %s88
    %p90 = scmp.eq.s32.totalorder %s15, 0
    %p91 = por %p89, %p90
    %s92 = ssub.s32 %s17, %s31
    %p93 = scmp.eq.s32.totalorder %s92, 0
    %s95 = sadd.s32 %s94, 1
    %s96 = scalar_select %p93, %s94, %s95
    %p99 = pneg %p93
    %p100 = scmp.eq.s32.totalorder %s9, 1
    %p101 = por %p99, %p100
    %p102 = scmp.ne.s32.totalorder %s94, %s97
    %p103 = scmp.eq.s32.totalorder %s9, 0
    %p104 = por %p102, %p103
    %p105 = scmp.ne.s32.totalorder %s94, %s97
    %p106 = scmp.eq.s32.totalorder %s14, 1
    %p107 = por %p105, %p106
    %p108 = scmp.ne.s32.totalorder %s97, %s98
    %p109 = scmp.eq.s32.totalorder %s14, 0
    %p110 = por %p108, %p109
    %p111 = scmp.ne.s32.totalorder %s97, %s98
    %p112 = scmp.eq.s32.totalorder %s15, 1
    %p113 = por %p111, %p112
    %p115 = scmp.ne.s32.totalorder %s98, %s114
    %p116 = scmp.eq.s32.totalorder %s15, 0
    %p117 = por %p115, %p116
    %s118 = ssub.s32 %s16, %s35
    %s119 = ssub.s32 %s17, %s31
    %s120 = sor.u32 %s118, %s119
    %p121 = scmp.eq.s32.totalorder %s120, 0
    %s123 = sadd.s32 %s122, 1
    %s124 = scalar_select %p121, %s122, %s123
    %p127 = pneg %p121
    %p128 = scmp.eq.s32.totalorder %s9, 1
    %p129 = por %p127, %p128
    %p130 = scmp.ne.s32.totalorder %s122, %s125
    %p131 = scmp.eq.s32.totalorder %s9, 0
    %p132 = por %p130, %p131
    %p133 = scmp.ne.s32.totalorder %s122, %s125
    %p134 = scmp.eq.s32.totalorder %s14, 1
    %p135 = por %p133, %p134
    %p136 = scmp.ne.s32.totalorder %s125, %s126
    %p137 = scmp.eq.s32.totalorder %s14, 0
    %p138 = por %p136, %p137
    %p139 = scmp.ne.s32.totalorder %s125, %s126
    %p140 = scmp.eq.s32.totalorder %s15, 1
    %p141 = por %p139, %p140
    %p143 = scmp.ne.s32.totalorder %s126, %s142
    %p144 = scmp.eq.s32.totalorder %s15, 0
    %p145 = por %p143, %p144
    %p146 = scmp.le.s32.totalorder 1, %s9
    %p147 = scmp.lt.s32.totalorder %s9, 3
    %p148 = pnand %p146, %p147
    %p149 = pneg %p148
    // Predicated region
    $region9: #{discriminator_forward.6} parent=5 // pred_check
      _
    $region10: #{discriminator_forward.6} parent=5 // pred_check_branch
      %151 = sbr.rel (%p148) target = $region12
    $region11: #{discriminator_forward.6} parent=5 // pred_region
      %s152 = ssub.s32 %s9, 1
      // Predicated region
      $region13: #{discriminator_forward.6} parent=11 // pred_check
        %p153 = pneg %p84
      $region14: #{discriminator_forward.6} parent=11 // pred_check_branch
        %155 = sbr.rel (%p153) target = $region16
      $region15: #{discriminator_forward.6} parent=11 // pred_region
        %s156 = smul.u32 16, %s21
        %p157 = scmp.lt.s32.totalorder %s156, 15
        %s158 = scalar_select %p157, %s156, 15
        %p159 = scmp.lt.s32.totalorder %s20, 0
        %s160 = scalar_select %p159, %s20, 0
        %s161 = sadd.s32 %s160, %s158
        %s162 = smul.addr %s161, 4
        %s163 = scalar_lea.vmem %s1, %s162
        %s164 = smul.u32 16, %s21
      $region16: #{discriminator_forward.6} parent=11 // pred_fallthru
        _
      // Predicated region
      $region17: #{discriminator_forward.6} parent=11 // pred_check
        %p165 = pneg %p110
      $region18: #{discriminator_forward.6} parent=11 // pred_check_branch
        %167 = sbr.rel (%p165) target = $region20
      $region19: #{discriminator_forward.6} parent=11 // pred_region
        %p168 = scmp.lt.s32.totalorder %s20, 0
        %s169 = scalar_select %p168, %s20, 0
        %s170 = scalar_lea.vmem %s2, %s169
      $region20: #{discriminator_forward.6} parent=11 // pred_fallthru
        _
    $region12: #{discriminator_forward.6} parent=5 // pred_fallthru
      _
    %p171 = scmp.lt.s32.totalorder %s9, 2
    // Predicated region
    $region21: #{discriminator_forward.6} parent=5 // pred_check
      %p172 = pneg %p171
    $region22: #{discriminator_forward.6} parent=5 // pred_check_branch
      %174 = sbr.rel (%p172) target = $region24
    $region23: #{discriminator_forward.6} parent=5 // pred_region
      // Predicated region
      $region25: #{discriminator_forward.6} parent=23 // pred_check
        %p175 = pneg %p50
      $region26: #{discriminator_forward.6} parent=23 // pred_check_branch
        %177 = sbr.rel (%p175) target = $region28
      $region27: #{discriminator_forward.6} parent=23 // pred_region
        %s178 = smul.u32 32, %s16
        %p179 = scmp.lt.s32.totalorder %s178, 63
        %s180 = scalar_select %p179, %s178, 63
        %p181 = scmp.lt.s32.totalorder %s18, 0
        %s182 = scalar_select %p181, %s18, 0
        %s183 = sadd.s32 %s182, %s180
        %s184 = smul.addr %s183, 4
        %s185 = scalar_lea.vmem %s0, %s184
        %s186 = smul.u32 32, %s16
      $region28: #{discriminator_forward.6} parent=23 // pred_fallthru
        _
    $region24: #{discriminator_forward.6} parent=5 // pred_fallthru
      _
    %p187 = scmp.le.s32.totalorder 1, %s9
    %p188 = scmp.lt.s32.totalorder %s9, 3
    %p189 = pnand %p187, %p188
    %p190 = pneg %p189
    // Predicated region
    $region29: #{discriminator_forward.6} parent=5 // pred_check
      _
    $region30: #{discriminator_forward.6} parent=5 // pred_check_branch
      %192 = sbr.rel (%p189) target = $region32
    $region31: #{discriminator_forward.6} parent=5 // pred_region
      %s193 = ssub.s32 %s9, 1
      %s194 = smul.u32 32, %s19
      %p195 = scmp.lt.s32.totalorder %s194, 63
      %s196 = scalar_select %p195, %s194, 63
      %p197 = scmp.lt.s32.totalorder %s21, 0
      %s198 = scalar_select %p197, %s21, 0
      %s199 = sadd.s32 %s198, %s196
      %s200 = smul.addr %s199, 4
      %s201 = scalar_lea.vmem %s0, %s200
      %p202 = pneg %p56
      %p203 = pneg %p53
      %s204 = smul.u32 16, %s21
      %p205 = scmp.lt.s32.totalorder %s204, 15
      %s206 = scalar_select %p205, %s204, 15
      %p207 = scmp.lt.s32.totalorder %s20, 0
      %s208 = scalar_select %p207, %s20, 0
      %s209 = sadd.s32 %s208, %s206
      %s210 = smul.addr %s209, 4
      %s211 = scalar_lea.vmem %s1, %s210
      %p212 = pneg %p84
      %p213 = pneg %p81
      %p214 = scmp.lt.s32.totalorder %s20, 0
      %s215 = scalar_select %p214, %s20, 0
      %s216 = scalar_lea.vmem %s2, %s215
      %p217 = pneg %p110
      %p218 = pneg %p107
      %p219 = pneg %p138
      %p220 = pneg %p135
      %s221 = smul.u32 32, %s19
      %p222 = scmp.lt.s32.totalorder %s221, 63
      %s223 = scalar_select %p222, %s221, 63
      %p224 = scmp.lt.s32.totalorder %s20, 0
      %s225 = scalar_select %p224, %s20, 0
      %s226 = sadd.s32 %s225, %s223
      %s227 = smul.addr %s226, 4
      %s228 = scalar_lea.vmem %s3, %s227
      %s229 = smul.u32 32, %s19
      %p230 = scmp.lt.s32.totalorder %s229, 63
      %s231 = scalar_select %p230, %s229, 63
      %p232 = scmp.lt.s32.totalorder %s21, 0
      %s233 = scalar_select %p232, %s21, 0
      %s234 = sadd.s32 %s233, %s231
      %s235 = smul.addr %s234, 4
      %s236 = scalar_lea.vmem %s0, %s235
      %s237 = smul.u32 32, %s19
      %s238 = smul.u32 16, %s21
      %p239 = scmp.lt.s32.totalorder %s238, 15
      %s240 = scalar_select %p239, %s238, 15
      %p241 = scmp.lt.s32.totalorder %s20, 0
      %s242 = scalar_select %p241, %s20, 0
      %s243 = sadd.s32 %s242, %s240
      %s244 = smul.addr %s243, 4
      %s245 = scalar_lea.vmem %s1, %s244
      %s246 = smul.u32 16, %s21
      %p247 = scmp.lt.s32.totalorder %s20, 0
      %s248 = scalar_select %p247, %s20, 0
      %s249 = scalar_lea.vmem %s2, %s248
      %s250 = smul.u32 32, %s19
      %p251 = scmp.lt.s32.totalorder %s250, 63
      %s252 = scalar_select %p251, %s250, 63
      %p253 = scmp.lt.s32.totalorder %s20, 0
      %s254 = scalar_select %p253, %s20, 0
      %s255 = sadd.s32 %s254, %s252
      %s256 = smul.addr %s255, 4
      %s257 = scalar_lea.vmem %s3, %s256
      %s258 = smul.u32 32, %s19
      %p259 = scmp.eq.s32.totalorder %s21, 0
      // Predicated region
      $region33: #{discriminator_forward.6} parent=31 // pred_check
        %p260 = pneg %p259
      $region34: #{discriminator_forward.6} parent=31 // pred_check_branch
        %262 = sbr.rel (%p260) target = $region36
      $region35: #{discriminator_forward.6} parent=31 // pred_region
        %263 = vst [vmem:[#allocation2] sm:$0xff] 0.0
        %264 = vst [vmem:[#allocation2 + $0x8] sm:$0xff] 0.0
        %265 = vst [vmem:[#allocation2 + $0x10] sm:$0xff] 0.0
        %266 = vst [vmem:[#allocation2 + $0x18] sm:$0xff] 0.0
        %267 = vst [vmem:[#allocation2 + $0x20] sm:$0xff] 0.0
        %268 = vst [vmem:[#allocation2 + $0x28] sm:$0xff] 0.0
        %269 = vst [vmem:[#allocation2 + $0x30] sm:$0xff] 0.0
        %270 = vst [vmem:[#allocation2 + $0x38] sm:$0xff] 0.0
        %271 = vst [vmem:[#allocation2 + $0x40] sm:$0xff] 0.0
        %272 = vst [vmem:[#allocation2 + $0x48] sm:$0xff] 0.0
        %273 = vst [vmem:[#allocation2 + $0x50] sm:$0xff] 0.0
        %274 = vst [vmem:[#allocation2 + $0x58] sm:$0xff] 0.0
        %275 = vst [vmem:[#allocation2 + $0x60] sm:$0xff] 0.0
        %276 = vst [vmem:[#allocation2 + $0x68] sm:$0xff] 0.0
        %277 = vst [vmem:[#allocation2 + $0x70] sm:$0xff] 0.0
        %278 = vst [vmem:[#allocation2 + $0x78] sm:$0xff] 0.0
        %279 = vst [vmem:[#allocation2 + $0x80] sm:$0xff] 0.0
        %280 = vst [vmem:[#allocation2 + $0x88] sm:$0xff] 0.0
        %281 = vst [vmem:[#allocation2 + $0x90] sm:$0xff] 0.0
        %282 = vst [vmem:[#allocation2 + $0x98] sm:$0xff] 0.0
        %283 = vst [vmem:[#allocation2 + $0xa0] sm:$0xff] 0.0
        %284 = vst [vmem:[#allocation2 + $0xa8] sm:$0xff] 0.0
        %285 = vst [vmem:[#allocation2 + $0xb0] sm:$0xff] 0.0
        %286 = vst [vmem:[#allocation2 + $0xb8] sm:$0xff] 0.0
        %287 = vst [vmem:[#allocation2 + $0xc0] sm:$0xff] 0.0
        %288 = vst [vmem:[#allocation2 + $0xc8] sm:$0xff] 0.0
        %289 = vst [vmem:[#allocation2 + $0xd0] sm:$0xff] 0.0
        %290 = vst [vmem:[#allocation2 + $0xd8] sm:$0xff] 0.0
        %291 = vst [vmem:[#allocation2 + $0xe0] sm:$0xff] 0.0
        %292 = vst [vmem:[#allocation2 + $0xe8] sm:$0xff] 0.0
        %293 = vst [vmem:[#allocation2 + $0xf0] sm:$0xff] 0.0
        %294 = vst [vmem:[#allocation2 + $0xf8] sm:$0xff] 0.0
      $region36: #{discriminator_forward.6} parent=31 // pred_fallthru
        _
      %v295 = vld [vmem:[#allocation2] sm:$0xff]
      %v296 = vld [vmem:[#allocation2 + $0x8] sm:$0xff]
      %v297 = vld [vmem:[#allocation2 + $0x10] sm:$0xff]
      %v298 = vld [vmem:[#allocation2 + $0x18] sm:$0xff]
      %v299 = vld [vmem:[#allocation2 + $0x20] sm:$0xff]
      %v300 = vld [vmem:[#allocation2 + $0x28] sm:$0xff]
      %v301 = vld [vmem:[#allocation2 + $0x30] sm:$0xff]
      %v302 = vld [vmem:[#allocation2 + $0x38] sm:$0xff]
      %v303 = vld [vmem:[#allocation2 + $0x40] sm:$0xff]
      %v304 = vld [vmem:[#allocation2 + $0x48] sm:$0xff]
      %v305 = vld [vmem:[#allocation2 + $0x50] sm:$0xff]
      %v306 = vld [vmem:[#allocation2 + $0x58] sm:$0xff]
      %v307 = vld [vmem:[#allocation2 + $0x60] sm:$0xff]
      %v308 = vld [vmem:[#allocation2 + $0x68] sm:$0xff]
      %v309 = vld [vmem:[#allocation2 + $0x70] sm:$0xff]
      %v310 = vld [vmem:[#allocation2 + $0x78] sm:$0xff]
      %v311 = vld [vmem:[#allocation2 + $0x80] sm:$0xff]
      %v312 = vld [vmem:[#allocation2 + $0x88] sm:$0xff]
      %v313 = vld [vmem:[#allocation2 + $0x90] sm:$0xff]
      %v314 = vld [vmem:[#allocation2 + $0x98] sm:$0xff]
      %v315 = vld [vmem:[#allocation2 + $0xa0] sm:$0xff]
      %v316 = vld [vmem:[#allocation2 + $0xa8] sm:$0xff]
      %v317 = vld [vmem:[#allocation2 + $0xb0] sm:$0xff]
      %v318 = vld [vmem:[#allocation2 + $0xb8] sm:$0xff]
      %v319 = vld [vmem:[#allocation2 + $0xc0] sm:$0xff]
      %v320 = vld [vmem:[#allocation2 + $0xc8] sm:$0xff]
      %v321 = vld [vmem:[#allocation2 + $0xd0] sm:$0xff]
      %v322 = vld [vmem:[#allocation2 + $0xd8] sm:$0xff]
      %v323 = vld [vmem:[#allocation2 + $0xe0] sm:$0xff]
      %v324 = vld [vmem:[#allocation2 + $0xe8] sm:$0xff]
      %v325 = vld [vmem:[#allocation2 + $0xf0] sm:$0xff]
      %v326 = vld [vmem:[#allocation2 + $0xf8] sm:$0xff]
      %v327 = vld [vmem:[%s236] sm:$0xf]
      %v328 = vld [vmem:[%s236 + $0x4] sm:$0xf]
      %v329 = vld [vmem:[%s236 + $0x8] sm:$0xf]
      %v330 = vld [vmem:[%s236 + $0xc] sm:$0xf]
      %v331 = vld [vmem:[%s236 + $0x10] sm:$0xf]
      %v332 = vld [vmem:[%s236 + $0x14] sm:$0xf]
      %v333 = vld [vmem:[%s236 + $0x18] sm:$0xf]
      %v334 = vld [vmem:[%s236 + $0x1c] sm:$0xf]
      %v335 = vld [vmem:[%s236 + $0x20] sm:$0xf]
      %v336 = vld [vmem:[%s236 + $0x24] sm:$0xf]
      %v337 = vld [vmem:[%s236 + $0x28] sm:$0xf]
      %v338 = vld [vmem:[%s236 + $0x2c] sm:$0xf]
      %v339 = vld [vmem:[%s236 + $0x30] sm:$0xf]
      %v340 = vld [vmem:[%s236 + $0x34] sm:$0xf]
      %v341 = vld [vmem:[%s236 + $0x38] sm:$0xf]
      %v342 = vld [vmem:[%s236 + $0x3c] sm:$0xf]
      %v343 = vld [vmem:[%s236 + $0x40] sm:$0xf]
      %v344 = vld [vmem:[%s236 + $0x44] sm:$0xf]
      %v345 = vld [vmem:[%s236 + $0x48] sm:$0xf]
      %v346 = vld [vmem:[%s236 + $0x4c] sm:$0xf]
      %v347 = vld [vmem:[%s236 + $0x50] sm:$0xf]
      %v348 = vld [vmem:[%s236 + $0x54] sm:$0xf]
      %v349 = vld [vmem:[%s236 + $0x58] sm:$0xf]
      %v350 = vld [vmem:[%s236 + $0x5c] sm:$0xf]
      %v351 = vld [vmem:[%s236 + $0x60] sm:$0xf]
      %v352 = vld [vmem:[%s236 + $0x64] sm:$0xf]
      %v353 = vld [vmem:[%s236 + $0x68] sm:$0xf]
      %v354 = vld [vmem:[%s236 + $0x6c] sm:$0xf]
      %v355 = vld [vmem:[%s236 + $0x70] sm:$0xf]
      %v356 = vld [vmem:[%s236 + $0x74] sm:$0xf]
      %v357 = vld [vmem:[%s236 + $0x78] sm:$0xf]
      %v358 = vld [vmem:[%s236 + $0x7c] sm:$0xf]
      %v359 = vld [vmem:[%s245] sm:$0xf]
      %v360 = vld [vmem:[%s245 + $0x4] sm:$0xf]
      %v361 = vld [vmem:[%s245 + $0x8] sm:$0xf]
      %v362 = vld [vmem:[%s245 + $0xc] sm:$0xf]
      %v363 = vld [vmem:[%s245 + $0x10] sm:$0xf]
      %v364 = vld [vmem:[%s245 + $0x14] sm:$0xf]
      %v365 = vld [vmem:[%s245 + $0x18] sm:$0xf]
      %v366 = vld [vmem:[%s245 + $0x1c] sm:$0xf]
      %v367 = vld [vmem:[%s245 + $0x20] sm:$0xf]
      %v368 = vld [vmem:[%s245 + $0x24] sm:$0xf]
      %v369 = vld [vmem:[%s245 + $0x28] sm:$0xf]
      %v370 = vld [vmem:[%s245 + $0x2c] sm:$0xf]
      %v371 = vld [vmem:[%s245 + $0x30] sm:$0xf]
      %v372 = vld [vmem:[%s245 + $0x34] sm:$0xf]
      %v373 = vld [vmem:[%s245 + $0x38] sm:$0xf]
      %v374 = vld [vmem:[%s245 + $0x3c] sm:$0xf]
      %v407 = vunpack.c.l.b16 %v327
      %v408 = vunpack.c.l.b16 %v328
      %v409 = vunpack.c.l.b16 %v329
      %v410 = vunpack.c.l.b16 %v330
      %v411 = vunpack.c.l.b16 %v331
      %v412 = vunpack.c.l.b16 %v332
      %v413 = vunpack.c.l.b16 %v333
      %v414 = vunpack.c.l.b16 %v334
      %v415 = vunpack.c.l.b16 %v335
      %v416 = vunpack.c.l.b16 %v336
      %v417 = vunpack.c.l.b16 %v337
      %v418 = vunpack.c.l.b16 %v338
      %v419 = vunpack.c.l.b16 %v339
      %v420 = vunpack.c.l.b16 %v340
      %v421 = vunpack.c.l.b16 %v341
      %v422 = vunpack.c.l.b16 %v342
      %v423 = vunpack.c.l.b16 %v343
      %v424 = vunpack.c.l.b16 %v344
      %v425 = vunpack.c.l.b16 %v345
      %v426 = vunpack.c.l.b16 %v346
      %v427 = vunpack.c.l.b16 %v347
      %v428 = vunpack.c.l.b16 %v348
      %v429 = vunpack.c.l.b16 %v349
      %v430 = vunpack.c.l.b16 %v350
      %v431 = vunpack.c.l.b16 %v351
      %v432 = vunpack.c.l.b16 %v352
      %v433 = vunpack.c.l.b16 %v353
      %v434 = vunpack.c.l.b16 %v354
      %v435 = vunpack.c.l.b16 %v355
      %v436 = vunpack.c.l.b16 %v356
      %v437 = vunpack.c.l.b16 %v357
      %v438 = vunpack.c.l.b16 %v358
      %v439 = vpack.c.b16 %v408, %v407
      %v440 = vpack.c.b16 %v410, %v409
      %v441 = vpack.c.b16 %v412, %v411
      %v442 = vpack.c.b16 %v414, %v413
      %v443 = vpack.c.b16 %v416, %v415
      %v444 = vpack.c.b16 %v418, %v417
      %v445 = vpack.c.b16 %v420, %v419
      %v446 = vpack.c.b16 %v422, %v421
      %v447 = vpack.c.b16 %v424, %v423
      %v448 = vpack.c.b16 %v426, %v425
      %v449 = vpack.c.b16 %v428, %v427
      %v450 = vpack.c.b16 %v430, %v429
      %v451 = vpack.c.b16 %v432, %v431
      %v452 = vpack.c.b16 %v434, %v433
      %v453 = vpack.c.b16 %v436, %v435
      %v454 = vpack.c.b16 %v438, %v437
      %v487 = vunpack.c.l.b16 %v359
      %v488 = vunpack.c.l.b16 %v360
      %v489 = vunpack.c.l.b16 %v361
      %v490 = vunpack.c.l.b16 %v362
      %v491 = vunpack.c.l.b16 %v363
      %v492 = vunpack.c.l.b16 %v364
      %v493 = vunpack.c.l.b16 %v365
      %v494 = vunpack.c.l.b16 %v366
      %v495 = vunpack.c.l.b16 %v367
      %v496 = vunpack.c.l.b16 %v368
      %v497 = vunpack.c.l.b16 %v369
      %v498 = vunpack.c.l.b16 %v370
      %v499 = vunpack.c.l.b16 %v371
      %v500 = vunpack.c.l.b16 %v372
      %v501 = vunpack.c.l.b16 %v373
      %v502 = vunpack.c.l.b16 %v374
      %v503 = vpack.c.b16 %v488, %v487
      %v504 = vpack.c.b16 %v490, %v489
      %v505 = vpack.c.b16 %v492, %v491
      %v506 = vpack.c.b16 %v494, %v493
      %v507 = vpack.c.b16 %v496, %v495
      %v508 = vpack.c.b16 %v498, %v497
      %v509 = vpack.c.b16 %v500, %v499
      %v510 = vpack.c.b16 %v502, %v501
      %519 = vmatpush.bf16.msra.mxu0 %v510
      %520 = vmatpush.bf16.msra.mxu0 %v509
      %521 = vmatpush.bf16.msra.mxu0 %v508
      %522 = vmatpush.bf16.msra.mxu0 %v507
      %523 = vmatpush.bf16.msra.mxu0 %v506
      %524 = vmatpush.bf16.msra.mxu0 %v505
      %525 = vmatpush.bf16.msra.mxu0 %v504
      %526 = vmatpush.bf16.msra.mxu0 %v503
      %527 = vmatmul.bf16.gmra.mxu0 %v439
      %v528 = vpop.f32.mrf.mxu0
      %v529 = vadd.f32 0.0, %v528
      %v530 = vpop.f32.mrf.mxu0
      %v531 = vadd.f32 0.0, %v530
      %532 = vmatmul.bf16.gmra.mxu0 %v440
      %v533 = vpop.f32.mrf.mxu0
      %v534 = vadd.f32 0.0, %v533
      %v535 = vpop.f32.mrf.mxu0
      %v536 = vadd.f32 0.0, %v535
      %537 = vmatmul.bf16.gmra.mxu0 %v441
      %v538 = vpop.f32.mrf.mxu0
      %v539 = vadd.f32 0.0, %v538
      %v540 = vpop.f32.mrf.mxu0
      %v541 = vadd.f32 0.0, %v540
      %542 = vmatmul.bf16.gmra.mxu0 %v442
      %v543 = vpop.f32.mrf.mxu0
      %v544 = vadd.f32 0.0, %v543
      %v545 = vpop.f32.mrf.mxu0
      %v546 = vadd.f32 0.0, %v545
      %547 = vmatmul.bf16.gmra.mxu0 %v443
      %v548 = vpop.f32.mrf.mxu0
      %v549 = vadd.f32 0.0, %v548
      %v550 = vpop.f32.mrf.mxu0
      %v551 = vadd.f32 0.0, %v550
      %552 = vmatmul.bf16.gmra.mxu0 %v444
      %v553 = vpop.f32.mrf.mxu0
      %v554 = vadd.f32 0.0, %v553
      %v555 = vpop.f32.mrf.mxu0
      %v556 = vadd.f32 0.0, %v555
      %557 = vmatmul.bf16.gmra.mxu0 %v445
      %v558 = vpop.f32.mrf.mxu0
      %v559 = vadd.f32 0.0, %v558
      %v560 = vpop.f32.mrf.mxu0
      %v561 = vadd.f32 0.0, %v560
      %562 = vmatmul.bf16.gmra.mxu0 %v446
      %v563 = vpop.f32.mrf.mxu0
      %v564 = vadd.f32 0.0, %v563
      %v565 = vpop.f32.mrf.mxu0
      %v566 = vadd.f32 0.0, %v565
      %567 = vmatmul.bf16.gmra.mxu0 %v447
      %v568 = vpop.f32.mrf.mxu0
      %v569 = vadd.f32 0.0, %v568
      %v570 = vpop.f32.mrf.mxu0
      %v571 = vadd.f32 0.0, %v570
      %572 = vmatmul.bf16.gmra.mxu0 %v448
      %v573 = vpop.f32.mrf.mxu0
      %v574 = vadd.f32 0.0, %v573
      %v575 = vpop.f32.mrf.mxu0
      %v576 = vadd.f32 0.0, %v575
      %577 = vmatmul.bf16.gmra.mxu0 %v449
      %v578 = vpop.f32.mrf.mxu0
      %v579 = vadd.f32 0.0, %v578
      %v580 = vpop.f32.mrf.mxu0
      %v581 = vadd.f32 0.0, %v580
      %582 = vmatmul.bf16.gmra.mxu0 %v450
      %v583 = vpop.f32.mrf.mxu0
      %v584 = vadd.f32 0.0, %v583
      %v585 = vpop.f32.mrf.mxu0
      %v586 = vadd.f32 0.0, %v585
      %587 = vmatmul.bf16.gmra.mxu0 %v451
      %v588 = vpop.f32.mrf.mxu0
      %v589 = vadd.f32 0.0, %v588
      %v590 = vpop.f32.mrf.mxu0
      %v591 = vadd.f32 0.0, %v590
      %592 = vmatmul.bf16.gmra.mxu0 %v452
      %v593 = vpop.f32.mrf.mxu0
      %v594 = vadd.f32 0.0, %v593
      %v595 = vpop.f32.mrf.mxu0
      %v596 = vadd.f32 0.0, %v595
      %597 = vmatmul.bf16.gmra.mxu0 %v453
      %v598 = vpop.f32.mrf.mxu0
      %v599 = vadd.f32 0.0, %v598
      %v600 = vpop.f32.mrf.mxu0
      %v601 = vadd.f32 0.0, %v600
      %602 = vmatmul.bf16.gmra.mxu0 %v454
      %v603 = vpop.f32.mrf.mxu0
      %v604 = vadd.f32 0.0, %v603
      %v605 = vpop.f32.mrf.mxu0
      %v606 = vadd.f32 0.0, %v605
      %607 = vdwg.mxu0
      %v608 = vadd.f32 %v295, %v529
      %v609 = vadd.f32 %v296, %v531
      %v610 = vadd.f32 %v297, %v534
      %v611 = vadd.f32 %v298, %v536
      %v612 = vadd.f32 %v299, %v539
      %v613 = vadd.f32 %v300, %v541
      %v614 = vadd.f32 %v301, %v544
      %v615 = vadd.f32 %v302, %v546
      %v616 = vadd.f32 %v303, %v549
      %v617 = vadd.f32 %v304, %v551
      %v618 = vadd.f32 %v305, %v554
      %v619 = vadd.f32 %v306, %v556
      %v620 = vadd.f32 %v307, %v559
      %v621 = vadd.f32 %v308, %v561
      %v622 = vadd.f32 %v309, %v564
      %v623 = vadd.f32 %v310, %v566
      %v624 = vadd.f32 %v311, %v569
      %v625 = vadd.f32 %v312, %v571
      %v626 = vadd.f32 %v313, %v574
      %v627 = vadd.f32 %v314, %v576
      %v628 = vadd.f32 %v315, %v579
      %v629 = vadd.f32 %v316, %v581
      %v630 = vadd.f32 %v317, %v584
      %v631 = vadd.f32 %v318, %v586
      %v632 = vadd.f32 %v319, %v589
      %v633 = vadd.f32 %v320, %v591
      %v634 = vadd.f32 %v321, %v594
      %v635 = vadd.f32 %v322, %v596
      %v636 = vadd.f32 %v323, %v599
      %v637 = vadd.f32 %v324, %v601
      %v638 = vadd.f32 %v325, %v604
      %v639 = vadd.f32 %v326, %v606
      %640 = vst [vmem:[#allocation2] sm:$0xff] %v608
      %641 = vst [vmem:[#allocation2 + $0x8] sm:$0xff] %v609
      %642 = vst [vmem:[#allocation2 + $0x10] sm:$0xff] %v610
      %643 = vst [vmem:[#allocation2 + $0x18] sm:$0xff] %v611
      %644 = vst [vmem:[#allocation2 + $0x20] sm:$0xff] %v612
      %645 = vst [vmem:[#allocation2 + $0x28] sm:$0xff] %v613
      %646 = vst [vmem:[#allocation2 + $0x30] sm:$0xff] %v614
      %647 = vst [vmem:[#allocation2 + $0x38] sm:$0xff] %v615
      %648 = vst [vmem:[#allocation2 + $0x40] sm:$0xff] %v616
      %649 = vst [vmem:[#allocation2 + $0x48] sm:$0xff] %v617
      %650 = vst [vmem:[#allocation2 + $0x50] sm:$0xff] %v618
      %651 = vst [vmem:[#allocation2 + $0x58] sm:$0xff] %v619
      %652 = vst [vmem:[#allocation2 + $0x60] sm:$0xff] %v620
      %653 = vst [vmem:[#allocation2 + $0x68] sm:$0xff] %v621
      %654 = vst [vmem:[#allocation2 + $0x70] sm:$0xff] %v622
      %655 = vst [vmem:[#allocation2 + $0x78] sm:$0xff] %v623
      %656 = vst [vmem:[#allocation2 + $0x80] sm:$0xff] %v624
      %657 = vst [vmem:[#allocation2 + $0x88] sm:$0xff] %v625
      %658 = vst [vmem:[#allocation2 + $0x90] sm:$0xff] %v626
      %659 = vst [vmem:[#allocation2 + $0x98] sm:$0xff] %v627
      %660 = vst [vmem:[#allocation2 + $0xa0] sm:$0xff] %v628
      %661 = vst [vmem:[#allocation2 + $0xa8] sm:$0xff] %v629
      %662 = vst [vmem:[#allocation2 + $0xb0] sm:$0xff] %v630
      %663 = vst [vmem:[#allocation2 + $0xb8] sm:$0xff] %v631
      %664 = vst [vmem:[#allocation2 + $0xc0] sm:$0xff] %v632
      %665 = vst [vmem:[#allocation2 + $0xc8] sm:$0xff] %v633
      %666 = vst [vmem:[#allocation2 + $0xd0] sm:$0xff] %v634
      %667 = vst [vmem:[#allocation2 + $0xd8] sm:$0xff] %v635
      %668 = vst [vmem:[#allocation2 + $0xe0] sm:$0xff] %v636
      %669 = vst [vmem:[#allocation2 + $0xe8] sm:$0xff] %v637
      %670 = vst [vmem:[#allocation2 + $0xf0] sm:$0xff] %v638
      %671 = vst [vmem:[#allocation2 + $0xf8] sm:$0xff] %v639
      // Predicated region
      $region37: #{discriminator_forward.6} parent=31 // pred_check
        %p672 = pneg %p259
      $region38: #{discriminator_forward.6} parent=31 // pred_check_branch
        %674 = sbr.rel (%p672) target = $region40
      $region39: #{discriminator_forward.6} parent=31 // pred_region
        %v675 = vld [vmem:[#allocation2] sm:$0xff]
        %v676 = vld [vmem:[#allocation2 + $0x8] sm:$0xff]
        %v677 = vld [vmem:[#allocation2 + $0x10] sm:$0xff]
        %v678 = vld [vmem:[#allocation2 + $0x18] sm:$0xff]
        %v679 = vld [vmem:[#allocation2 + $0x20] sm:$0xff]
        %v680 = vld [vmem:[#allocation2 + $0x28] sm:$0xff]
        %v681 = vld [vmem:[#allocation2 + $0x30] sm:$0xff]
        %v682 = vld [vmem:[#allocation2 + $0x38] sm:$0xff]
        %v683 = vld [vmem:[#allocation2 + $0x40] sm:$0xff]
        %v684 = vld [vmem:[#allocation2 + $0x48] sm:$0xff]
        %v685 = vld [vmem:[#allocation2 + $0x50] sm:$0xff]
        %v686 = vld [vmem:[#allocation2 + $0x58] sm:$0xff]
        %v687 = vld [vmem:[#allocation2 + $0x60] sm:$0xff]
        %v688 = vld [vmem:[#allocation2 + $0x68] sm:$0xff]
        %v689 = vld [vmem:[#allocation2 + $0x70] sm:$0xff]
        %v690 = vld [vmem:[#allocation2 + $0x78] sm:$0xff]
        %v691 = vld [vmem:[#allocation2 + $0x80] sm:$0xff]
        %v692 = vld [vmem:[#allocation2 + $0x88] sm:$0xff]
        %v693 = vld [vmem:[#allocation2 + $0x90] sm:$0xff]
        %v694 = vld [vmem:[#allocation2 + $0x98] sm:$0xff]
        %v695 = vld [vmem:[#allocation2 + $0xa0] sm:$0xff]
        %v696 = vld [vmem:[#allocation2 + $0xa8] sm:$0xff]
        %v697 = vld [vmem:[#allocation2 + $0xb0] sm:$0xff]
        %v698 = vld [vmem:[#allocation2 + $0xb8] sm:$0xff]
        %v699 = vld [vmem:[#allocation2 + $0xc0] sm:$0xff]
        %v700 = vld [vmem:[#allocation2 + $0xc8] sm:$0xff]
        %v701 = vld [vmem:[#allocation2 + $0xd0] sm:$0xff]
        %v702 = vld [vmem:[#allocation2 + $0xd8] sm:$0xff]
        %v703 = vld [vmem:[#allocation2 + $0xe0] sm:$0xff]
        %v704 = vld [vmem:[#allocation2 + $0xe8] sm:$0xff]
        %v705 = vld [vmem:[#allocation2 + $0xf0] sm:$0xff]
        %v706 = vld [vmem:[#allocation2 + $0xf8] sm:$0xff]
        %v707 = vld [vmem:[%s249] sm:$0x1]
        %v709 = vperm.slane %v707, 0
        %v711 = vadd.f32 %v675, %v709
        %v712 = vadd.f32 %v676, %v709
        %v713 = vadd.f32 %v677, %v709
        %v714 = vadd.f32 %v678, %v709
        %v715 = vadd.f32 %v679, %v709
        %v716 = vadd.f32 %v680, %v709
        %v717 = vadd.f32 %v681, %v709
        %v718 = vadd.f32 %v682, %v709
        %v719 = vadd.f32 %v683, %v709
        %v720 = vadd.f32 %v684, %v709
        %v721 = vadd.f32 %v685, %v709
        %v722 = vadd.f32 %v686, %v709
        %v723 = vadd.f32 %v687, %v709
        %v724 = vadd.f32 %v688, %v709
        %v725 = vadd.f32 %v689, %v709
        %v726 = vadd.f32 %v690, %v709
        %v727 = vadd.f32 %v691, %v709
        %v728 = vadd.f32 %v692, %v709
        %v729 = vadd.f32 %v693, %v709
        %v730 = vadd.f32 %v694, %v709
        %v731 = vadd.f32 %v695, %v709
        %v732 = vadd.f32 %v696, %v709
        %v733 = vadd.f32 %v697, %v709
        %v734 = vadd.f32 %v698, %v709
        %v735 = vadd.f32 %v699, %v709
        %v736 = vadd.f32 %v700, %v709
        %v737 = vadd.f32 %v701, %v709
        %v738 = vadd.f32 %v702, %v709
        %v739 = vadd.f32 %v703, %v709
        %v740 = vadd.f32 %v704, %v709
        %v741 = vadd.f32 %v705, %v709
        %v742 = vadd.f32 %v706, %v709
        %vm743 = vcmp.ge.f32.partialorder %v711, 0.0
        %vm744 = vcmp.ge.f32.partialorder %v712, 0.0
        %vm745 = vcmp.ge.f32.partialorder %v713, 0.0
        %vm746 = vcmp.ge.f32.partialorder %v714, 0.0
        %vm747 = vcmp.ge.f32.partialorder %v715, 0.0
        %vm748 = vcmp.ge.f32.partialorder %v716, 0.0
        %vm749 = vcmp.ge.f32.partialorder %v717, 0.0
        %vm750 = vcmp.ge.f32.partialorder %v718, 0.0
        %vm751 = vcmp.ge.f32.partialorder %v719, 0.0
        %vm752 = vcmp.ge.f32.partialorder %v720, 0.0
        %vm753 = vcmp.ge.f32.partialorder %v721, 0.0
        %vm754 = vcmp.ge.f32.partialorder %v722, 0.0
        %vm755 = vcmp.ge.f32.partialorder %v723, 0.0
        %vm756 = vcmp.ge.f32.partialorder %v724, 0.0
        %vm757 = vcmp.ge.f32.partialorder %v725, 0.0
        %vm758 = vcmp.ge.f32.partialorder %v726, 0.0
        %vm759 = vcmp.ge.f32.partialorder %v727, 0.0
        %vm760 = vcmp.ge.f32.partialorder %v728, 0.0
        %vm761 = vcmp.ge.f32.partialorder %v729, 0.0
        %vm762 = vcmp.ge.f32.partialorder %v730, 0.0
        %vm763 = vcmp.ge.f32.partialorder %v731, 0.0
        %vm764 = vcmp.ge.f32.partialorder %v732, 0.0
        %vm765 = vcmp.ge.f32.partialorder %v733, 0.0
        %vm766 = vcmp.ge.f32.partialorder %v734, 0.0
        %vm767 = vcmp.ge.f32.partialorder %v735, 0.0
        %vm768 = vcmp.ge.f32.partialorder %v736, 0.0
        %vm769 = vcmp.ge.f32.partialorder %v737, 0.0
        %vm770 = vcmp.ge.f32.partialorder %v738, 0.0
        %vm771 = vcmp.ge.f32.partialorder %v739, 0.0
        %vm772 = vcmp.ge.f32.partialorder %v740, 0.0
        %vm773 = vcmp.ge.f32.partialorder %v741, 0.0
        %vm774 = vcmp.ge.f32.partialorder %v742, 0.0
        %v775 = vmul.f32 %v711, 0.2
        %v776 = vmul.f32 %v712, 0.2
        %v777 = vmul.f32 %v713, 0.2
        %v778 = vmul.f32 %v714, 0.2
        %v779 = vmul.f32 %v715, 0.2
        %v780 = vmul.f32 %v716, 0.2
        %v781 = vmul.f32 %v717, 0.2
        %v782 = vmul.f32 %v718, 0.2
        %v783 = vmul.f32 %v719, 0.2
        %v784 = vmul.f32 %v720, 0.2
        %v785 = vmul.f32 %v721, 0.2
        %v786 = vmul.f32 %v722, 0.2
        %v787 = vmul.f32 %v723, 0.2
        %v788 = vmul.f32 %v724, 0.2
        %v789 = vmul.f32 %v725, 0.2
        %v790 = vmul.f32 %v726, 0.2
        %v791 = vmul.f32 %v727, 0.2
        %v792 = vmul.f32 %v728, 0.2
        %v793 = vmul.f32 %v729, 0.2
        %v794 = vmul.f32 %v730, 0.2
        %v795 = vmul.f32 %v731, 0.2
        %v796 = vmul.f32 %v732, 0.2
        %v797 = vmul.f32 %v733, 0.2
        %v798 = vmul.f32 %v734, 0.2
        %v799 = vmul.f32 %v735, 0.2
        %v800 = vmul.f32 %v736, 0.2
        %v801 = vmul.f32 %v737, 0.2
        %v802 = vmul.f32 %v738, 0.2
        %v803 = vmul.f32 %v739, 0.2
        %v804 = vmul.f32 %v740, 0.2
        %v805 = vmul.f32 %v741, 0.2
        %v806 = vmul.f32 %v742, 0.2
        %v807 = vsel %vm743, %v711, %v775
        %v808 = vsel %vm744, %v712, %v776
        %v809 = vsel %vm745, %v713, %v777
        %v810 = vsel %vm746, %v714, %v778
        %v811 = vsel %vm747, %v715, %v779
        %v812 = vsel %vm748, %v716, %v780
        %v813 = vsel %vm749, %v717, %v781
        %v814 = vsel %vm750, %v718, %v782
        %v815 = vsel %vm751, %v719, %v783
        %v816 = vsel %vm752, %v720, %v784
        %v817 = vsel %vm753, %v721, %v785
        %v818 = vsel %vm754, %v722, %v786
        %v819 = vsel %vm755, %v723, %v787
        %v820 = vsel %vm756, %v724, %v788
        %v821 = vsel %vm757, %v725, %v789
        %v822 = vsel %vm758, %v726, %v790
        %v823 = vsel %vm759, %v727, %v791
        %v824 = vsel %vm760, %v728, %v792
        %v825 = vsel %vm761, %v729, %v793
        %v826 = vsel %vm762, %v730, %v794
        %v827 = vsel %vm763, %v731, %v795
        %v828 = vsel %vm764, %v732, %v796
        %v829 = vsel %vm765, %v733, %v797
        %v830 = vsel %vm766, %v734, %v798
        %v831 = vsel %vm767, %v735, %v799
        %v832 = vsel %vm768, %v736, %v800
        %v833 = vsel %vm769, %v737, %v801
        %v834 = vsel %vm770, %v738, %v802
        %v835 = vsel %vm771, %v739, %v803
        %v836 = vsel %vm772, %v740, %v804
        %v837 = vsel %vm773, %v741, %v805
        %v838 = vsel %vm774, %v742, %v806
        %v839 = vpack.c.bf16 %v807, %v807
        %v840 = vpack.c.bf16 %v808, %v808
        %v841 = vpack.c.bf16 %v809, %v809
        %v842 = vpack.c.bf16 %v810, %v810
        %v843 = vpack.c.bf16 %v811, %v811
        %v844 = vpack.c.bf16 %v812, %v812
        %v845 = vpack.c.bf16 %v813, %v813
        %v846 = vpack.c.bf16 %v814, %v814
        %v847 = vpack.c.bf16 %v815, %v815
        %v848 = vpack.c.bf16 %v816, %v816
        %v849 = vpack.c.bf16 %v817, %v817
        %v850 = vpack.c.bf16 %v818, %v818
        %v851 = vpack.c.bf16 %v819, %v819
        %v852 = vpack.c.bf16 %v820, %v820
        %v853 = vpack.c.bf16 %v821, %v821
        %v854 = vpack.c.bf16 %v822, %v822
        %v855 = vpack.c.bf16 %v823, %v823
        %v856 = vpack.c.bf16 %v824, %v824
        %v857 = vpack.c.bf16 %v825, %v825
        %v858 = vpack.c.bf16 %v826, %v826
        %v859 = vpack.c.bf16 %v827, %v827
        %v860 = vpack.c.bf16 %v828, %v828
        %v861 = vpack.c.bf16 %v829, %v829
        %v862 = vpack.c.bf16 %v830, %v830
        %v863 = vpack.c.bf16 %v831, %v831
        %v864 = vpack.c.bf16 %v832, %v832
        %v865 = vpack.c.bf16 %v833, %v833
        %v866 = vpack.c.bf16 %v834, %v834
        %v867 = vpack.c.bf16 %v835, %v835
        %v868 = vpack.c.bf16 %v836, %v836
        %v869 = vpack.c.bf16 %v837, %v837
        %v870 = vpack.c.bf16 %v838, %v838
        %871 = vst [vmem:[%s257] sm:$0xf] %v839
        %872 = vst [vmem:[%s257 + $0x4] sm:$0xf] %v840
        %873 = vst [vmem:[%s257 + $0x8] sm:$0xf] %v841
        %874 = vst [vmem:[%s257 + $0xc] sm:$0xf] %v842
        %875 = vst [vmem:[%s257 + $0x10] sm:$0xf] %v843
        %876 = vst [vmem:[%s257 + $0x14] sm:$0xf] %v844
        %877 = vst [vmem:[%s257 + $0x18] sm:$0xf] %v845
        %878 = vst [vmem:[%s257 + $0x1c] sm:$0xf] %v846
        %879 = vst [vmem:[%s257 + $0x20] sm:$0xf] %v847
        %880 = vst [vmem:[%s257 + $0x24] sm:$0xf] %v848
        %881 = vst [vmem:[%s257 + $0x28] sm:$0xf] %v849
        %882 = vst [vmem:[%s257 + $0x2c] sm:$0xf] %v850
        %883 = vst [vmem:[%s257 + $0x30] sm:$0xf] %v851
        %884 = vst [vmem:[%s257 + $0x34] sm:$0xf] %v852
        %885 = vst [vmem:[%s257 + $0x38] sm:$0xf] %v853
        %886 = vst [vmem:[%s257 + $0x3c] sm:$0xf] %v854
        %887 = vst [vmem:[%s257 + $0x40] sm:$0xf] %v855
        %888 = vst [vmem:[%s257 + $0x44] sm:$0xf] %v856
        %889 = vst [vmem:[%s257 + $0x48] sm:$0xf] %v857
        %890 = vst [vmem:[%s257 + $0x4c] sm:$0xf] %v858
        %891 = vst [vmem:[%s257 + $0x50] sm:$0xf] %v859
        %892 = vst [vmem:[%s257 + $0x54] sm:$0xf] %v860
        %893 = vst [vmem:[%s257 + $0x58] sm:$0xf] %v861
        %894 = vst [vmem:[%s257 + $0x5c] sm:$0xf] %v862
        %895 = vst [vmem:[%s257 + $0x60] sm:$0xf] %v863
        %896 = vst [vmem:[%s257 + $0x64] sm:$0xf] %v864
        %897 = vst [vmem:[%s257 + $0x68] sm:$0xf] %v865
        %898 = vst [vmem:[%s257 + $0x6c] sm:$0xf] %v866
        %899 = vst [vmem:[%s257 + $0x70] sm:$0xf] %v867
        %900 = vst [vmem:[%s257 + $0x74] sm:$0xf] %v868
        %901 = vst [vmem:[%s257 + $0x78] sm:$0xf] %v869
        %902 = vst [vmem:[%s257 + $0x7c] sm:$0xf] %v870
      $region40: #{discriminator_forward.6} parent=31 // pred_fallthru
        _
      %s903 = smul.u32 32, %s19
      %p904 = scmp.lt.s32.totalorder %s903, 63
      %s905 = scalar_select %p904, %s903, 63
      %p906 = scmp.lt.s32.totalorder %s20, 0
      %s907 = scalar_select %p906, %s20, 0
      %s908 = sadd.s32 %s907, %s905
      %s909 = smul.addr %s908, 4
      %s910 = scalar_lea.vmem %s3, %s909
      // Predicated region
      $region41: #{discriminator_forward.6} parent=31 // pred_check
        %p911 = pneg %p135
      $region42: #{discriminator_forward.6} parent=31 // pred_check_branch
        %913 = sbr.rel (%p911) target = $region44
      $region43: #{discriminator_forward.6} parent=31 // pred_region
        %s914 = smul.u32 32, %s19
      $region44: #{discriminator_forward.6} parent=31 // pred_fallthru
        _
    $region32: #{discriminator_forward.6} parent=5 // pred_fallthru
      _
    %p915 = scmp.le.s32.totalorder 2, %s9
    // Predicated region
    $region45: #{discriminator_forward.6} parent=5 // pred_check
      %p916 = pneg %p915
    $region46: #{discriminator_forward.6} parent=5 // pred_check_branch
      %918 = sbr.rel (%p916) target = $region48
    $region47: #{discriminator_forward.6} parent=5 // pred_region
      %s919 = ssub.s32 %s9, 2
      // Predicated region
      $region49: #{discriminator_forward.6} parent=47 // pred_check
        %p920 = pneg %p141
      $region50: #{discriminator_forward.6} parent=47 // pred_check_branch
        %922 = sbr.rel (%p920) target = $region52
      $region51: #{discriminator_forward.6} parent=47 // pred_region
        %s923 = smul.u32 32, %s22
        %p924 = scmp.lt.s32.totalorder %s923, 63
        %s925 = scalar_select %p924, %s923, 63
        %p926 = scmp.lt.s32.totalorder %s23, 0
        %s927 = scalar_select %p926, %s23, 0
        %s928 = sadd.s32 %s927, %s925
        %s929 = smul.addr %s928, 4
        %s930 = scalar_lea.vmem %s3, %s929
      $region52: #{discriminator_forward.6} parent=47 // pred_fallthru
        _
    $region48: #{discriminator_forward.6} parent=5 // pred_fallthru
      _
  $region6: #{discriminator_forward.6} parent=0 // loop_footer
    %s13 = sadd.s32 1, %s9
  $region7: #{discriminator_forward.6} parent=0 // loop_footer_branch
    %8 = sbr.rel target = $region3
  $region8: #{discriminator_forward.6} parent=0 // loop_exit
    _

// kernel: discriminator_forward.7
$region0: #{discriminator_forward.7}
  #allocation0 [shape = 'u32[]', space=smem, size = 0x4, offset = 0x4, fixed_abs, tag = 'smem constant byte address 0x4 - core index']
  #allocation1 [shape = 'u32[72,128]{1,0:T(1,128)}', space=vmem, size = 0x9000, scoped, tag = 'internal scratch']
  #allocation2 [shape = 'f32[128,128]{1,0:T(8,128)}', space=vmem, size = 0x10000, scoped, tag = 'scratch operand']
  %s0 = inlined_call_operand.vmem [shape: bf16[128,1024], index: 0, kind: input, shape index: {}]
  %s1 = inlined_call_operand.vmem [shape: bf16[1024,128], index: 1, kind: input, shape index: {}]
  %s2 = inlined_call_operand.vmem [shape: f32[1,128], index: 2, kind: input, shape index: {}]
  %s3 = inlined_call_operand.vmem [shape: bf16[128,128], index: 3, kind: output, shape index: {}]
  %s4 = sld [smem:[#allocation0]]
  $region76: #{discriminator_forward.7} parent=0
    _
  %s6 = ssub.s32 1, %s4
  %s7 = scalar_select 0, %s6, %s4
  $region1: #{discriminator_forward.7} parent=0
    #allocation3 [shape = 'u8[262144]{0}', space=vmem, size = 0x40000, scoped, tag = 'input window, operand 0']
    loop: start=0, step=1, limit=4
    $region2: #{discriminator_forward.7} parent=1 // loop_pre_header
      _
    $region3: #{discriminator_forward.7} parent=1 // loop_header
      %s9 = sphi 0, %s13
      %p10 = scmp.ge.s32.totalorder %s9, 4
      %s16 = sphi 0, %s35
      %s17 = sphi 0, %s31
      %s18 = sphi 0, %s27
      %s19 = sphi 0, %s16
      %s20 = sphi 0, %s17
      %s21 = sphi 0, %s18
      %s22 = sphi 0, %s19
      %s23 = sphi 0, %s20
      %s24 = sphi 0, %s21
      %s40 = sphi 0, %s42
      %s43 = sphi 0, %s40
      %s44 = sphi 0, %s43
      %s60 = sphi 0, %s44
      %s68 = sphi 0, %s70
      %s71 = sphi 0, %s68
      %s72 = sphi 0, %s71
      %s88 = sphi 0, %s72
      %s94 = sphi 0, %s96
      %s97 = sphi 0, %s94
      %s98 = sphi 0, %s97
      %s114 = sphi 0, %s98
      %s122 = sphi 0, %s124
      %s125 = sphi 0, %s122
      %s126 = sphi 0, %s125
      %s142 = sphi 0, %s126
    $region4: #{discriminator_forward.7} parent=1 // loop_header_branch
      %12 = sbr.rel (%p10) target = $region8
    $region5: #{discriminator_forward.7} parent=1 // loop_body
      %s14 = ssub.s32 %s9, 1
      %s15 = ssub.s32 %s9, 2
      %s25 = sadd.s32 1, %s18
      %p26 = scmp.ge.s32.totalorder %s25, 2
      %s27 = scalar_select %p26, 0, %s25
      %s28 = sadd.s32 1, %s17
      %s29 = scalar_select %p26, %s28, %s17
      %p30 = scmp.ge.s32.totalorder %s29, 1
      %s31 = scalar_select %p30, 0, %s29
      %s32 = sadd.s32 1, %s16
      %s33 = scalar_select %p30, %s32, %s16
      %p34 = scmp.ge.s32.totalorder %s33, 1
      %s35 = scalar_select %p34, 0, %s33
      %s36 = ssub.s32 %s16, %s35
      %s37 = ssub.s32 %s18, %s27
      %s38 = sor.u32 %s36, %s37
      %p39 = scmp.eq.s32.totalorder %s38, 0
      %s41 = sadd.s32 %s40, 1
      %s42 = scalar_select %p39, %s40, %s41
      %p45 = pneg %p39
      %p46 = scmp.eq.s32.totalorder %s9, 1
      %p47 = por %p45, %p46
      %p48 = scmp.ne.s32.totalorder %s40, %s43
      %p49 = scmp.eq.s32.totalorder %s9, 0
      %p50 = por %p48, %p49
      %p51 = scmp.ne.s32.totalorder %s40, %s43
      %p52 = scmp.eq.s32.totalorder %s14, 1
      %p53 = por %p51, %p52
      %p54 = scmp.ne.s32.totalorder %s43, %s44
      %p55 = scmp.eq.s32.totalorder %s14, 0
      %p56 = por %p54, %p55
      %p57 = scmp.ne.s32.totalorder %s43, %s44
      %p58 = scmp.eq.s32.totalorder %s15, 1
      %p59 = por %p57, %p58
      %p61 = scmp.ne.s32.totalorder %s44, %s60
      %p62 = scmp.eq.s32.totalorder %s15, 0
      %p63 = por %p61, %p62
      %s64 = ssub.s32 %s18, %s27
      %s65 = ssub.s32 %s17, %s31
      %s66 = sor.u32 %s64, %s65
      %p67 = scmp.eq.s32.totalorder %s66, 0
      %s69 = sadd.s32 %s68, 1
      %s70 = scalar_select %p67, %s68, %s69
      %p73 = pneg %p67
      %p74 = scmp.eq.s32.totalorder %s9, 1
      %p75 = por %p73, %p74
      %p76 = scmp.ne.s32.totalorder %s68, %s71
      %p77 = scmp.eq.s32.totalorder %s9, 0
      %p78 = por %p76, %p77
      %p79 = scmp.ne.s32.totalorder %s68, %s71
      %p80 = scmp.eq.s32.totalorder %s14, 1
      %p81 = por %p79, %p80
      %p82 = scmp.ne.s32.totalorder %s71, %s72
      %p83 = scmp.eq.s32.totalorder %s14, 0
      %p84 = por %p82, %p83
      %p85 = scmp.ne.s32.totalorder %s71, %s72
      %p86 = scmp.eq.s32.totalorder %s15, 1
      %p87 = por %p85, %p86
      %p89 = scmp.ne.s32.totalorder %s72, %s88
      %p90 = scmp.eq.s32.totalorder %s15, 0
      %p91 = por %p89, %p90
      %s92 = ssub.s32 %s17, %s31
      %p93 = scmp.eq.s32.totalorder %s92, 0
      %s95 = sadd.s32 %s94, 1
      %s96 = scalar_select %p93, %s94, %s95
      %p99 = pneg %p93
      %p100 = scmp.eq.s32.totalorder %s9, 1
      %p101 = por %p99, %p100
      %p102 = scmp.ne.s32.totalorder %s94, %s97
      %p103 = scmp.eq.s32.totalorder %s9, 0
      %p104 = por %p102, %p103
      %p105 = scmp.ne.s32.totalorder %s94, %s97
      %p106 = scmp.eq.s32.totalorder %s14, 1
      %p107 = por %p105, %p106
      %p108 = scmp.ne.s32.totalorder %s97, %s98
      %p109 = scmp.eq.s32.totalorder %s14, 0
      %p110 = por %p108, %p109
      %p111 = scmp.ne.s32.totalorder %s97, %s98
      %p112 = scmp.eq.s32.totalorder %s15, 1
      %p113 = por %p111, %p112
      %p115 = scmp.ne.s32.totalorder %s98, %s114
      %p116 = scmp.eq.s32.totalorder %s15, 0
      %p117 = por %p115, %p116
      %s118 = ssub.s32 %s16, %s35
      %s119 = ssub.s32 %s17, %s31
      %s120 = sor.u32 %s118, %s119
      %p121 = scmp.eq.s32.totalorder %s120, 0
      %s123 = sadd.s32 %s122, 1
      %s124 = scalar_select %p121, %s122, %s123
      %p127 = pneg %p121
      %p128 = scmp.eq.s32.totalorder %s9, 1
      %p129 = por %p127, %p128
      %p130 = scmp.ne.s32.totalorder %s122, %s125
      %p131 = scmp.eq.s32.totalorder %s9, 0
      %p132 = por %p130, %p131
      %p133 = scmp.ne.s32.totalorder %s122, %s125
      %p134 = scmp.eq.s32.totalorder %s14, 1
      %p135 = por %p133, %p134
      %p136 = scmp.ne.s32.totalorder %s125, %s126
      %p137 = scmp.eq.s32.totalorder %s14, 0
      %p138 = por %p136, %p137
      %p139 = scmp.ne.s32.totalorder %s125, %s126
      %p140 = scmp.eq.s32.totalorder %s15, 1
      %p141 = por %p139, %p140
      %p143 = scmp.ne.s32.totalorder %s126, %s142
      %p144 = scmp.eq.s32.totalorder %s15, 0
      %p145 = por %p143, %p144
      %p146 = scmp.le.s32.totalorder 1, %s9
      %p147 = scmp.lt.s32.totalorder %s9, 3
      %p148 = pnand %p146, %p147
      %p149 = pneg %p148
      // Predicated region
      $region9: #{discriminator_forward.7} parent=5 // pred_check
        _
      $region10: #{discriminator_forward.7} parent=5 // pred_check_branch
        %151 = sbr.rel (%p148) target = $region12
      $region11: #{discriminator_forward.7} parent=5 // pred_region
        %s152 = ssub.s32 %s9, 1
        // Predicated region
        $region13: #{discriminator_forward.7} parent=11 // pred_check
          %p153 = pneg %p110
        $region14: #{discriminator_forward.7} parent=11 // pred_check_branch
          %155 = sbr.rel (%p153) target = $region16
        $region15: #{discriminator_forward.7} parent=11 // pred_region
          %p156 = scmp.lt.s32.totalorder %s20, 0
          %s157 = scalar_select %p156, %s20, 0
          %s158 = scalar_lea.vmem %s2, %s157
        $region16: #{discriminator_forward.7} parent=11 // pred_fallthru
          _
      $region12: #{discriminator_forward.7} parent=5 // pred_fallthru
        _
      %p159 = scmp.lt.s32.totalorder %s9, 2
      // Predicated region
      $region17: #{discriminator_forward.7} parent=5 // pred_check
        %p160 = pneg %p159
      $region18: #{discriminator_forward.7} parent=5 // pred_check_branch
        %162 = sbr.rel (%p160) target = $region20
      $region19: #{discriminator_forward.7} parent=5 // pred_region
        // Predicated region
        $region21: #{discriminator_forward.7} parent=19 // pred_check
          %p163 = pneg %p50
        $region22: #{discriminator_forward.7} parent=19 // pred_check_branch
          %165 = sbr.rel (%p163) target = $region24
        $region23: #{discriminator_forward.7} parent=19 // pred_region
          %s166 = sand.u32 %s40, 1
          %s167 = sand.u32 %s40, 1
          %s168 = smul.addr %s167, 256
          %s169 = scalar_lea.vmem [#allocation3], %s168
          %s170 = smul.u32 16, %s16
          %s171 = smul.u32 4, %s18
          %s172 = smul.addr %s170, 8
          %s173 = sadd.s32 %s171, %s172
          %s174 = smul.addr %s173, 4
          %s175 = scalar_lea.vmem %s0, %s174
          // Predicated region
          $region25: #{discriminator_forward.7} parent=23 // pred_check
            _
          $region26: #{discriminator_forward.7} parent=23 // pred_check_branch
            %177 = sbr.rel (0) target = $region28
          $region27: #{discriminator_forward.7} parent=23 // pred_region
            // Predicated region
            $region29: #{discriminator_forward.7} parent=27 // pred_check
              _
            $region30: #{discriminator_forward.7} parent=27 // pred_check_branch
              %179 = sbr.rel (0) target = $region32
            $region31: #{discriminator_forward.7} parent=27 // pred_region
              loop: start=0, step=1, limit=1
              $region33: #{discriminator_forward.7} parent=31 // loop_pre_header
                _
              $region34: #{discriminator_forward.7} parent=31 // loop_header
                %s181 = sphi 0, %s185
                %p182 = scmp.ge.s32.totalorder %s181, 1
                %s186 = sphi %s175, %s175
                %s187 = sphi %s169, %s169
              $region35: #{discriminator_forward.7} parent=31 // loop_header_branch
                %184 = sbr.rel (%p182) target = $region39
              $region36: #{discriminator_forward.7} parent=31 // loop_body
                %v188 = vld [vmem:[%s186] sm:$0xff]
                %189 = vst [vmem:[%s187] sm:$0xff] %v188
                %v190 = vld [vmem:[%s186 + $0x8] sm:$0xff]
                %191 = vst [vmem:[%s187 + $0x8] sm:$0xff] %v190
                %v192 = vld [vmem:[%s186 + $0x20] sm:$0xff]
                %193 = vst [vmem:[%s187 + $0x10] sm:$0xff] %v192
                %v194 = vld [vmem:[%s186 + $0x28] sm:$0xff]
                %195 = vst [vmem:[%s187 + $0x18] sm:$0xff] %v194
                %v196 = vld [vmem:[%s186 + $0x40] sm:$0xff]
                %197 = vst [vmem:[%s187 + $0x20] sm:$0xff] %v196
                %v198 = vld [vmem:[%s186 + $0x48] sm:$0xff]
                %199 = vst [vmem:[%s187 + $0x28] sm:$0xff] %v198
                %v200 = vld [vmem:[%s186 + $0x60] sm:$0xff]
                %201 = vst [vmem:[%s187 + $0x30] sm:$0xff] %v200
                %v202 = vld [vmem:[%s186 + $0x68] sm:$0xff]
                %203 = vst [vmem:[%s187 + $0x38] sm:$0xff] %v202
                %v204 = vld [vmem:[%s186 + $0x80] sm:$0xff]
                %205 = vst [vmem:[%s187 + $0x40] sm:$0xff] %v204
                %v206 = vld [vmem:[%s186 + $0x88] sm:$0xff]
                %207 = vst [vmem:[%s187 + $0x48] sm:$0xff] %v206
                %v208 = vld [vmem:[%s186 + $0xa0] sm:$0xff]
                %209 = vst [vmem:[%s187 + $0x50] sm:$0xff] %v208
                %v210 = vld [vmem:[%s186 + $0xa8] sm:$0xff]
                %211 = vst [vmem:[%s187 + $0x58] sm:$0xff] %v210
                %v212 = vld [vmem:[%s186 + $0xc0] sm:$0xff]
                %213 = vst [vmem:[%s187 + $0x60] sm:$0xff] %v212
                %v214 = vld [vmem:[%s186 + $0xc8] sm:$0xff]
                %215 = vst [vmem:[%s187 + $0x68] sm:$0xff] %v214
                %v216 = vld [vmem:[%s186 + $0xe0] sm:$0xff]
                %217 = vst [vmem:[%s187 + $0x70] sm:$0xff] %v216
                %v218 = vld [vmem:[%s186 + $0xe8] sm:$0xff]
                %219 = vst [vmem:[%s187 + $0x78] sm:$0xff] %v218
                %v220 = vld [vmem:[%s186 + $0x100] sm:$0xff]
                %221 = vst [vmem:[%s187 + $0x80] sm:$0xff] %v220
                %v222 = vld [vmem:[%s186 + $0x108] sm:$0xff]
                %223 = vst [vmem:[%s187 + $0x88] sm:$0xff] %v222
                %v224 = vld [vmem:[%s186 + $0x120] sm:$0xff]
                %225 = vst [vmem:[%s187 + $0x90] sm:$0xff] %v224
                %v226 = vld [vmem:[%s186 + $0x128] sm:$0xff]
                %227 = vst [vmem:[%s187 + $0x98] sm:$0xff] %v226
                %v228 = vld [vmem:[%s186 + $0x140] sm:$0xff]
                %229 = vst [vmem:[%s187 + $0xa0] sm:$0xff] %v228
                %v230 = vld [vmem:[%s186 + $0x148] sm:$0xff]
                %231 = vst [vmem:[%s187 + $0xa8] sm:$0xff] %v230
                %v232 = vld [vmem:[%s186 + $0x160] sm:$0xff]
                %233 = vst [vmem:[%s187 + $0xb0] sm:$0xff] %v232
                %v234 = vld [vmem:[%s186 + $0x168] sm:$0xff]
                %235 = vst [vmem:[%s187 + $0xb8] sm:$0xff] %v234
                %v236 = vld [vmem:[%s186 + $0x180] sm:$0xff]
                %237 = vst [vmem:[%s187 + $0xc0] sm:$0xff] %v236
                %v238 = vld [vmem:[%s186 + $0x188] sm:$0xff]
                %239 = vst [vmem:[%s187 + $0xc8] sm:$0xff] %v238
                %v240 = vld [vmem:[%s186 + $0x1a0] sm:$0xff]
                %241 = vst [vmem:[%s187 + $0xd0] sm:$0xff] %v240
                %v242 = vld [vmem:[%s186 + $0x1a8] sm:$0xff]
                %243 = vst [vmem:[%s187 + $0xd8] sm:$0xff] %v242
                %v244 = vld [vmem:[%s186 + $0x1c0] sm:$0xff]
                %245 = vst [vmem:[%s187 + $0xe0] sm:$0xff] %v244
                %v246 = vld [vmem:[%s186 + $0x1c8] sm:$0xff]
                %247 = vst [vmem:[%s187 + $0xe8] sm:$0xff] %v246
                %v248 = vld [vmem:[%s186 + $0x1e0] sm:$0xff]
                %249 = vst [vmem:[%s187 + $0xf0] sm:$0xff] %v248
                %v250 = vld [vmem:[%s186 + $0x1e8] sm:$0xff]
                %251 = vst [vmem:[%s187 + $0xf8] sm:$0xff] %v250
              $region37: #{discriminator_forward.7} parent=31 // loop_footer
                %s185 = sadd.s32 1, %s181
              $region38: #{discriminator_forward.7} parent=31 // loop_footer_branch
                %180 = sbr.rel target = $region34
              $region39: #{discriminator_forward.7} parent=31 // loop_exit
                _
            $region32: #{discriminator_forward.7} parent=27 // pred_fallthru
              _
            // Predicated region
            $region40: #{discriminator_forward.7} parent=27 // pred_check
              _
            $region41: #{discriminator_forward.7} parent=27 // pred_check_branch
              %253 = sbr.rel target = $region43
            $region42: #{discriminator_forward.7} parent=27 // pred_region
              _
            $region43: #{discriminator_forward.7} parent=27 // pred_fallthru
              _
          $region28: #{discriminator_forward.7} parent=23 // pred_fallthru
            _
          %254 = vnop
        $region24: #{discriminator_forward.7} parent=19 // pred_fallthru
          _
        // Predicated region
        $region44: #{discriminator_forward.7} parent=19 // pred_check
          %p255 = pneg %p78
        $region45: #{discriminator_forward.7} parent=19 // pred_check_branch
          %257 = sbr.rel (%p255) target = $region47
        $region46: #{discriminator_forward.7} parent=19 // pred_region
          %s258 = smul.u32 64, %s18
          %p259 = scmp.lt.s32.totalorder %s258, 127
          %s260 = scalar_select %p259, %s258, 127
          %p261 = scmp.lt.s32.totalorder %s17, 0
          %s262 = scalar_select %p261, %s17, 0
          %s263 = sadd.s32 %s262, %s260
          %s264 = smul.addr %s263, 4
          %s265 = scalar_lea.vmem %s1, %s264
          %s266 = smul.u32 64, %s18
        $region47: #{discriminator_forward.7} parent=19 // pred_fallthru
          _
      $region20: #{discriminator_forward.7} parent=5 // pred_fallthru
        _
      %p267 = scmp.le.s32.totalorder 1, %s9
      %p268 = scmp.lt.s32.totalorder %s9, 3
      %p269 = pnand %p267, %p268
      %p270 = pneg %p269
      // Predicated region
      $region48: #{discriminator_forward.7} parent=5 // pred_check
        _
      $region49: #{discriminator_forward.7} parent=5 // pred_check_branch
        %272 = sbr.rel (%p269) target = $region51
      $region50: #{discriminator_forward.7} parent=5 // pred_region
        %s273 = ssub.s32 %s9, 1
        %s274 = sand.u32 %s43, 1
        %s275 = sand.u32 %s43, 1
        %s276 = smul.addr %s275, 256
        %s277 = scalar_lea.vmem [#allocation3], %s276
        // Predicated region
        $region52: #{discriminator_forward.7} parent=50 // pred_check
          %p278 = pneg %p56
        $region53: #{discriminator_forward.7} parent=50 // pred_check_branch
          %280 = sbr.rel (%p278) target = $region55
        $region54: #{discriminator_forward.7} parent=50 // pred_region
          _
        $region55: #{discriminator_forward.7} parent=50 // pred_fallthru
          _
        %s281 = sand.u32 %s43, 1
        %s282 = sand.u32 %s43, 1
        %s283 = smul.addr %s282, 256
        %s284 = scalar_lea.vmem [#allocation3], %s283
        %p285 = pneg %p56
        %p286 = pneg %p53
        %s287 = smul.u32 64, %s21
        %p288 = scmp.lt.s32.totalorder %s287, 127
        %s289 = scalar_select %p288, %s287, 127
        %p290 = scmp.lt.s32.totalorder %s20, 0
        %s291 = scalar_select %p290, %s20, 0
        %s292 = sadd.s32 %s291, %s289
        %s293 = smul.addr %s292, 4
        %s294 = scalar_lea.vmem %s1, %s293
        %p295 = pneg %p84
        %p296 = pneg %p81
        %p297 = scmp.lt.s32.totalorder %s20, 0
        %s298 = scalar_select %p297, %s20, 0
        %s299 = scalar_lea.vmem %s2, %s298
        %p300 = pneg %p110
        %p301 = pneg %p107
        %p302 = pneg %p138
        %p303 = pneg %p135
        %s304 = smul.u32 16, %s19
        %p305 = scmp.lt.s32.totalorder %s304, 15
        %s306 = scalar_select %p305, %s304, 15
        %p307 = scmp.lt.s32.totalorder %s20, 0
        %s308 = scalar_select %p307, %s20, 0
        %s309 = sadd.s32 %s308, %s306
        %s310 = smul.addr %s309, 4
        %s311 = scalar_lea.vmem %s3, %s310
        %s312 = smul.u32 16, %s19
        %s313 = smul.u32 4, %s21
        %s314 = smul.u32 64, %s21
        %p315 = scmp.lt.s32.totalorder %s314, 127
        %s316 = scalar_select %p315, %s314, 127
        %p317 = scmp.lt.s32.totalorder %s20, 0
        %s318 = scalar_select %p317, %s20, 0
        %s319 = sadd.s32 %s318, %s316
        %s320 = smul.addr %s319, 4
        %s321 = scalar_lea.vmem %s1, %s320
        %s322 = smul.u32 64, %s21
        %p323 = scmp.lt.s32.totalorder %s20, 0
        %s324 = scalar_select %p323, %s20, 0
        %s325 = scalar_lea.vmem %s2, %s324
        %s326 = smul.u32 16, %s19
        %p327 = scmp.lt.s32.totalorder %s326, 15
        %s328 = scalar_select %p327, %s326, 15
        %p329 = scmp.lt.s32.totalorder %s20, 0
        %s330 = scalar_select %p329, %s20, 0
        %s331 = sadd.s32 %s330, %s328
        %s332 = smul.addr %s331, 4
        %s333 = scalar_lea.vmem %s3, %s332
        %s334 = smul.u32 16, %s19
        %p335 = scmp.eq.s32.totalorder %s21, 0
        // Predicated region
        $region56: #{discriminator_forward.7} parent=50 // pred_check
          %p336 = pneg %p335
        $region57: #{discriminator_forward.7} parent=50 // pred_check_branch
          %338 = sbr.rel (%p336) target = $region59
        $region58: #{discriminator_forward.7} parent=50 // pred_region
          %339 = vst [vmem:[#allocation2] sm:$0xff] 0.0
          %340 = vst [vmem:[#allocation2 + $0x8] sm:$0xff] 0.0
          %341 = vst [vmem:[#allocation2 + $0x10] sm:$0xff] 0.0
          %342 = vst [vmem:[#allocation2 + $0x18] sm:$0xff] 0.0
          %343 = vst [vmem:[#allocation2 + $0x20] sm:$0xff] 0.0
          %344 = vst [vmem:[#allocation2 + $0x28] sm:$0xff] 0.0
          %345 = vst [vmem:[#allocation2 + $0x30] sm:$0xff] 0.0
          %346 = vst [vmem:[#allocation2 + $0x38] sm:$0xff] 0.0
          %347 = vst [vmem:[#allocation2 + $0x40] sm:$0xff] 0.0
          %348 = vst [vmem:[#allocation2 + $0x48] sm:$0xff] 0.0
          %349 = vst [vmem:[#allocation2 + $0x50] sm:$0xff] 0.0
          %350 = vst [vmem:[#allocation2 + $0x58] sm:$0xff] 0.0
          %351 = vst [vmem:[#allocation2 + $0x60] sm:$0xff] 0.0
          %352 = vst [vmem:[#allocation2 + $0x68] sm:$0xff] 0.0
          %353 = vst [vmem:[#allocation2 + $0x70] sm:$0xff] 0.0
          %354 = vst [vmem:[#allocation2 + $0x78] sm:$0xff] 0.0
        $region59: #{discriminator_forward.7} parent=50 // pred_fallthru
          _
        %v355 = vld [vmem:[#allocation2] sm:$0xff]
        %v356 = vld [vmem:[#allocation2 + $0x8] sm:$0xff]
        %v357 = vld [vmem:[#allocation2 + $0x10] sm:$0xff]
        %v358 = vld [vmem:[#allocation2 + $0x18] sm:$0xff]
        %v359 = vld [vmem:[#allocation2 + $0x20] sm:$0xff]
        %v360 = vld [vmem:[#allocation2 + $0x28] sm:$0xff]
        %v361 = vld [vmem:[#allocation2 + $0x30] sm:$0xff]
        %v362 = vld [vmem:[#allocation2 + $0x38] sm:$0xff]
        %v363 = vld [vmem:[#allocation2 + $0x40] sm:$0xff]
        %v364 = vld [vmem:[#allocation2 + $0x48] sm:$0xff]
        %v365 = vld [vmem:[#allocation2 + $0x50] sm:$0xff]
        %v366 = vld [vmem:[#allocation2 + $0x58] sm:$0xff]
        %v367 = vld [vmem:[#allocation2 + $0x60] sm:$0xff]
        %v368 = vld [vmem:[#allocation2 + $0x68] sm:$0xff]
        %v369 = vld [vmem:[#allocation2 + $0x70] sm:$0xff]
        %v370 = vld [vmem:[#allocation2 + $0x78] sm:$0xff]
        %v371 = vld [vmem:[%s277] sm:$0xff]
        %v372 = vld [vmem:[%s277 + $0x8] sm:$0xff]
        %v373 = vld [vmem:[%s277 + $0x10] sm:$0xff]
        %v374 = vld [vmem:[%s277 + $0x18] sm:$0xff]
        %v375 = vld [vmem:[%s277 + $0x20] sm:$0xff]
        %v376 = vld [vmem:[%s277 + $0x28] sm:$0xff]
        %v377 = vld [vmem:[%s277 + $0x30] sm:$0xff]
        %v378 = vld [vmem:[%s277 + $0x38] sm:$0xff]
        %v379 = vld [vmem:[%s277 + $0x40] sm:$0xff]
        %v380 = vld [vmem:[%s277 + $0x48] sm:$0xff]
        %v381 = vld [vmem:[%s277 + $0x50] sm:$0xff]
        %v382 = vld [vmem:[%s277 + $0x58] sm:$0xff]
        %v383 = vld [vmem:[%s277 + $0x60] sm:$0xff]
        %v384 = vld [vmem:[%s277 + $0x68] sm:$0xff]
        %v385 = vld [vmem:[%s277 + $0x70] sm:$0xff]
        %v386 = vld [vmem:[%s277 + $0x78] sm:$0xff]
        %v387 = vld [vmem:[%s277 + $0x80] sm:$0xff]
        %v388 = vld [vmem:[%s277 + $0x88] sm:$0xff]
        %v389 = vld [vmem:[%s277 + $0x90] sm:$0xff]
        %v390 = vld [vmem:[%s277 + $0x98] sm:$0xff]
        %v391 = vld [vmem:[%s277 + $0xa0] sm:$0xff]
        %v392 = vld [vmem:[%s277 + $0xa8] sm:$0xff]
        %v393 = vld [vmem:[%s277 + $0xb0] sm:$0xff]
        %v394 = vld [vmem:[%s277 + $0xb8] sm:$0xff]
        %v395 = vld [vmem:[%s277 + $0xc0] sm:$0xff]
        %v396 = vld [vmem:[%s277 + $0xc8] sm:$0xff]
        %v397 = vld [vmem:[%s277 + $0xd0] sm:$0xff]
        %v398 = vld [vmem:[%s277 + $0xd8] sm:$0xff]
        %v399 = vld [vmem:[%s277 + $0xe0] sm:$0xff]
        %v400 = vld [vmem:[%s277 + $0xe8] sm:$0xff]
        %v401 = vld [vmem:[%s277 + $0xf0] sm:$0xff]
        %v402 = vld [vmem:[%s277 + $0xf8] sm:$0xff]
        %v403 = vld [vmem:[%s321] sm:$0xf]
        %v404 = vld [vmem:[%s321 + $0x4] sm:$0xf]
        %v405 = vld [vmem:[%s321 + $0x8] sm:$0xf]
        %v406 = vld [vmem:[%s321 + $0xc] sm:$0xf]
        %v407 = vld [vmem:[%s321 + $0x10] sm:$0xf]
        %v408 = vld [vmem:[%s321 + $0x14] sm:$0xf]
        %v409 = vld [vmem:[%s321 + $0x18] sm:$0xf]
        %v410 = vld [vmem:[%s321 + $0x1c] sm:$0xf]
        %v411 = vld [vmem:[%s321 + $0x20] sm:$0xf]
        %v412 = vld [vmem:[%s321 + $0x24] sm:$0xf]
        %v413 = vld [vmem:[%s321 + $0x28] sm:$0xf]
        %v414 = vld [vmem:[%s321 + $0x2c] sm:$0xf]
        %v415 = vld [vmem:[%s321 + $0x30] sm:$0xf]
        %v416 = vld [vmem:[%s321 + $0x34] sm:$0xf]
        %v417 = vld [vmem:[%s321 + $0x38] sm:$0xf]
        %v418 = vld [vmem:[%s321 + $0x3c] sm:$0xf]
        %v419 = vld [vmem:[%s321 + $0x40] sm:$0xf]
        %v420 = vld [vmem:[%s321 + $0x44] sm:$0xf]
        %v421 = vld [vmem:[%s321 + $0x48] sm:$0xf]
        %v422 = vld [vmem:[%s321 + $0x4c] sm:$0xf]
        %v423 = vld [vmem:[%s321 + $0x50] sm:$0xf]
        %v424 = vld [vmem:[%s321 + $0x54] sm:$0xf]
        %v425 = vld [vmem:[%s321 + $0x58] sm:$0xf]
        %v426 = vld [vmem:[%s321 + $0x5c] sm:$0xf]
        %v427 = vld [vmem:[%s321 + $0x60] sm:$0xf]
        %v428 = vld [vmem:[%s321 + $0x64] sm:$0xf]
        %v429 = vld [vmem:[%s321 + $0x68] sm:$0xf]
        %v430 = vld [vmem:[%s321 + $0x6c] sm:$0xf]
        %v431 = vld [vmem:[%s321 + $0x70] sm:$0xf]
        %v432 = vld [vmem:[%s321 + $0x74] sm:$0xf]
        %v433 = vld [vmem:[%s321 + $0x78] sm:$0xf]
        %v434 = vld [vmem:[%s321 + $0x7c] sm:$0xf]
        %v435 = vld [vmem:[%s321 + $0x80] sm:$0xf]
        %v436 = vld [vmem:[%s321 + $0x84] sm:$0xf]
        %v437 = vld [vmem:[%s321 + $0x88] sm:$0xf]
        %v438 = vld [vmem:[%s321 + $0x8c] sm:$0xf]
        %v439 = vld [vmem:[%s321 + $0x90] sm:$0xf]
        %v440 = vld [vmem:[%s321 + $0x94] sm:$0xf]
        %v441 = vld [vmem:[%s321 + $0x98] sm:$0xf]
        %v442 = vld [vmem:[%s321 + $0x9c] sm:$0xf]
        %v443 = vld [vmem:[%s321 + $0xa0] sm:$0xf]
        %v444 = vld [vmem:[%s321 + $0xa4] sm:$0xf]
        %v445 = vld [vmem:[%s321 + $0xa8] sm:$0xf]
        %v446 = vld [vmem:[%s321 + $0xac] sm:$0xf]
        %v447 = vld [vmem:[%s321 + $0xb0] sm:$0xf]
        %v448 = vld [vmem:[%s321 + $0xb4] sm:$0xf]
        %v449 = vld [vmem:[%s321 + $0xb8] sm:$0xf]
        %v450 = vld [vmem:[%s321 + $0xbc] sm:$0xf]
        %v451 = vld [vmem:[%s321 + $0xc0] sm:$0xf]
        %v452 = vld [vmem:[%s321 + $0xc4] sm:$0xf]
        %v453 = vld [vmem:[%s321 + $0xc8] sm:$0xf]
        %v454 = vld [vmem:[%s321 + $0xcc] sm:$0xf]
        %v455 = vld [vmem:[%s321 + $0xd0] sm:$0xf]
        %v456 = vld [vmem:[%s321 + $0xd4] sm:$0xf]
        %v457 = vld [vmem:[%s321 + $0xd8] sm:$0xf]
        %v458 = vld [vmem:[%s321 + $0xdc] sm:$0xf]
        %v459 = vld [vmem:[%s321 + $0xe0] sm:$0xf]
        %v460 = vld [vmem:[%s321 + $0xe4] sm:$0xf]
        %v461 = vld [vmem:[%s321 + $0xe8] sm:$0xf]
        %v462 = vld [vmem:[%s321 + $0xec] sm:$0xf]
        %v463 = vld [vmem:[%s321 + $0xf0] sm:$0xf]
        %v464 = vld [vmem:[%s321 + $0xf4] sm:$0xf]
        %v465 = vld [vmem:[%s321 + $0xf8] sm:$0xf]
        %v466 = vld [vmem:[%s321 + $0xfc] sm:$0xf]
        %v499 = vunpack.c.l.b16 %v371
        %v500 = vunpack.c.h.b16 %v371
        %v501 = vunpack.c.l.b16 %v372
        %v502 = vunpack.c.h.b16 %v372
        %v503 = vunpack.c.l.b16 %v373
        %v504 = vunpack.c.h.b16 %v373
        %v505 = vunpack.c.l.b16 %v374
        %v506 = vunpack.c.h.b16 %v374
        %v507 = vunpack.c.l.b16 %v375
        %v508 = vunpack.c.h.b16 %v375
        %v509 = vunpack.c.l.b16 %v376
        %v510 = vunpack.c.h.b16 %v376
        %v511 = vunpack.c.l.b16 %v377
        %v512 = vunpack.c.h.b16 %v377
        %v513 = vunpack.c.l.b16 %v378
        %v514 = vunpack.c.h.b16 %v378
        %v515 = vunpack.c.l.b16 %v379
        %v516 = vunpack.c.h.b16 %v379
        %v517 = vunpack.c.l.b16 %v380
        %v518 = vunpack.c.h.b16 %v380
        %v519 = vunpack.c.l.b16 %v381
        %v520 = vunpack.c.h.b16 %v381
        %v521 = vunpack.c.l.b16 %v382
        %v522 = vunpack.c.h.b16 %v382
        %v523 = vunpack.c.l.b16 %v383
        %v524 = vunpack.c.h.b16 %v383
        %v525 = vunpack.c.l.b16 %v384
        %v526 = vunpack.c.h.b16 %v384
        %v527 = vunpack.c.l.b16 %v385
        %v528 = vunpack.c.h.b16 %v385
        %v529 = vunpack.c.l.b16 %v386
        %v530 = vunpack.c.h.b16 %v386
        %v531 = vunpack.c.l.b16 %v387
        %v532 = vunpack.c.h.b16 %v387
        %v533 = vunpack.c.l.b16 %v388
        %v534 = vunpack.c.h.b16 %v388
        %v535 = vunpack.c.l.b16 %v389
        %v536 = vunpack.c.h.b16 %v389
        %v537 = vunpack.c.l.b16 %v390
        %v538 = vunpack.c.h.b16 %v390
        %v539 = vunpack.c.l.b16 %v391
        %v540 = vunpack.c.h.b16 %v391
        %v541 = vunpack.c.l.b16 %v392
        %v542 = vunpack.c.h.b16 %v392
        %v543 = vunpack.c.l.b16 %v393
        %v544 = vunpack.c.h.b16 %v393
        %v545 = vunpack.c.l.b16 %v394
        %v546 = vunpack.c.h.b16 %v394
        %v547 = vunpack.c.l.b16 %v395
        %v548 = vunpack.c.h.b16 %v395
        %v549 = vunpack.c.l.b16 %v396
        %v550 = vunpack.c.h.b16 %v396
        %v551 = vunpack.c.l.b16 %v397
        %v552 = vunpack.c.h.b16 %v397
        %v553 = vunpack.c.l.b16 %v398
        %v554 = vunpack.c.h.b16 %v398
        %v555 = vunpack.c.l.b16 %v399
        %v556 = vunpack.c.h.b16 %v399
        %v557 = vunpack.c.l.b16 %v400
        %v558 = vunpack.c.h.b16 %v400
        %v559 = vunpack.c.l.b16 %v401
        %v560 = vunpack.c.h.b16 %v401
        %v561 = vunpack.c.l.b16 %v402
        %v562 = vunpack.c.h.b16 %v402
        %v563 = vpack.c.b16 %v503, %v499
        %v564 = vpack.c.b16 %v504, %v500
        %v565 = vpack.c.b16 %v505, %v501
        %v566 = vpack.c.b16 %v506, %v502
        %v567 = vpack.c.b16 %v511, %v507
        %v568 = vpack.c.b16 %v512, %v508
        %v569 = vpack.c.b16 %v513, %v509
        %v570 = vpack.c.b16 %v514, %v510
        %v571 = vpack.c.b16 %v519, %v515
        %v572 = vpack.c.b16 %v520, %v516
        %v573 = vpack.c.b16 %v521, %v517
        %v574 = vpack.c.b16 %v522, %v518
        %v575 = vpack.c.b16 %v527, %v523
        %v576 = vpack.c.b16 %v528, %v524
        %v577 = vpack.c.b16 %v529, %v525
        %v578 = vpack.c.b16 %v530, %v526
        %v579 = vpack.c.b16 %v535, %v531
        %v580 = vpack.c.b16 %v536, %v532
        %v581 = vpack.c.b16 %v537, %v533
        %v582 = vpack.c.b16 %v538, %v534
        %v583 = vpack.c.b16 %v543, %v539
        %v584 = vpack.c.b16 %v544, %v540
        %v585 = vpack.c.b16 %v545, %v541
        %v586 = vpack.c.b16 %v546, %v542
        %v587 = vpack.c.b16 %v551, %v547
        %v588 = vpack.c.b16 %v552, %v548
        %v589 = vpack.c.b16 %v553, %v549
        %v590 = vpack.c.b16 %v554, %v550
        %v591 = vpack.c.b16 %v559, %v555
        %v592 = vpack.c.b16 %v560, %v556
        %v593 = vpack.c.b16 %v561, %v557
        %v594 = vpack.c.b16 %v562, %v558
        %v691 = vunpack.c.l.b16 %v403
        %v692 = vunpack.c.l.b16 %v404
        %v693 = vunpack.c.l.b16 %v405
        %v694 = vunpack.c.l.b16 %v406
        %v695 = vunpack.c.l.b16 %v407
        %v696 = vunpack.c.l.b16 %v408
        %v697 = vunpack.c.l.b16 %v409
        %v698 = vunpack.c.l.b16 %v410
        %v699 = vunpack.c.l.b16 %v411
        %v700 = vunpack.c.l.b16 %v412
        %v701 = vunpack.c.l.b16 %v413
        %v702 = vunpack.c.l.b16 %v414
        %v703 = vunpack.c.l.b16 %v415
        %v704 = vunpack.c.l.b16 %v416
        %v705 = vunpack.c.l.b16 %v417
        %v706 = vunpack.c.l.b16 %v418
        %v707 = vunpack.c.l.b16 %v419
        %v708 = vunpack.c.l.b16 %v420
        %v709 = vunpack.c.l.b16 %v421
        %v710 = vunpack.c.l.b16 %v422
        %v711 = vunpack.c.l.b16 %v423
        %v712 = vunpack.c.l.b16 %v424
        %v713 = vunpack.c.l.b16 %v425
        %v714 = vunpack.c.l.b16 %v426
        %v715 = vunpack.c.l.b16 %v427
        %v716 = vunpack.c.l.b16 %v428
        %v717 = vunpack.c.l.b16 %v429
        %v718 = vunpack.c.l.b16 %v430
        %v719 = vunpack.c.l.b16 %v431
        %v720 = vunpack.c.l.b16 %v432
        %v721 = vunpack.c.l.b16 %v433
        %v722 = vunpack.c.l.b16 %v434
        %v723 = vunpack.c.l.b16 %v435
        %v724 = vunpack.c.l.b16 %v436
        %v725 = vunpack.c.l.b16 %v437
        %v726 = vunpack.c.l.b16 %v438
        %v727 = vunpack.c.l.b16 %v439
        %v728 = vunpack.c.l.b16 %v440
        %v729 = vunpack.c.l.b16 %v441
        %v730 = vunpack.c.l.b16 %v442
        %v731 = vunpack.c.l.b16 %v443
        %v732 = vunpack.c.l.b16 %v444
        %v733 = vunpack.c.l.b16 %v445
        %v734 = vunpack.c.l.b16 %v446
        %v735 = vunpack.c.l.b16 %v447
        %v736 = vunpack.c.l.b16 %v448
        %v737 = vunpack.c.l.b16 %v449
        %v738 = vunpack.c.l.b16 %v450
        %v739 = vunpack.c.l.b16 %v451
        %v740 = vunpack.c.l.b16 %v452
        %v741 = vunpack.c.l.b16 %v453
        %v742 = vunpack.c.l.b16 %v454
        %v743 = vunpack.c.l.b16 %v455
        %v744 = vunpack.c.l.b16 %v456
        %v745 = vunpack.c.l.b16 %v457
        %v746 = vunpack.c.l.b16 %v458
        %v747 = vunpack.c.l.b16 %v459
        %v748 = vunpack.c.l.b16 %v460
        %v749 = vunpack.c.l.b16 %v461
        %v750 = vunpack.c.l.b16 %v462
        %v751 = vunpack.c.l.b16 %v463
        %v752 = vunpack.c.l.b16 %v464
        %v753 = vunpack.c.l.b16 %v465
        %v754 = vunpack.c.l.b16 %v466
        %v755 = vpack.c.b16 %v692, %v691
        %v756 = vpack.c.b16 %v694, %v693
        %v757 = vpack.c.b16 %v696, %v695
        %v758 = vpack.c.b16 %v698, %v697
        %v759 = vpack.c.b16 %v700, %v699
        %v760 = vpack.c.b16 %v702, %v701
        %v761 = vpack.c.b16 %v704, %v703
        %v762 = vpack.c.b16 %v706, %v705
        %v763 = vpack.c.b16 %v708, %v707
        %v764 = vpack.c.b16 %v710, %v709
        %v765 = vpack.c.b16 %v712, %v711
        %v766 = vpack.c.b16 %v714, %v713
        %v767 = vpack.c.b16 %v716, %v715
        %v768 = vpack.c.b16 %v718, %v717
        %v769 = vpack.c.b16 %v720, %v719
        %v770 = vpack.c.b16 %v722, %v721
        %v771 = vpack.c.b16 %v724, %v723
        %v772 = vpack.c.b16 %v726, %v725
        %v773 = vpack.c.b16 %v728, %v727
        %v774 = vpack.c.b16 %v730, %v729
        %v775 = vpack.c.b16 %v732, %v731
        %v776 = vpack.c.b16 %v734, %v733
        %v777 = vpack.c.b16 %v736, %v735
        %v778 = vpack.c.b16 %v738, %v737
        %v779 = vpack.c.b16 %v740, %v739
        %v780 = vpack.c.b16 %v742, %v741
        %v781 = vpack.c.b16 %v744, %v743
        %v782 = vpack.c.b16 %v746, %v745
        %v783 = vpack.c.b16 %v748, %v747
        %v784 = vpack.c.b16 %v750, %v749
        %v785 = vpack.c.b16 %v752, %v751
        %v786 = vpack.c.b16 %v754, %v753
        %819 = vmatpush.bf16.msra.mxu0 %v762
        %820 = vmatpush.bf16.msra.mxu0 %v761
        %821 = vmatpush.bf16.msra.mxu0 %v760
        %822 = vmatpush.bf16.msra.mxu0 %v759
        %823 = vmatpush.bf16.msra.mxu0 %v758
        %824 = vmatpush.bf16.msra.mxu0 %v757
        %825 = vmatpush.bf16.msra.mxu0 %v756
        %826 = vmatpush.bf16.msra.mxu0 %v755
        %827 = vmatmul.bf16.gmra.mxu0 %v563
        %v828 = vpop.f32.mrf.mxu0
        %v829 = vadd.f32 0.0, %v828
        %v830 = vpop.f32.mrf.mxu0
        %v831 = vadd.f32 0.0, %v830
        %832 = vmatmul.bf16.gmra.mxu0 %v567
        %v833 = vpop.f32.mrf.mxu0
        %v834 = vadd.f32 0.0, %v833
        %v835 = vpop.f32.mrf.mxu0
        %v836 = vadd.f32 0.0, %v835
        %837 = vmatmul.bf16.gmra.mxu0 %v571
        %v838 = vpop.f32.mrf.mxu0
        %v839 = vadd.f32 0.0, %v838
        %v840 = vpop.f32.mrf.mxu0
        %v841 = vadd.f32 0.0, %v840
        %842 = vmatmul.bf16.gmra.mxu0 %v575
        %v843 = vpop.f32.mrf.mxu0
        %v844 = vadd.f32 0.0, %v843
        %v845 = vpop.f32.mrf.mxu0
        %v846 = vadd.f32 0.0, %v845
        %847 = vmatmul.bf16.gmra.mxu0 %v579
        %v848 = vpop.f32.mrf.mxu0
        %v849 = vadd.f32 0.0, %v848
        %v850 = vpop.f32.mrf.mxu0
        %v851 = vadd.f32 0.0, %v850
        %852 = vmatmul.bf16.gmra.mxu0 %v583
        %v853 = vpop.f32.mrf.mxu0
        %v854 = vadd.f32 0.0, %v853
        %v855 = vpop.f32.mrf.mxu0
        %v856 = vadd.f32 0.0, %v855
        %857 = vmatmul.bf16.gmra.mxu0 %v587
        %v858 = vpop.f32.mrf.mxu0
        %v859 = vadd.f32 0.0, %v858
        %v860 = vpop.f32.mrf.mxu0
        %v861 = vadd.f32 0.0, %v860
        %862 = vmatmul.bf16.gmra.mxu0 %v591
        %v863 = vpop.f32.mrf.mxu0
        %v864 = vadd.f32 0.0, %v863
        %v865 = vpop.f32.mrf.mxu0
        %v866 = vadd.f32 0.0, %v865
        %867 = vdwg.mxu0
        %868 = vmatpush.bf16.msra.mxu0 %v770
        %869 = vmatpush.bf16.msra.mxu0 %v769
        %870 = vmatpush.bf16.msra.mxu0 %v768
        %871 = vmatpush.bf16.msra.mxu0 %v767
        %872 = vmatpush.bf16.msra.mxu0 %v766
        %873 = vmatpush.bf16.msra.mxu0 %v765
        %874 = vmatpush.bf16.msra.mxu0 %v764
        %875 = vmatpush.bf16.msra.mxu0 %v763
        %876 = vmatmul.bf16.gmra.mxu0 %v564
        %v877 = vpop.f32.mrf.mxu0
        %v878 = vadd.f32 %v829, %v877
        %v879 = vpop.f32.mrf.mxu0
        %v880 = vadd.f32 %v831, %v879
        %881 = vmatmul.bf16.gmra.mxu0 %v568
        %v882 = vpop.f32.mrf.mxu0
        %v883 = vadd.f32 %v834, %v882
        %v884 = vpop.f32.mrf.mxu0
        %v885 = vadd.f32 %v836, %v884
        %886 = vmatmul.bf16.gmra.mxu0 %v572
        %v887 = vpop.f32.mrf.mxu0
        %v888 = vadd.f32 %v839, %v887
        %v889 = vpop.f32.mrf.mxu0
        %v890 = vadd.f32 %v841, %v889
        %891 = vmatmul.bf16.gmra.mxu0 %v576
        %v892 = vpop.f32.mrf.mxu0
        %v893 = vadd.f32 %v844, %v892
        %v894 = vpop.f32.mrf.mxu0
        %v895 = vadd.f32 %v846, %v894
        %896 = vmatmul.bf16.gmra.mxu0 %v580
        %v897 = vpop.f32.mrf.mxu0
        %v898 = vadd.f32 %v849, %v897
        %v899 = vpop.f32.mrf.mxu0
        %v900 = vadd.f32 %v851, %v899
        %901 = vmatmul.bf16.gmra.mxu0 %v584
        %v902 = vpop.f32.mrf.mxu0
        %v903 = vadd.f32 %v854, %v902
        %v904 = vpop.f32.mrf.mxu0
        %v905 = vadd.f32 %v856, %v904
        %906 = vmatmul.bf16.gmra.mxu0 %v588
        %v907 = vpop.f32.mrf.mxu0
        %v908 = vadd.f32 %v859, %v907
        %v909 = vpop.f32.mrf.mxu0
        %v910 = vadd.f32 %v861, %v909
        %911 = vmatmul.bf16.gmra.mxu0 %v592
        %v912 = vpop.f32.mrf.mxu0
        %v913 = vadd.f32 %v864, %v912
        %v914 = vpop.f32.mrf.mxu0
        %v915 = vadd.f32 %v866, %v914
        %916 = vdwg.mxu0
        %917 = vmatpush.bf16.msra.mxu0 %v778
        %918 = vmatpush.bf16.msra.mxu0 %v777
        %919 = vmatpush.bf16.msra.mxu0 %v776
        %920 = vmatpush.bf16.msra.mxu0 %v775
        %921 = vmatpush.bf16.msra.mxu0 %v774
        %922 = vmatpush.bf16.msra.mxu0 %v773
        %923 = vmatpush.bf16.msra.mxu0 %v772
        %924 = vmatpush.bf16.msra.mxu0 %v771
        %925 = vmatmul.bf16.gmra.mxu0 %v565
        %v926 = vpop.f32.mrf.mxu0
        %v927 = vadd.f32 %v878, %v926
        %v928 = vpop.f32.mrf.mxu0
        %v929 = vadd.f32 %v880, %v928
        %930 = vmatmul.bf16.gmra.mxu0 %v569
        %v931 = vpop.f32.mrf.mxu0
        %v932 = vadd.f32 %v883, %v931
        %v933 = vpop.f32.mrf.mxu0
        %v934 = vadd.f32 %v885, %v933
        %935 = vmatmul.bf16.gmra.mxu0 %v573
        %v936 = vpop.f32.mrf.mxu0
        %v937 = vadd.f32 %v888, %v936
        %v938 = vpop.f32.mrf.mxu0
        %v939 = vadd.f32 %v890, %v938
        %940 = vmatmul.bf16.gmra.mxu0 %v577
        %v941 = vpop.f32.mrf.mxu0
        %v942 = vadd.f32 %v893, %v941
        %v943 = vpop.f32.mrf.mxu0
        %v944 = vadd.f32 %v895, %v943
        %945 = vmatmul.bf16.gmra.mxu0 %v581
        %v946 = vpop.f32.mrf.mxu0
        %v947 = vadd.f32 %v898, %v946
        %v948 = vpop.f32.mrf.mxu0
        %v949 = vadd.f32 %v900, %v948
        %950 = vmatmul.bf16.gmra.mxu0 %v585
        %v951 = vpop.f32.mrf.mxu0
        %v952 = vadd.f32 %v903, %v951
        %v953 = vpop.f32.mrf.mxu0
        %v954 = vadd.f32 %v905, %v953
        %955 = vmatmul.bf16.gmra.mxu0 %v589
        %v956 = vpop.f32.mrf.mxu0
        %v957 = vadd.f32 %v908, %v956
        %v958 = vpop.f32.mrf.mxu0
        %v959 = vadd.f32 %v910, %v958
        %960 = vmatmul.bf16.gmra.mxu0 %v593
        %v961 = vpop.f32.mrf.mxu0
        %v962 = vadd.f32 %v913, %v961
        %v963 = vpop.f32.mrf.mxu0
        %v964 = vadd.f32 %v915, %v963
        %965 = vdwg.mxu0
        %966 = vmatpush.bf16.msra.mxu0 %v786
        %967 = vmatpush.bf16.msra.mxu0 %v785
        %968 = vmatpush.bf16.msra.mxu0 %v784
        %969 = vmatpush.bf16.msra.mxu0 %v783
        %970 = vmatpush.bf16.msra.mxu0 %v782
        %971 = vmatpush.bf16.msra.mxu0 %v781
        %972 = vmatpush.bf16.msra.mxu0 %v780
        %973 = vmatpush.bf16.msra.mxu0 %v779
        %974 = vmatmul.bf16.gmra.mxu0 %v566
        %v975 = vpop.f32.mrf.mxu0
        %v976 = vadd.f32 %v927, %v975
        %v977 = vpop.f32.mrf.mxu0
        %v978 = vadd.f32 %v929, %v977
        %979 = vmatmul.bf16.gmra.mxu0 %v570
        %v980 = vpop.f32.mrf.mxu0
        %v981 = vadd.f32 %v932, %v980
        %v982 = vpop.f32.mrf.mxu0
        %v983 = vadd.f32 %v934, %v982
        %984 = vmatmul.bf16.gmra.mxu0 %v574
        %v985 = vpop.f32.mrf.mxu0
        %v986 = vadd.f32 %v937, %v985
        %v987 = vpop.f32.mrf.mxu0
        %v988 = vadd.f32 %v939, %v987
        %989 = vmatmul.bf16.gmra.mxu0 %v578
        %v990 = vpop.f32.mrf.mxu0
        %v991 = vadd.f32 %v942, %v990
        %v992 = vpop.f32.mrf.mxu0
        %v993 = vadd.f32 %v944, %v992
        %994 = vmatmul.bf16.gmra.mxu0 %v582
        %v995 = vpop.f32.mrf.mxu0
        %v996 = vadd.f32 %v947, %v995
        %v997 = vpop.f32.mrf.mxu0
        %v998 = vadd.f32 %v949, %v997
        %999 = vmatmul.bf16.gmra.mxu0 %v586
        %v1000 = vpop.f32.mrf.mxu0
        %v1001 = vadd.f32 %v952, %v1000
        %v1002 = vpop.f32.mrf.mxu0
        %v1003 = vadd.f32 %v954, %v1002
        %1004 = vmatmul.bf16.gmra.mxu0 %v590
        %v1005 = vpop.f32.mrf.mxu0
        %v1006 = vadd.f32 %v957, %v1005
        %v1007 = vpop.f32.mrf.mxu0
        %v1008 = vadd.f32 %v959, %v1007
        %1009 = vmatmul.bf16.gmra.mxu0 %v594
        %v1010 = vpop.f32.mrf.mxu0
        %v1011 = vadd.f32 %v962, %v1010
        %v1012 = vpop.f32.mrf.mxu0
        %v1013 = vadd.f32 %v964, %v1012
        %1014 = vdwg.mxu0
        %v1015 = vadd.f32 %v355, %v976
        %v1016 = vadd.f32 %v356, %v978
        %v1017 = vadd.f32 %v357, %v981
        %v1018 = vadd.f32 %v358, %v983
        %v1019 = vadd.f32 %v359, %v986
        %v1020 = vadd.f32 %v360, %v988
        %v1021 = vadd.f32 %v361, %v991
        %v1022 = vadd.f32 %v362, %v993
        %v1023 = vadd.f32 %v363, %v996
        %v1024 = vadd.f32 %v364, %v998
        %v1025 = vadd.f32 %v365, %v1001
        %v1026 = vadd.f32 %v366, %v1003
        %v1027 = vadd.f32 %v367, %v1006
        %v1028 = vadd.f32 %v368, %v1008
        %v1029 = vadd.f32 %v369, %v1011
        %v1030 = vadd.f32 %v370, %v1013
        %1031 = vst [vmem:[#allocation2] sm:$0xff] %v1015
        %1032 = vst [vmem:[#allocation2 + $0x8] sm:$0xff] %v1016
        %1033 = vst [vmem:[#allocation2 + $0x10] sm:$0xff] %v1017
        %1034 = vst [vmem:[#allocation2 + $0x18] sm:$0xff] %v1018
        %1035 = vst [vmem:[#allocation2 + $0x20] sm:$0xff] %v1019
        %1036 = vst [vmem:[#allocation2 + $0x28] sm:$0xff] %v1020
        %1037 = vst [vmem:[#allocation2 + $0x30] sm:$0xff] %v1021
        %1038 = vst [vmem:[#allocation2 + $0x38] sm:$0xff] %v1022
        %1039 = vst [vmem:[#allocation2 + $0x40] sm:$0xff] %v1023
        %1040 = vst [vmem:[#allocation2 + $0x48] sm:$0xff] %v1024
        %1041 = vst [vmem:[#allocation2 + $0x50] sm:$0xff] %v1025
        %1042 = vst [vmem:[#allocation2 + $0x58] sm:$0xff] %v1026
        %1043 = vst [vmem:[#allocation2 + $0x60] sm:$0xff] %v1027
        %1044 = vst [vmem:[#allocation2 + $0x68] sm:$0xff] %v1028
        %1045 = vst [vmem:[#allocation2 + $0x70] sm:$0xff] %v1029
        %1046 = vst [vmem:[#allocation2 + $0x78] sm:$0xff] %v1030
        %p1047 = scmp.eq.s32.totalorder %s21, 1
        // Predicated region
        $region60: #{discriminator_forward.7} parent=50 // pred_check
          %p1048 = pneg %p1047
        $region61: #{discriminator_forward.7} parent=50 // pred_check_branch
          %1050 = sbr.rel (%p1048) target = $region63
        $region62: #{discriminator_forward.7} parent=50 // pred_region
          %v1051 = vld [vmem:[#allocation2] sm:$0xff]
          %v1052 = vld [vmem:[#allocation2 + $0x8] sm:$0xff]
          %v1053 = vld [vmem:[#allocation2 + $0x10] sm:$0xff]
          %v1054 = vld [vmem:[#allocation2 + $0x18] sm:$0xff]
          %v1055 = vld [vmem:[#allocation2 + $0x20] sm:$0xff]
          %v1056 = vld [vmem:[#allocation2 + $0x28] sm:$0xff]
          %v1057 = vld [vmem:[#allocation2 + $0x30] sm:$0xff]
          %v1058 = vld [vmem:[#allocation2 + $0x38] sm:$0xff]
          %v1059 = vld [vmem:[#allocation2 + $0x40] sm:$0xff]
          %v1060 = vld [vmem:[#allocation2 + $0x48] sm:$0xff]
          %v1061 = vld [vmem:[#allocation2 + $0x50] sm:$0xff]
          %v1062 = vld [vmem:[#allocation2 + $0x58] sm:$0xff]
          %v1063 = vld [vmem:[#allocation2 + $0x60] sm:$0xff]
          %v1064 = vld [vmem:[#allocation2 + $0x68] sm:$0xff]
          %v1065 = vld [vmem:[#allocation2 + $0x70] sm:$0xff]
          %v1066 = vld [vmem:[#allocation2 + $0x78] sm:$0xff]
          %v1067 = vld [vmem:[%s325] sm:$0x1]
          %v1069 = vperm.slane %v1067, 0
          %v1071 = vadd.f32 %v1051, %v1069
          %v1072 = vadd.f32 %v1052, %v1069
          %v1073 = vadd.f32 %v1053, %v1069
          %v1074 = vadd.f32 %v1054, %v1069
          %v1075 = vadd.f32 %v1055, %v1069
          %v1076 = vadd.f32 %v1056, %v1069
          %v1077 = vadd.f32 %v1057, %v1069
          %v1078 = vadd.f32 %v1058, %v1069
          %v1079 = vadd.f32 %v1059, %v1069
          %v1080 = vadd.f32 %v1060, %v1069
          %v1081 = vadd.f32 %v1061, %v1069
          %v1082 = vadd.f32 %v1062, %v1069
          %v1083 = vadd.f32 %v1063, %v1069
          %v1084 = vadd.f32 %v1064, %v1069
          %v1085 = vadd.f32 %v1065, %v1069
          %v1086 = vadd.f32 %v1066, %v1069
          %v1087 = vpack.c.bf16 %v1071, %v1071
          %v1088 = vpack.c.bf16 %v1072, %v1072
          %v1089 = vpack.c.bf16 %v1073, %v1073
          %v1090 = vpack.c.bf16 %v1074, %v1074
          %v1091 = vpack.c.bf16 %v1075, %v1075
          %v1092 = vpack.c.bf16 %v1076, %v1076
          %v1093 = vpack.c.bf16 %v1077, %v1077
          %v1094 = vpack.c.bf16 %v1078, %v1078
          %v1095 = vpack.c.bf16 %v1079, %v1079
          %v1096 = vpack.c.bf16 %v1080, %v1080
          %v1097 = vpack.c.bf16 %v1081, %v1081
          %v1098 = vpack.c.bf16 %v1082, %v1082
          %v1099 = vpack.c.bf16 %v1083, %v1083
          %v1100 = vpack.c.bf16 %v1084, %v1084
          %v1101 = vpack.c.bf16 %v1085, %v1085
          %v1102 = vpack.c.bf16 %v1086, %v1086
          %1103 = vst [vmem:[%s333] sm:$0xf] %v1087
          %1104 = vst [vmem:[%s333 + $0x4] sm:$0xf] %v1088
          %1105 = vst [vmem:[%s333 + $0x8] sm:$0xf] %v1089
          %1106 = vst [vmem:[%s333 + $0xc] sm:$0xf] %v1090
          %1107 = vst [vmem:[%s333 + $0x10] sm:$0xf] %v1091
          %1108 = vst [vmem:[%s333 + $0x14] sm:$0xf] %v1092
          %1109 = vst [vmem:[%s333 + $0x18] sm:$0xf] %v1093
          %1110 = vst [vmem:[%s333 + $0x1c] sm:$0xf] %v1094
          %1111 = vst [vmem:[%s333 + $0x20] sm:$0xf] %v1095
          %1112 = vst [vmem:[%s333 + $0x24] sm:$0xf] %v1096
          %1113 = vst [vmem:[%s333 + $0x28] sm:$0xf] %v1097
          %1114 = vst [vmem:[%s333 + $0x2c] sm:$0xf] %v1098
          %1115 = vst [vmem:[%s333 + $0x30] sm:$0xf] %v1099
          %1116 = vst [vmem:[%s333 + $0x34] sm:$0xf] %v1100
          %1117 = vst [vmem:[%s333 + $0x38] sm:$0xf] %v1101
          %1118 = vst [vmem:[%s333 + $0x3c] sm:$0xf] %v1102
        $region63: #{discriminator_forward.7} parent=50 // pred_fallthru
          _
        %s1119 = smul.u32 16, %s19
        %p1120 = scmp.lt.s32.totalorder %s1119, 15
        %s1121 = scalar_select %p1120, %s1119, 15
        %p1122 = scmp.lt.s32.totalorder %s20, 0
        %s1123 = scalar_select %p1122, %s20, 0
        %s1124 = sadd.s32 %s1123, %s1121
        %s1125 = smul.addr %s1124, 4
        %s1126 = scalar_lea.vmem %s3, %s1125
        // Predicated region
        $region64: #{discriminator_forward.7} parent=50 // pred_check
          %p1127 = pneg %p135
        $region65: #{discriminator_forward.7} parent=50 // pred_check_branch
          %1129 = sbr.rel (%p1127) target = $region67
        $region66: #{discriminator_forward.7} parent=50 // pred_region
          %s1130 = smul.u32 16, %s19
        $region67: #{discriminator_forward.7} parent=50 // pred_fallthru
          _
        // Predicated region
        $region68: #{discriminator_forward.7} parent=50 // pred_check
          %p1131 = pneg %p135
        $region69: #{discriminator_forward.7} parent=50 // pred_check_branch
          %1133 = sbr.rel (%p1131) target = $region71
        $region70: #{discriminator_forward.7} parent=50 // pred_region
          %s1134 = smul.u32 16, %s19
          %p1135 = scmp.lt.s32.totalorder %s1134, 15
          %s1136 = scalar_select %p1135, %s1134, 15
          %p1137 = scmp.lt.s32.totalorder %s20, 0
          %s1138 = scalar_select %p1137, %s20, 0
          %s1139 = sadd.s32 %s1138, %s1136
          %s1140 = smul.addr %s1139, 4
          %s1141 = scalar_lea.vmem %s3, %s1140
        $region71: #{discriminator_forward.7} parent=50 // pred_fallthru
          _
      $region51: #{discriminator_forward.7} parent=5 // pred_fallthru
        _
      %p1142 = scmp.le.s32.totalorder 2, %s9
      // Predicated region
      $region72: #{discriminator_forward.7} parent=5 // pred_check
        %p1143 = pneg %p1142
      $region73: #{discriminator_forward.7} parent=5 // pred_check_branch
        %1145 = sbr.rel (%p1143) target = $region75
      $region74: #{discriminator_forward.7} parent=5 // pred_region
        %s1146 = ssub.s32 %s9, 2
      $region75: #{discriminator_forward.7} parent=5 // pred_fallthru
        _
    $region6: #{discriminator_forward.7} parent=1 // loop_footer
      %s13 = sadd.s32 1, %s9
    $region7: #{discriminator_forward.7} parent=1 // loop_footer_branch
      %8 = sbr.rel target = $region3
    $region8: #{discriminator_forward.7} parent=1 // loop_exit
      _

// kernel: discriminator_forward.8
$region0: #{discriminator_forward.8}
  #allocation0 [shape = 'u32[]', space=smem, size = 0x4, offset = 0x4, fixed_abs, tag = 'smem constant byte address 0x4 - core index']
  #allocation1 [shape = 'u32[72,128]{1,0:T(1,128)}', space=vmem, size = 0x9000, scoped, tag = 'internal scratch']
  %s0 = inlined_call_operand.vmem [shape: bf16[128,128], index: 0, kind: input, shape index: {}]
  %s1 = inlined_call_operand.vmem [shape: f32[1,128], index: 1, kind: input, shape index: {}]
  %s2 = inlined_call_operand.vmem [shape: f32[1,128], index: 2, kind: input, shape index: {}]
  %s3 = inlined_call_operand.vmem [shape: bf16[128,128], index: 3, kind: output, shape index: {}]
  %s4 = sld [smem:[#allocation0]]
  $region22: #{discriminator_forward.8} parent=0
    _
  %s6 = ssub.s32 1, %s4
  %s7 = scalar_select 0, %s6, %s4
  // Predicated region
  $region2: #{discriminator_forward.8} parent=0 // pred_check
    _
  $region3: #{discriminator_forward.8} parent=0 // pred_check_branch
    %9 = sbr.rel (0) target = $region5
  $region4: #{discriminator_forward.8} parent=0 // pred_region
    _
  $region5: #{discriminator_forward.8} parent=0 // pred_fallthru
    _
  // Predicated region
  $region6: #{discriminator_forward.8} parent=0 // pred_check
    _
  $region7: #{discriminator_forward.8} parent=0 // pred_check_branch
    %11 = sbr.rel (0) target = $region9
  $region8: #{discriminator_forward.8} parent=0 // pred_region
    _
  $region9: #{discriminator_forward.8} parent=0 // pred_fallthru
    _
  // Predicated region
  $region10: #{discriminator_forward.8} parent=0 // pred_check
    _
  $region11: #{discriminator_forward.8} parent=0 // pred_check_branch
    %13 = sbr.rel (0) target = $region13
  $region12: #{discriminator_forward.8} parent=0 // pred_region
    _
  $region13: #{discriminator_forward.8} parent=0 // pred_fallthru
    _
  %v14 = vld [vmem:[%s0] sm:$0xf]
  %v15 = vld [vmem:[%s0 + $0x4] sm:$0xf]
  %v16 = vld [vmem:[%s0 + $0x8] sm:$0xf]
  %v17 = vld [vmem:[%s0 + $0xc] sm:$0xf]
  %v18 = vld [vmem:[%s0 + $0x10] sm:$0xf]
  %v19 = vld [vmem:[%s0 + $0x14] sm:$0xf]
  %v20 = vld [vmem:[%s0 + $0x18] sm:$0xf]
  %v21 = vld [vmem:[%s0 + $0x1c] sm:$0xf]
  %v22 = vld [vmem:[%s0 + $0x20] sm:$0xf]
  %v23 = vld [vmem:[%s0 + $0x24] sm:$0xf]
  %v24 = vld [vmem:[%s0 + $0x28] sm:$0xf]
  %v25 = vld [vmem:[%s0 + $0x2c] sm:$0xf]
  %v26 = vld [vmem:[%s0 + $0x30] sm:$0xf]
  %v27 = vld [vmem:[%s0 + $0x34] sm:$0xf]
  %v28 = vld [vmem:[%s0 + $0x38] sm:$0xf]
  %v29 = vld [vmem:[%s0 + $0x3c] sm:$0xf]
  %v30 = vunpack.c.l.bf16 %v14
  %v31 = vunpack.c.l.bf16 %v15
  %v32 = vunpack.c.l.bf16 %v16
  %v33 = vunpack.c.l.bf16 %v17
  %v34 = vunpack.c.l.bf16 %v18
  %v35 = vunpack.c.l.bf16 %v19
  %v36 = vunpack.c.l.bf16 %v20
  %v37 = vunpack.c.l.bf16 %v21
  %v38 = vunpack.c.l.bf16 %v22
  %v39 = vunpack.c.l.bf16 %v23
  %v40 = vunpack.c.l.bf16 %v24
  %v41 = vunpack.c.l.bf16 %v25
  %v42 = vunpack.c.l.bf16 %v26
  %v43 = vunpack.c.l.bf16 %v27
  %v44 = vunpack.c.l.bf16 %v28
  %v45 = vunpack.c.l.bf16 %v29
  %v46 = vadd.f32 %v30, %v31
  %v47 = vadd.f32 %v46, %v32
  %v48 = vadd.f32 %v47, %v33
  %v49 = vadd.f32 %v48, %v34
  %v50 = vadd.f32 %v49, %v35
  %v51 = vadd.f32 %v50, %v36
  %v52 = vadd.f32 %v51, %v37
  %v53 = vadd.f32 %v52, %v38
  %v54 = vadd.f32 %v53, %v39
  %v55 = vadd.f32 %v54, %v40
  %v56 = vadd.f32 %v55, %v41
  %v57 = vadd.f32 %v56, %v42
  %v58 = vadd.f32 %v57, %v43
  %v59 = vadd.f32 %v58, %v44
  %v60 = vadd.f32 %v59, %v45
  %v61 = vrot.slane %v60, 4
  %v62 = vadd.f32 %v60, %v61
  %v63 = vrot.slane %v62, 2
  %v64 = vadd.f32 %v62, %v63
  %v65 = vrot.slane %v64, 1
  %v66 = vadd.f32 %v64, %v65
  %v67 = vmul.f32 %v30, %v30
  %v68 = vmul.f32 %v31, %v31
  %v69 = vmul.f32 %v32, %v32
  %v70 = vmul.f32 %v33, %v33
  %v71 = vmul.f32 %v34, %v34
  %v72 = vmul.f32 %v35, %v35
  %v73 = vmul.f32 %v36, %v36
  %v74 = vmul.f32 %v37, %v37
  %v75 = vmul.f32 %v38, %v38
  %v76 = vmul.f32 %v39, %v39
  %v77 = vmul.f32 %v40, %v40
  %v78 = vmul.f32 %v41, %v41
  %v79 = vmul.f32 %v42, %v42
  %v80 = vmul.f32 %v43, %v43
  %v81 = vmul.f32 %v44, %v44
  %v82 = vmul.f32 %v45, %v45
  %v83 = vadd.f32 %v67, %v68
  %v84 = vadd.f32 %v83, %v69
  %v85 = vadd.f32 %v84, %v70
  %v86 = vadd.f32 %v85, %v71
  %v87 = vadd.f32 %v86, %v72
  %v88 = vadd.f32 %v87, %v73
  %v89 = vadd.f32 %v88, %v74
  %v90 = vadd.f32 %v89, %v75
  %v91 = vadd.f32 %v90, %v76
  %v92 = vadd.f32 %v91, %v77
  %v93 = vadd.f32 %v92, %v78
  %v94 = vadd.f32 %v93, %v79
  %v95 = vadd.f32 %v94, %v80
  %v96 = vadd.f32 %v95, %v81
  %v97 = vadd.f32 %v96, %v82
  %v98 = vrot.slane %v97, 4
  %v99 = vadd.f32 %v97, %v98
  %v100 = vrot.slane %v99, 2
  %v101 = vadd.f32 %v99, %v100
  %v102 = vrot.slane %v101, 1
  %v103 = vadd.f32 %v101, %v102
  %v104 = vmul.f32 %v66, 0.0078125
  %v105 = vmul.f32 %v103, 0.0078125
  %v106 = vmul.f32 %v104, %v104
  %v107 = vsub.f32 %v105, %v106
  %v108 = vld [vmem:[%s1] sm:$0x1]
  %v109 = vadd.f32 %v107, 1e-05
  %v110 = vrsqrt.pop %v109
  %v111 = vmul.f32 %v110, %v109
  %v112 = vmul.f32 %v111, %v110
  %v113 = vmul.f32 0.5, %v112
  %v114 = vsub.f32 1.5, %v113
  %v115 = vmul.f32 %v110, %v114
  %vm116 = vweird.f32 %v109
  %vm117 = vweird.f32 %v110
  %vm118 = vmor %vm116, %vm117
  %v119 = vsel %vm118, %v110, %v115
  %v120 = vmul.f32 %v108, %v119
  %v121 = vld [vmem:[%s2] sm:$0x1]
  %v122 = vmul.f32 %v104, %v120
  %v123 = vsub.f32 %v121, %v122
  %v125 = vperm.slane %v120, 0
  %v127 = vmul.f32 %v30, %v125
  %v128 = vmul.f32 %v31, %v125
  %v129 = vmul.f32 %v32, %v125
  %v130 = vmul.f32 %v33, %v125
  %v131 = vmul.f32 %v34, %v125
  %v132 = vmul.f32 %v35, %v125
  %v133 = vmul.f32 %v36, %v125
  %v134 = vmul.f32 %v37, %v125
  %v135 = vmul.f32 %v38, %v125
  %v136 = vmul.f32 %v39, %v125
  %v137 = vmul.f32 %v40, %v125
  %v138 = vmul.f32 %v41, %v125
  %v139 = vmul.f32 %v42, %v125
  %v140 = vmul.f32 %v43, %v125
  %v141 = vmul.f32 %v44, %v125
  %v142 = vmul.f32 %v45, %v125
  %v144 = vperm.slane %v123, 0
  %v146 = vadd.f32 %v127, %v144
  %v147 = vadd.f32 %v128, %v144
  %v148 = vadd.f32 %v129, %v144
  %v149 = vadd.f32 %v130, %v144
  %v150 = vadd.f32 %v131, %v144
  %v151 = vadd.f32 %v132, %v144
  %v152 = vadd.f32 %v133, %v144
  %v153 = vadd.f32 %v134, %v144
  %v154 = vadd.f32 %v135, %v144
  %v155 = vadd.f32 %v136, %v144
  %v156 = vadd.f32 %v137, %v144
  %v157 = vadd.f32 %v138, %v144
  %v158 = vadd.f32 %v139, %v144
  %v159 = vadd.f32 %v140, %v144
  %v160 = vadd.f32 %v141, %v144
  %v161 = vadd.f32 %v142, %v144
  %vm162 = vcmp.ge.f32.partialorder %v146, 0.0
  %vm163 = vcmp.ge.f32.partialorder %v147, 0.0
  %vm164 = vcmp.ge.f32.partialorder %v148, 0.0
  %vm165 = vcmp.ge.f32.partialorder %v149, 0.0
  %vm166 = vcmp.ge.f32.partialorder %v150, 0.0
  %vm167 = vcmp.ge.f32.partialorder %v151, 0.0
  %vm168 = vcmp.ge.f32.partialorder %v152, 0.0
  %vm169 = vcmp.ge.f32.partialorder %v153, 0.0
  %vm170 = vcmp.ge.f32.partialorder %v154, 0.0
  %vm171 = vcmp.ge.f32.partialorder %v155, 0.0
  %vm172 = vcmp.ge.f32.partialorder %v156, 0.0
  %vm173 = vcmp.ge.f32.partialorder %v157, 0.0
  %vm174 = vcmp.ge.f32.partialorder %v158, 0.0
  %vm175 = vcmp.ge.f32.partialorder %v159, 0.0
  %vm176 = vcmp.ge.f32.partialorder %v160, 0.0
  %vm177 = vcmp.ge.f32.partialorder %v161, 0.0
  %v178 = vmul.f32 %v146, 0.2
  %v179 = vmul.f32 %v147, 0.2
  %v180 = vmul.f32 %v148, 0.2
  %v181 = vmul.f32 %v149, 0.2
  %v182 = vmul.f32 %v150, 0.2
  %v183 = vmul.f32 %v151, 0.2
  %v184 = vmul.f32 %v152, 0.2
  %v185 = vmul.f32 %v153, 0.2
  %v186 = vmul.f32 %v154, 0.2
  %v187 = vmul.f32 %v155, 0.2
  %v188 = vmul.f32 %v156, 0.2
  %v189 = vmul.f32 %v157, 0.2
  %v190 = vmul.f32 %v158, 0.2
  %v191 = vmul.f32 %v159, 0.2
  %v192 = vmul.f32 %v160, 0.2
  %v193 = vmul.f32 %v161, 0.2
  %v194 = vsel %vm162, %v146, %v178
  %v195 = vsel %vm163, %v147, %v179
  %v196 = vsel %vm164, %v148, %v180
  %v197 = vsel %vm165, %v149, %v181
  %v198 = vsel %vm166, %v150, %v182
  %v199 = vsel %vm167, %v151, %v183
  %v200 = vsel %vm168, %v152, %v184
  %v201 = vsel %vm169, %v153, %v185
  %v202 = vsel %vm170, %v154, %v186
  %v203 = vsel %vm171, %v155, %v187
  %v204 = vsel %vm172, %v156, %v188
  %v205 = vsel %vm173, %v157, %v189
  %v206 = vsel %vm174, %v158, %v190
  %v207 = vsel %vm175, %v159, %v191
  %v208 = vsel %vm176, %v160, %v192
  %v209 = vsel %vm177, %v161, %v193
  %v210 = vpack.c.bf16 %v194, %v194
  %v211 = vpack.c.bf16 %v195, %v195
  %v212 = vpack.c.bf16 %v196, %v196
  %v213 = vpack.c.bf16 %v197, %v197
  %v214 = vpack.c.bf16 %v198, %v198
  %v215 = vpack.c.bf16 %v199, %v199
  %v216 = vpack.c.bf16 %v200, %v200
  %v217 = vpack.c.bf16 %v201, %v201
  %v218 = vpack.c.bf16 %v202, %v202
  %v219 = vpack.c.bf16 %v203, %v203
  %v220 = vpack.c.bf16 %v204, %v204
  %v221 = vpack.c.bf16 %v205, %v205
  %v222 = vpack.c.bf16 %v206, %v206
  %v223 = vpack.c.bf16 %v207, %v207
  %v224 = vpack.c.bf16 %v208, %v208
  %v225 = vpack.c.bf16 %v209, %v209
  %226 = vst [vmem:[%s3] sm:$0xf] %v210
  %227 = vst [vmem:[%s3 + $0x4] sm:$0xf] %v211
  %228 = vst [vmem:[%s3 + $0x8] sm:$0xf] %v212
  %229 = vst [vmem:[%s3 + $0xc] sm:$0xf] %v213
  %230 = vst [vmem:[%s3 + $0x10] sm:$0xf] %v214
  %231 = vst [vmem:[%s3 + $0x14] sm:$0xf] %v215
  %232 = vst [vmem:[%s3 + $0x18] sm:$0xf] %v216
  %233 = vst [vmem:[%s3 + $0x1c] sm:$0xf] %v217
  %234 = vst [vmem:[%s3 + $0x20] sm:$0xf] %v218
  %235 = vst [vmem:[%s3 + $0x24] sm:$0xf] %v219
  %236 = vst [vmem:[%s3 + $0x28] sm:$0xf] %v220
  %237 = vst [vmem:[%s3 + $0x2c] sm:$0xf] %v221
  %238 = vst [vmem:[%s3 + $0x30] sm:$0xf] %v222
  %239 = vst [vmem:[%s3 + $0x34] sm:$0xf] %v223
  %240 = vst [vmem:[%s3 + $0x38] sm:$0xf] %v224
  %241 = vst [vmem:[%s3 + $0x3c] sm:$0xf] %v225
  // Predicated region
  $region14: #{discriminator_forward.8} parent=0 // pred_check
    _
  $region15: #{discriminator_forward.8} parent=0 // pred_check_branch
    %243 = sbr.rel (0) target = $region17
  $region16: #{discriminator_forward.8} parent=0 // pred_region
    _
  $region17: #{discriminator_forward.8} parent=0 // pred_fallthru
    _
  // Predicated region
  $region18: #{discriminator_forward.8} parent=0 // pred_check
    _
  $region19: #{discriminator_forward.8} parent=0 // pred_check_branch
    %245 = sbr.rel (0) target = $region21
  $region20: #{discriminator_forward.8} parent=0 // pred_region
    _
  $region21: #{discriminator_forward.8} parent=0 // pred_fallthru
    _

// kernel: discriminator_forward.10
$region0: #{discriminator_forward.10}
  #allocation0 [shape = 'u32[]', space=smem, size = 0x4, offset = 0x4, fixed_abs, tag = 'smem constant byte address 0x4 - core index']
  #allocation1 [shape = 'u32[72,128]{1,0:T(1,128)}', space=vmem, size = 0x9000, scoped, tag = 'internal scratch']
  %s0 = inlined_call_operand.vmem [shape: bf16[32,256], index: 0, kind: input, shape index: {}]
  %s1 = inlined_call_operand.vmem [shape: f32[1,256], index: 1, kind: input, shape index: {}]
  %s2 = inlined_call_operand.vmem [shape: f32[1,256], index: 2, kind: input, shape index: {}]
  %s3 = inlined_call_operand.vmem [shape: bf16[32,256], index: 3, kind: output, shape index: {}]
  %s4 = sld [smem:[#allocation0]]
  $region123: #{discriminator_forward.10} parent=0
    _
  %s6 = ssub.s32 1, %s4
  %s7 = scalar_select 0, %s6, %s4
  $region1: #{discriminator_forward.10} parent=0
    #allocation2 [shape = 'u8[16384]{0}', space=vmem, size = 0x4000, scoped, tag = 'input window, operand 0']
    #allocation3 [shape = 'u8[16384]{0}', space=vmem, size = 0x4000, scoped, tag = 'output window, operand 0']
    loop: start=0, step=1, limit=4
    $region2: #{discriminator_forward.10} parent=1 // loop_pre_header
      _
    $region3: #{discriminator_forward.10} parent=1 // loop_header
      %s9 = sphi 0, %s13
      %p10 = scmp.ge.s32.totalorder %s9, 4
      %s19 = sphi 0, %s21
      %s22 = sphi 0, %s19
      %s23 = sphi 0, %s22
      %s39 = sphi 0, %s23
      %s45 = sphi 0, %s47
      %s48 = sphi 0, %s45
      %s49 = sphi 0, %s48
      %s65 = sphi 0, %s49
      %s71 = sphi 0, %s73
      %s74 = sphi 0, %s71
      %s75 = sphi 0, %s74
      %s91 = sphi 0, %s75
      %s97 = sphi 0, %s99
      %s100 = sphi 0, %s97
      %s101 = sphi 0, %s100
      %s117 = sphi 0, %s101
    $region4: #{discriminator_forward.10} parent=1 // loop_header_branch
      %12 = sbr.rel (%p10) target = $region8
    $region5: #{discriminator_forward.10} parent=1 // loop_body
      %s14 = ssub.s32 %s9, 1
      %s15 = ssub.s32 %s9, 2
      %s16 = sadd.s32 %s9, 1
      %s17 = ssub.s32 %s9, %s16
      %p18 = scmp.eq.s32.totalorder %s17, 0
      %s20 = sadd.s32 %s19, 1
      %s21 = scalar_select %p18, %s19, %s20
      %p24 = pneg %p18
      %p25 = scmp.eq.s32.totalorder %s9, 1
      %p26 = por %p24, %p25
      %p27 = scmp.ne.s32.totalorder %s19, %s22
      %p28 = scmp.eq.s32.totalorder %s9, 0
      %p29 = por %p27, %p28
      %p30 = scmp.ne.s32.totalorder %s19, %s22
      %p31 = scmp.eq.s32.totalorder %s14, 1
      %p32 = por %p30, %p31
      %p33 = scmp.ne.s32.totalorder %s22, %s23
      %p34 = scmp.eq.s32.totalorder %s14, 0
      %p35 = por %p33, %p34
      %p36 = scmp.ne.s32.totalorder %s22, %s23
      %p37 = scmp.eq.s32.totalorder %s15, 1
      %p38 = por %p36, %p37
      %p40 = scmp.ne.s32.totalorder %s23, %s39
      %p41 = scmp.eq.s32.totalorder %s15, 0
      %p42 = por %p40, %p41
      %s43 = ssub.s32 %s9, %s16
      %p44 = scmp.eq.s32.totalorder %s43, 0
      %s46 = sadd.s32 %s45, 1
      %s47 = scalar_select %p44, %s45, %s46
      %p50 = pneg %p44
      %p51 = scmp.eq.s32.totalorder %s9, 1
      %p52 = por %p50, %p51
      %p53 = scmp.ne.s32.totalorder %s45, %s48
      %p54 = scmp.eq.s32.totalorder %s9, 0
      %p55 = por %p53, %p54
      %p56 = scmp.ne.s32.totalorder %s45, %s48
      %p57 = scmp.eq.s32.totalorder %s14, 1
      %p58 = por %p56, %p57
      %p59 = scmp.ne.s32.totalorder %s48, %s49
      %p60 = scmp.eq.s32.totalorder %s14, 0
      %p61 = por %p59, %p60
      %p62 = scmp.ne.s32.totalorder %s48, %s49
      %p63 = scmp.eq.s32.totalorder %s15, 1
      %p64 = por %p62, %p63
      %p66 = scmp.ne.s32.totalorder %s49, %s65
      %p67 = scmp.eq.s32.totalorder %s15, 0
      %p68 = por %p66, %p67
      %s69 = ssub.s32 %s9, %s16
      %p70 = scmp.eq.s32.totalorder %s69, 0
      %s72 = sadd.s32 %s71, 1
      %s73 = scalar_select %p70, %s71, %s72
      %p76 = pneg %p70
      %p77 = scmp.eq.s32.totalorder %s9, 1
      %p78 = por %p76, %p77
      %p79 = scmp.ne.s32.totalorder %s71, %s74
      %p80 = scmp.eq.s32.totalorder %s9, 0
      %p81 = por %p79, %p80
      %p82 = scmp.ne.s32.totalorder %s71, %s74
      %p83 = scmp.eq.s32.totalorder %s14, 1
      %p84 = por %p82, %p83
      %p85 = scmp.ne.s32.totalorder %s74, %s75
      %p86 = scmp.eq.s32.totalorder %s14, 0
      %p87 = por %p85, %p86
      %p88 = scmp.ne.s32.totalorder %s74, %s75
      %p89 = scmp.eq.s32.totalorder %s15, 1
      %p90 = por %p88, %p89
      %p92 = scmp.ne.s32.totalorder %s75, %s91
      %p93 = scmp.eq.s32.totalorder %s15, 0
      %p94 = por %p92, %p93
      %s95 = ssub.s32 %s9, %s16
      %p96 = scmp.eq.s32.totalorder %s95, 0
      %s98 = sadd.s32 %s97, 1
      %s99 = scalar_select %p96, %s97, %s98
      %p102 = pneg %p96
      %p103 = scmp.eq.s32.totalorder %s9, 1
      %p104 = por %p102, %p103
      %p105 = scmp.ne.s32.totalorder %s97, %s100
      %p106 = scmp.eq.s32.totalorder %s9, 0
      %p107 = por %p105, %p106
      %p108 = scmp.ne.s32.totalorder %s97, %s100
      %p109 = scmp.eq.s32.totalorder %s14, 1
      %p110 = por %p108, %p109
      %p111 = scmp.ne.s32.totalorder %s100, %s101
      %p112 = scmp.eq.s32.totalorder %s14, 0
      %p113 = por %p111, %p112
      %p114 = scmp.ne.s32.totalorder %s100, %s101
      %p115 = scmp.eq.s32.totalorder %s15, 1
      %p116 = por %p114, %p115
      %p118 = scmp.ne.s32.totalorder %s101, %s117
      %p119 = scmp.eq.s32.totalorder %s15, 0
      %p120 = por %p118, %p119
      %p121 = scmp.le.s32.totalorder 1, %s9
      %p122 = scmp.lt.s32.totalorder %s9, 3
      %p123 = pnand %p121, %p122
      %p124 = pneg %p123
      // Predicated region
      $region9: #{discriminator_forward.10} parent=5 // pred_check
        _
      $region10: #{discriminator_forward.10} parent=5 // pred_check_branch
        %126 = sbr.rel (%p123) target = $region12
      $region11: #{discriminator_forward.10} parent=5 // pred_region
        %s127 = ssub.s32 %s9, 1
      $region12: #{discriminator_forward.10} parent=5 // pred_fallthru
        _
      %p128 = scmp.lt.s32.totalorder %s9, 2
      // Predicated region
      $region13: #{discriminator_forward.10} parent=5 // pred_check
        %p129 = pneg %p128
      $region14: #{discriminator_forward.10} parent=5 // pred_check_branch
        %131 = sbr.rel (%p129) target = $region16
      $region15: #{discriminator_forward.10} parent=5 // pred_region
        // Predicated region
        $region17: #{discriminator_forward.10} parent=15 // pred_check
          %p132 = pneg %p29
        $region18: #{discriminator_forward.10} parent=15 // pred_check_branch
          %134 = sbr.rel (%p132) target = $region20
        $region19: #{discriminator_forward.10} parent=15 // pred_region
          %s135 = sand.u32 %s19, 1
          %s136 = sand.u32 %s19, 1
          %s137 = smul.addr %s136, 16
          %s138 = scalar_lea.vmem [#allocation2], %s137
          %s139 = smul.addr %s9, 4
          %s140 = scalar_lea.vmem %s0, %s139
          // Predicated region
          $region21: #{discriminator_forward.10} parent=19 // pred_check
            _
          $region22: #{discriminator_forward.10} parent=19 // pred_check_branch
            %142 = sbr.rel (0) target = $region24
          $region23: #{discriminator_forward.10} parent=19 // pred_region
            // Predicated region
            $region25: #{discriminator_forward.10} parent=23 // pred_check
              _
            $region26: #{discriminator_forward.10} parent=23 // pred_check_branch
              %144 = sbr.rel target = $region28
            $region27: #{discriminator_forward.10} parent=23 // pred_region
              // Predicated region
              $region40: #{discriminator_forward.10} parent=27 // pred_check
                _
              $region41: #{discriminator_forward.10} parent=27 // pred_check_branch
                %166 = sbr.rel (0) target = $region43
              $region42: #{discriminator_forward.10} parent=27 // pred_region
                loop: start=0, step=1, limit=1
                $region44: #{discriminator_forward.10} parent=42 // loop_pre_header
                  _
                $region45: #{discriminator_forward.10} parent=42 // loop_header
                  %s168 = sphi 0, %s172
                  %p169 = scmp.ge.s32.totalorder %s168, 1
                  %s173 = sphi %s140, %s140
                  %s174 = sphi %s138, %s138
                $region46: #{discriminator_forward.10} parent=42 // loop_header_branch
                  %171 = sbr.rel (%p169) target = $region50
                $region47: #{discriminator_forward.10} parent=42 // loop_body
                  _
                $region48: #{discriminator_forward.10} parent=42 // loop_footer
                  %s172 = sadd.s32 1, %s168
                $region49: #{discriminator_forward.10} parent=42 // loop_footer_branch
                  %167 = sbr.rel target = $region45
                $region50: #{discriminator_forward.10} parent=42 // loop_exit
                  _
                %s176 = ssub.s32 16, 1
                loop: start=0, step=1, limit=1
                $region51: #{discriminator_forward.10} parent=42 // loop_pre_header
                  _
                $region52: #{discriminator_forward.10} parent=42 // loop_header
                  %s178 = sphi 0, %s182
                  %p179 = scmp.ge.s32.totalorder %s178, 1
                  %s183 = sphi %s140, %s140
                  %s184 = sphi %s138, %s138
                $region53: #{discriminator_forward.10} parent=42 // loop_header_branch
                  %181 = sbr.rel (%p179) target = $region57
                $region54: #{discriminator_forward.10} parent=42 // loop_body
                  %v185 = vld [vmem:[%s183] sm:%s176]
                  %186 = vst [vmem:[%s184] sm:%s176] %v185
                  %v187 = vld [vmem:[%s183 + $0x8] sm:%s176]
                  %188 = vst [vmem:[%s184 + $0x4] sm:%s176] %v187
                  %v189 = vld [vmem:[%s183 + $0x10] sm:%s176]
                  %190 = vst [vmem:[%s184 + $0x8] sm:%s176] %v189
                  %v191 = vld [vmem:[%s183 + $0x18] sm:%s176]
                  %192 = vst [vmem:[%s184 + $0xc] sm:%s176] %v191
                $region55: #{discriminator_forward.10} parent=42 // loop_footer
                  %s182 = sadd.s32 1, %s178
                $region56: #{discriminator_forward.10} parent=42 // loop_footer_branch
                  %177 = sbr.rel target = $region52
                $region57: #{discriminator_forward.10} parent=42 // loop_exit
                  _
              $region43: #{discriminator_forward.10} parent=27 // pred_fallthru
                _
            $region28: #{discriminator_forward.10} parent=23 // pred_fallthru
              _
            // Predicated region
            $region29: #{discriminator_forward.10} parent=23 // pred_check
              _
            $region30: #{discriminator_forward.10} parent=23 // pred_check_branch
              %146 = sbr.rel (0) target = $region32
            $region31: #{discriminator_forward.10} parent=23 // pred_region
              %s148 = ssub.s32 16, 1
              loop: start=0, step=1, limit=1
              $region33: #{discriminator_forward.10} parent=31 // loop_pre_header
                _
              $region34: #{discriminator_forward.10} parent=31 // loop_header
                %s150 = sphi 0, %s154
                %p151 = scmp.ge.s32.totalorder %s150, 1
                %s155 = sphi %s140, %s140
                %s156 = sphi %s138, %s138
              $region35: #{discriminator_forward.10} parent=31 // loop_header_branch
                %153 = sbr.rel (%p151) target = $region39
              $region36: #{discriminator_forward.10} parent=31 // loop_body
                %v157 = vld [vmem:[%s155] sm:%s148]
                %158 = vst [vmem:[%s156] sm:%s148] %v157
                %v159 = vld [vmem:[%s155 + $0x8] sm:%s148]
                %160 = vst [vmem:[%s156 + $0x4] sm:%s148] %v159
                %v161 = vld [vmem:[%s155 + $0x10] sm:%s148]
                %162 = vst [vmem:[%s156 + $0x8] sm:%s148] %v161
                %v163 = vld [vmem:[%s155 + $0x18] sm:%s148]
                %164 = vst [vmem:[%s156 + $0xc] sm:%s148] %v163
              $region37: #{discriminator_forward.10} parent=31 // loop_footer
                %s154 = sadd.s32 1, %s150
              $region38: #{discriminator_forward.10} parent=31 // loop_footer_branch
                %149 = sbr.rel target = $region34
              $region39: #{discriminator_forward.10} parent=31 // loop_exit
                _
            $region32: #{discriminator_forward.10} parent=23 // pred_fallthru
              _
          $region24: #{discriminator_forward.10} parent=19 // pred_fallthru
            _
          %193 = vnop
        $region20: #{discriminator_forward.10} parent=15 // pred_fallthru
          _
        // Predicated region
        $region58: #{discriminator_forward.10} parent=15 // pred_check
          %p194 = pneg %p55
        $region59: #{discriminator_forward.10} parent=15 // pred_check_branch
          %196 = sbr.rel (%p194) target = $region61
        $region60: #{discriminator_forward.10} parent=15 // pred_region
          %p197 = scmp.lt.s32.totalorder %s9, 1
          %s198 = scalar_select %p197, %s9, 1
          %s199 = scalar_lea.vmem %s1, %s198
        $region61: #{discriminator_forward.10} parent=15 // pred_fallthru
          _
        // Predicated region
        $region62: #{discriminator_forward.10} parent=15 // pred_check
          %p200 = pneg %p81
        $region63: #{discriminator_forward.10} parent=15 // pred_check_branch
          %202 = sbr.rel (%p200) target = $region65
        $region64: #{discriminator_forward.10} parent=15 // pred_region
          %p203 = scmp.lt.s32.totalorder %s9, 1
          %s204 = scalar_select %p203, %s9, 1
          %s205 = scalar_lea.vmem %s2, %s204
        $region65: #{discriminator_forward.10} parent=15 // pred_fallthru
          _
      $region16: #{discriminator_forward.10} parent=5 // pred_fallthru
        _
      %p206 = scmp.le.s32.totalorder 1, %s9
      %p207 = scmp.lt.s32.totalorder %s9, 3
      %p208 = pnand %p206, %p207
      %p209 = pneg %p208
      // Predicated region
      $region66: #{discriminator_forward.10} parent=5 // pred_check
        _
      $region67: #{discriminator_forward.10} parent=5 // pred_check_branch
        %211 = sbr.rel (%p208) target = $region69
      $region68: #{discriminator_forward.10} parent=5 // pred_region
        %s212 = ssub.s32 %s9, 1
        %s213 = sand.u32 %s22, 1
        %s214 = sand.u32 %s22, 1
        %s215 = smul.addr %s214, 16
        %s216 = scalar_lea.vmem [#allocation2], %s215
        // Predicated region
        $region70: #{discriminator_forward.10} parent=68 // pred_check
          %p217 = pneg %p35
        $region71: #{discriminator_forward.10} parent=68 // pred_check_branch
          %219 = sbr.rel (%p217) target = $region73
        $region72: #{discriminator_forward.10} parent=68 // pred_region
          _
        $region73: #{discriminator_forward.10} parent=68 // pred_fallthru
          _
        %s220 = sand.u32 %s22, 1
        %s221 = sand.u32 %s22, 1
        %s222 = smul.addr %s221, 16
        %s223 = scalar_lea.vmem [#allocation2], %s222
        %p224 = pneg %p35
        %p225 = pneg %p32
        %p226 = scmp.lt.s32.totalorder %s14, 1
        %s227 = scalar_select %p226, %s14, 1
        %s228 = scalar_lea.vmem %s1, %s227
        %p229 = pneg %p61
        %p230 = pneg %p58
        %p231 = scmp.lt.s32.totalorder %s14, 1
        %s232 = scalar_select %p231, %s14, 1
        %s233 = scalar_lea.vmem %s2, %s232
        %p234 = pneg %p87
        %p235 = pneg %p84
        %p236 = pneg %p113
        %p237 = pneg %p110
        %s238 = sand.u32 %s100, 1
        %s239 = sand.u32 %s100, 1
        %s240 = smul.addr %s239, 16
        %s241 = scalar_lea.vmem [#allocation3], %s240
        %p242 = scmp.lt.s32.totalorder %s14, 1
        %s243 = scalar_select %p242, %s14, 1
        %s244 = scalar_lea.vmem %s1, %s243
        %p245 = scmp.lt.s32.totalorder %s14, 1
        %s246 = scalar_select %p245, %s14, 1
        %s247 = scalar_lea.vmem %s2, %s246
        %v248 = vld [vmem:[%s216] sm:$0xf]
        %v249 = vld [vmem:[%s216 + $0x4] sm:$0xf]
        %v250 = vld [vmem:[%s216 + $0x8] sm:$0xf]
        %v251 = vld [vmem:[%s216 + $0xc] sm:$0xf]
        %v252 = vunpack.c.l.bf16 %v248
        %v253 = vunpack.c.l.bf16 %v249
        %v254 = vunpack.c.l.bf16 %v250
        %v255 = vunpack.c.l.bf16 %v251
        %v256 = vadd.f32 %v252, %v253
        %v257 = vadd.f32 %v256, %v254
        %v258 = vadd.f32 %v257, %v255
        %v259 = vrot.slane %v258, 4
        %v260 = vadd.f32 %v258, %v259
        %v261 = vrot.slane %v260, 2
        %v262 = vadd.f32 %v260, %v261
        %v263 = vrot.slane %v262, 1
        %v264 = vadd.f32 %v262, %v263
        %v265 = vmul.f32 %v252, %v252
        %v266 = vmul.f32 %v253, %v253
        %v267 = vmul.f32 %v254, %v254
        %v268 = vmul.f32 %v255, %v255
        %v269 = vadd.f32 %v265, %v266
        %v270 = vadd.f32 %v269, %v267
        %v271 = vadd.f32 %v270, %v268
        %v272 = vrot.slane %v271, 4
        %v273 = vadd.f32 %v271, %v272
        %v274 = vrot.slane %v273, 2
        %v275 = vadd.f32 %v273, %v274
        %v276 = vrot.slane %v275, 1
        %v277 = vadd.f32 %v275, %v276
        %v278 = vmul.f32 %v264, 0.03125
        %v279 = vmul.f32 %v277, 0.03125
        %v280 = vmul.f32 %v278, %v278
        %v281 = vsub.f32 %v279, %v280
        %v282 = vld [vmem:[%s244] sm:$0x1]
        %v283 = vadd.f32 %v281, 1e-05
        %v284 = vrsqrt.pop %v283
        %v285 = vmul.f32 %v284, %v283
        %v286 = vmul.f32 %v285, %v284
        %v287 = vmul.f32 0.5, %v286
        %v288 = vsub.f32 1.5, %v287
        %v289 = vmul.f32 %v284, %v288
        %vm290 = vweird.f32 %v283
        %vm291 = vweird.f32 %v284
        %vm292 = vmor %vm290, %vm291
        %v293 = vsel %vm292, %v284, %v289
        %v294 = vmul.f32 %v282, %v293
        %v295 = vld [vmem:[%s247] sm:$0x1]
        %v296 = vmul.f32 %v278, %v294
        %v297 = vsub.f32 %v295, %v296
        %v299 = vperm.slane %v294, 0
        %v301 = vmul.f32 %v252, %v299
        %v302 = vmul.f32 %v253, %v299
        %v303 = vmul.f32 %v254, %v299
        %v304 = vmul.f32 %v255, %v299
        %v306 = vperm.slane %v297, 0
        %v308 = vadd.f32 %v301, %v306
        %v309 = vadd.f32 %v302, %v306
        %v310 = vadd.f32 %v303, %v306
        %v311 = vadd.f32 %v304, %v306
        %vm312 = vcmp.ge.f32.partialorder %v308, 0.0
        %vm313 = vcmp.ge.f32.partialorder %v309, 0.0
        %vm314 = vcmp.ge.f32.partialorder %v310, 0.0
        %vm315 = vcmp.ge.f32.partialorder %v311, 0.0
        %v316 = vmul.f32 %v308, 0.2
        %v317 = vmul.f32 %v309, 0.2
        %v318 = vmul.f32 %v310, 0.2
        %v319 = vmul.f32 %v311, 0.2
        %v320 = vsel %vm312, %v308, %v316
        %v321 = vsel %vm313, %v309, %v317
        %v322 = vsel %vm314, %v310, %v318
        %v323 = vsel %vm315, %v311, %v319
        %v324 = vpack.c.bf16 %v320, %v320
        %v325 = vpack.c.bf16 %v321, %v321
        %v326 = vpack.c.bf16 %v322, %v322
        %v327 = vpack.c.bf16 %v323, %v323
        %328 = vst [vmem:[%s241] sm:$0xf] %v324
        %329 = vst [vmem:[%s241 + $0x4] sm:$0xf] %v325
        %330 = vst [vmem:[%s241 + $0x8] sm:$0xf] %v326
        %331 = vst [vmem:[%s241 + $0xc] sm:$0xf] %v327
        %s332 = sand.u32 %s100, 1
        %s333 = sand.u32 %s100, 1
        %s334 = smul.addr %s333, 16
        %s335 = scalar_lea.vmem [#allocation3], %s334
        // Predicated region
        $region74: #{discriminator_forward.10} parent=68 // pred_check
          %p336 = pneg %p110
        $region75: #{discriminator_forward.10} parent=68 // pred_check_branch
          %338 = sbr.rel (%p336) target = $region77
        $region76: #{discriminator_forward.10} parent=68 // pred_region
          %s339 = smul.addr %s14, 4
          %s340 = scalar_lea.vmem %s3, %s339
          // Predicated region
          $region78: #{discriminator_forward.10} parent=76 // pred_check
            _
          $region79: #{discriminator_forward.10} parent=76 // pred_check_branch
            %342 = sbr.rel (0) target = $region81
          $region80: #{discriminator_forward.10} parent=76 // pred_region
            // Predicated region
            $region82: #{discriminator_forward.10} parent=80 // pred_check
              _
            $region83: #{discriminator_forward.10} parent=80 // pred_check_branch
              %344 = sbr.rel target = $region85
            $region84: #{discriminator_forward.10} parent=80 // pred_region
              // Predicated region
              $region97: #{discriminator_forward.10} parent=84 // pred_check
                _
              $region98: #{discriminator_forward.10} parent=84 // pred_check_branch
                %366 = sbr.rel (0) target = $region100
              $region99: #{discriminator_forward.10} parent=84 // pred_region
                loop: start=0, step=1, limit=1
                $region101: #{discriminator_forward.10} parent=99 // loop_pre_header
                  _
                $region102: #{discriminator_forward.10} parent=99 // loop_header
                  %s368 = sphi 0, %s372
                  %p369 = scmp.ge.s32.totalorder %s368, 1
                  %s373 = sphi %s335, %s335
                  %s374 = sphi %s340, %s340
                $region103: #{discriminator_forward.10} parent=99 // loop_header_branch
                  %371 = sbr.rel (%p369) target = $region107
                $region104: #{discriminator_forward.10} parent=99 // loop_body
                  _
                $region105: #{discriminator_forward.10} parent=99 // loop_footer
                  %s372 = sadd.s32 1, %s368
                $region106: #{discriminator_forward.10} parent=99 // loop_footer_branch
                  %367 = sbr.rel target = $region102
                $region107: #{discriminator_forward.10} parent=99 // loop_exit
                  _
                %s376 = ssub.s32 16, 1
                loop: start=0, step=1, limit=1
                $region108: #{discriminator_forward.10} parent=99 // loop_pre_header
                  _
                $region109: #{discriminator_forward.10} parent=99 // loop_header
                  %s378 = sphi 0, %s382
                  %p379 = scmp.ge.s32.totalorder %s378, 1
                  %s383 = sphi %s335, %s335
                  %s384 = sphi %s340, %s340
                $region110: #{discriminator_forward.10} parent=99 // loop_header_branch
                  %381 = sbr.rel (%p379) target = $region114
                $region111: #{discriminator_forward.10} parent=99 // loop_body
                  %v385 = vld [vmem:[%s383] sm:%s376]
                  %386 = vst [vmem:[%s384] sm:%s376] %v385
                  %v387 = vld [vmem:[%s383 + $0x4] sm:%s376]
                  %388 = vst [vmem:[%s384 + $0x8] sm:%s376] %v387
                  %v389 = vld [vmem:[%s383 + $0x8] sm:%s376]
                  %390 = vst [vmem:[%s384 + $0x10] sm:%s376] %v389
                  %v391 = vld [vmem:[%s383 + $0xc] sm:%s376]
                  %392 = vst [vmem:[%s384 + $0x18] sm:%s376] %v391
                $region112: #{discriminator_forward.10} parent=99 // loop_footer
                  %s382 = sadd.s32 1, %s378
                $region113: #{discriminator_forward.10} parent=99 // loop_footer_branch
                  %377 = sbr.rel target = $region109
                $region114: #{discriminator_forward.10} parent=99 // loop_exit
                  _
              $region100: #{discriminator_forward.10} parent=84 // pred_fallthru
                _
            $region85: #{discriminator_forward.10} parent=80 // pred_fallthru
              _
            // Predicated region
            $region86: #{discriminator_forward.10} parent=80 // pred_check
              _
            $region87: #{discriminator_forward.10} parent=80 // pred_check_branch
              %346 = sbr.rel (0) target = $region89
            $region88: #{discriminator_forward.10} parent=80 // pred_region
              %s348 = ssub.s32 16, 1
              loop: start=0, step=1, limit=1
              $region90: #{discriminator_forward.10} parent=88 // loop_pre_header
                _
              $region91: #{discriminator_forward.10} parent=88 // loop_header
                %s350 = sphi 0, %s354
                %p351 = scmp.ge.s32.totalorder %s350, 1
                %s355 = sphi %s335, %s335
                %s356 = sphi %s340, %s340
              $region92: #{discriminator_forward.10} parent=88 // loop_header_branch
                %353 = sbr.rel (%p351) target = $region96
              $region93: #{discriminator_forward.10} parent=88 // loop_body
                %v357 = vld [vmem:[%s355] sm:%s348]
                %358 = vst [vmem:[%s356] sm:%s348] %v357
                %v359 = vld [vmem:[%s355 + $0x4] sm:%s348]
                %360 = vst [vmem:[%s356 + $0x8] sm:%s348] %v359
                %v361 = vld [vmem:[%s355 + $0x8] sm:%s348]
                %362 = vst [vmem:[%s356 + $0x10] sm:%s348] %v361
                %v363 = vld [vmem:[%s355 + $0xc] sm:%s348]
                %364 = vst [vmem:[%s356 + $0x18] sm:%s348] %v363
              $region94: #{discriminator_forward.10} parent=88 // loop_footer
                %s354 = sadd.s32 1, %s350
              $region95: #{discriminator_forward.10} parent=88 // loop_footer_branch
                %349 = sbr.rel target = $region91
              $region96: #{discriminator_forward.10} parent=88 // loop_exit
                _
            $region89: #{discriminator_forward.10} parent=80 // pred_fallthru
              _
          $region81: #{discriminator_forward.10} parent=76 // pred_fallthru
            _
          %393 = vnop
        $region77: #{discriminator_forward.10} parent=68 // pred_fallthru
          _
      $region69: #{discriminator_forward.10} parent=5 // pred_fallthru
        _
      %p394 = scmp.le.s32.totalorder 2, %s9
      // Predicated region
      $region115: #{discriminator_forward.10} parent=5 // pred_check
        %p395 = pneg %p394
      $region116: #{discriminator_forward.10} parent=5 // pred_check_branch
        %397 = sbr.rel (%p395) target = $region118
      $region117: #{discriminator_forward.10} parent=5 // pred_region
        %s398 = ssub.s32 %s9, 2
        // Predicated region
        $region119: #{discriminator_forward.10} parent=117 // pred_check
          %p399 = pneg %p116
        $region120: #{discriminator_forward.10} parent=117 // pred_check_branch
          %401 = sbr.rel (%p399) target = $region122
        $region121: #{discriminator_forward.10} parent=117 // pred_region
          %s402 = sand.u32 %s101, 1
          %s403 = sand.u32 %s101, 1
          %s404 = smul.addr %s403, 16
          %s405 = scalar_lea.vmem [#allocation3], %s404
        $region122: #{discriminator_forward.10} parent=117 // pred_fallthru
          _
      $region118: #{discriminator_forward.10} parent=5 // pred_fallthru
        _
    $region6: #{discriminator_forward.10} parent=1 // loop_footer
      %s13 = sadd.s32 1, %s9
    $region7: #{discriminator_forward.10} parent=1 // loop_footer_branch
      %8 = sbr.rel target = $region3
    $region8: #{discriminator_forward.10} parent=1 // loop_exit
      _

// kernel: discriminator_forward.9
$region0: #{discriminator_forward.9}
  #allocation0 [shape = 'u32[]', space=smem, size = 0x4, offset = 0x4, fixed_abs, tag = 'smem constant byte address 0x4 - core index']
  #allocation1 [shape = 'u32[72,128]{1,0:T(1,128)}', space=vmem, size = 0x9000, scoped, tag = 'internal scratch']
  #allocation2 [shape = 'f32[32,128]{1,0:T(8,128)}', space=vmem, size = 0x4000, scoped, tag = 'scratch operand']
  %s0 = inlined_call_operand.vmem [shape: bf16[32,2048], index: 0, kind: input, shape index: {}]
  %s1 = inlined_call_operand.vmem [shape: bf16[2048,256], index: 1, kind: input, shape index: {}]
  %s2 = inlined_call_operand.vmem [shape: f32[1,256], index: 2, kind: input, shape index: {}]
  %s3 = inlined_call_operand.vmem [shape: bf16[32,256], index: 3, kind: output, shape index: {}]
  %s4 = sld [smem:[#allocation0]]
  $region154: #{discriminator_forward.9} parent=0
    _
  %s6 = ssub.s32 1, %s4
  %s7 = scalar_select 0, %s6, %s4
  $region1: #{discriminator_forward.9} parent=0
    #allocation3 [shape = 'u8[65536]{0}', space=vmem, size = 0x10000, scoped, tag = 'input window, operand 0']
    #allocation4 [shape = 'u8[262144]{0}', space=vmem, size = 0x40000, scoped, tag = 'input window, operand 1']
    #allocation5 [shape = 'u8[16384]{0}', space=vmem, size = 0x4000, scoped, tag = 'output window, operand 0']
    loop: start=0, step=1, limit=10
    $region2: #{discriminator_forward.9} parent=1 // loop_pre_header
      _
    $region3: #{discriminator_forward.9} parent=1 // loop_header
      %s9 = sphi 0, %s13
      %p10 = scmp.ge.s32.totalorder %s9, 10
      %s16 = sphi 0, %s35
      %s17 = sphi 0, %s31
      %s18 = sphi 0, %s27
      %s19 = sphi 0, %s16
      %s20 = sphi 0, %s17
      %s21 = sphi 0, %s18
      %s22 = sphi 0, %s19
      %s23 = sphi 0, %s20
      %s24 = sphi 0, %s21
      %s40 = sphi 0, %s42
      %s43 = sphi 0, %s40
      %s44 = sphi 0, %s43
      %s60 = sphi 0, %s44
      %s68 = sphi 0, %s70
      %s71 = sphi 0, %s68
      %s72 = sphi 0, %s71
      %s88 = sphi 0, %s72
      %s94 = sphi 0, %s96
      %s97 = sphi 0, %s94
      %s98 = sphi 0, %s97
      %s114 = sphi 0, %s98
      %s122 = sphi 0, %s124
      %s125 = sphi 0, %s122
      %s126 = sphi 0, %s125
      %s142 = sphi 0, %s126
    $region4: #{discriminator_forward.9} parent=1 // loop_header_branch
      %12 = sbr.rel (%p10) target = $region8
    $region5: #{discriminator_forward.9} parent=1 // loop_body
      %s14 = ssub.s32 %s9, 1
      %s15 = ssub.s32 %s9, 2
      %s25 = sadd.s32 1, %s18
      %p26 = scmp.ge.s32.totalorder %s25, 4
      %s27 = scalar_select %p26, 0, %s25
      %s28 = sadd.s32 1, %s17
      %s29 = scalar_select %p26, %s28, %s17
      %p30 = scmp.ge.s32.totalorder %s29, 2
      %s31 = scalar_select %p30, 0, %s29
      %s32 = sadd.s32 1, %s16
      %s33 = scalar_select %p30, %s32, %s16
      %p34 = scmp.ge.s32.totalorder %s33, 1
      %s35 = scalar_select %p34, 0, %s33
      %s36 = ssub.s32 %s16, %s35
      %s37 = ssub.s32 %s18, %s27
      %s38 = sor.u32 %s36, %s37
      %p39 = scmp.eq.s32.totalorder %s38, 0
      %s41 = sadd.s32 %s40, 1
      %s42 = scalar_select %p39, %s40, %s41
      %p45 = pneg %p39
      %p46 = scmp.eq.s32.totalorder %s9, 7
      %p47 = por %p45, %p46
      %p48 = scmp.ne.s32.totalorder %s40, %s43
      %p49 = scmp.eq.s32.totalorder %s9, 0
      %p50 = por %p48, %p49
      %p51 = scmp.ne.s32.totalorder %s40, %s43
      %p52 = scmp.eq.s32.totalorder %s14, 7
      %p53 = por %p51, %p52
      %p54 = scmp.ne.s32.totalorder %s43, %s44
      %p55 = scmp.eq.s32.totalorder %s14, 0
      %p56 = por %p54, %p55
      %p57 = scmp.ne.s32.totalorder %s43, %s44
      %p58 = scmp.eq.s32.totalorder %s15, 7
      %p59 = por %p57, %p58
      %p61 = scmp.ne.s32.totalorder %s44, %s60
      %p62 = scmp.eq.s32.totalorder %s15, 0
      %p63 = por %p61, %p62
      %s64 = ssub.s32 %s18, %s27
      %s65 = ssub.s32 %s17, %s31
      %s66 = sor.u32 %s64, %s65
      %p67 = scmp.eq.s32.totalorder %s66, 0
      %s69 = sadd.s32 %s68, 1
      %s70 = scalar_select %p67, %s68, %s69
      %p73 = pneg %p67
      %p74 = scmp.eq.s32.totalorder %s9, 7
      %p75 = por %p73, %p74
      %p76 = scmp.ne.s32.totalorder %s68, %s71
      %p77 = scmp.eq.s32.totalorder %s9, 0
      %p78 = por %p76, %p77
      %p79 = scmp.ne.s32.totalorder %s68, %s71
      %p80 = scmp.eq.s32.totalorder %s14, 7
      %p81 = por %p79, %p80
      %p82 = scmp.ne.s32.totalorder %s71, %s72
      %p83 = scmp.eq.s32.totalorder %s14, 0
      %p84 = por %p82, %p83
      %p85 = scmp.ne.s32.totalorder %s71, %s72
      %p86 = scmp.eq.s32.totalorder %s15, 7
      %p87 = por %p85, %p86
      %p89 = scmp.ne.s32.totalorder %s72, %s88
      %p90 = scmp.eq.s32.totalorder %s15, 0
      %p91 = por %p89, %p90
      %s92 = ssub.s32 %s17, %s31
      %p93 = scmp.eq.s32.totalorder %s92, 0
      %s95 = sadd.s32 %s94, 1
      %s96 = scalar_select %p93, %s94, %s95
      %p99 = pneg %p93
      %p100 = scmp.eq.s32.totalorder %s9, 7
      %p101 = por %p99, %p100
      %p102 = scmp.ne.s32.totalorder %s94, %s97
      %p103 = scmp.eq.s32.totalorder %s9, 0
      %p104 = por %p102, %p103
      %p105 = scmp.ne.s32.totalorder %s94, %s97
      %p106 = scmp.eq.s32.totalorder %s14, 7
      %p107 = por %p105, %p106
      %p108 = scmp.ne.s32.totalorder %s97, %s98
      %p109 = scmp.eq.s32.totalorder %s14, 0
      %p110 = por %p108, %p109
      %p111 = scmp.ne.s32.totalorder %s97, %s98
      %p112 = scmp.eq.s32.totalorder %s15, 7
      %p113 = por %p111, %p112
      %p115 = scmp.ne.s32.totalorder %s98, %s114
      %p116 = scmp.eq.s32.totalorder %s15, 0
      %p117 = por %p115, %p116
      %s118 = ssub.s32 %s16, %s35
      %s119 = ssub.s32 %s17, %s31
      %s120 = sor.u32 %s118, %s119
      %p121 = scmp.eq.s32.totalorder %s120, 0
      %s123 = sadd.s32 %s122, 1
      %s124 = scalar_select %p121, %s122, %s123
      %p127 = pneg %p121
      %p128 = scmp.eq.s32.totalorder %s9, 7
      %p129 = por %p127, %p128
      %p130 = scmp.ne.s32.totalorder %s122, %s125
      %p131 = scmp.eq.s32.totalorder %s9, 0
      %p132 = por %p130, %p131
      %p133 = scmp.ne.s32.totalorder %s122, %s125
      %p134 = scmp.eq.s32.totalorder %s14, 7
      %p135 = por %p133, %p134
      %p136 = scmp.ne.s32.totalorder %s125, %s126
      %p137 = scmp.eq.s32.totalorder %s14, 0
      %p138 = por %p136, %p137
      %p139 = scmp.ne.s32.totalorder %s125, %s126
      %p140 = scmp.eq.s32.totalorder %s15, 7
      %p141 = por %p139, %p140
      %p143 = scmp.ne.s32.totalorder %s126, %s142
      %p144 = scmp.eq.s32.totalorder %s15, 0
      %p145 = por %p143, %p144
      %p146 = scmp.le.s32.totalorder 1, %s9
      %p147 = scmp.lt.s32.totalorder %s9, 9
      %p148 = pnand %p146, %p147
      %p149 = pneg %p148
      // Predicated region
      $region9: #{discriminator_forward.9} parent=5 // pred_check
        _
      $region10: #{discriminator_forward.9} parent=5 // pred_check_branch
        %151 = sbr.rel (%p148) target = $region12
      $region11: #{discriminator_forward.9} parent=5 // pred_region
        %s152 = ssub.s32 %s9, 1
      $region12: #{discriminator_forward.9} parent=5 // pred_fallthru
        _
      %p153 = scmp.lt.s32.totalorder %s9, 8
      // Predicated region
      $region13: #{discriminator_forward.9} parent=5 // pred_check
        %p154 = pneg %p153
      $region14: #{discriminator_forward.9} parent=5 // pred_check_branch
        %156 = sbr.rel (%p154) target = $region16
      $region15: #{discriminator_forward.9} parent=5 // pred_region
        // Predicated region
        $region17: #{discriminator_forward.9} parent=15 // pred_check
          %p157 = pneg %p50
        $region18: #{discriminator_forward.9} parent=15 // pred_check_branch
          %159 = sbr.rel (%p157) target = $region20
        $region19: #{discriminator_forward.9} parent=15 // pred_region
          %s160 = sand.u32 %s40, 1
          %s161 = sand.u32 %s40, 1
          %s162 = smul.addr %s161, 64
          %s163 = scalar_lea.vmem [#allocation3], %s162
          %s164 = smul.u32 4, %s16
          %s165 = smul.u32 4, %s18
          %s166 = smul.addr %s164, 16
          %s167 = sadd.s32 %s165, %s166
          %s168 = smul.addr %s167, 4
          %s169 = scalar_lea.vmem %s0, %s168
          // Predicated region
          $region21: #{discriminator_forward.9} parent=19 // pred_check
            _
          $region22: #{discriminator_forward.9} parent=19 // pred_check_branch
            %171 = sbr.rel (0) target = $region24
          $region23: #{discriminator_forward.9} parent=19 // pred_region
            // Predicated region
            $region25: #{discriminator_forward.9} parent=23 // pred_check
              _
            $region26: #{discriminator_forward.9} parent=23 // pred_check_branch
              %173 = sbr.rel (0) target = $region28
            $region27: #{discriminator_forward.9} parent=23 // pred_region
              loop: start=0, step=1, limit=1
              $region29: #{discriminator_forward.9} parent=27 // loop_pre_header
                _
              $region30: #{discriminator_forward.9} parent=27 // loop_header
                %s175 = sphi 0, %s179
                %p176 = scmp.ge.s32.totalorder %s175, 1
                %s180 = sphi %s169, %s169
                %s181 = sphi %s163, %s163
              $region31: #{discriminator_forward.9} parent=27 // loop_header_branch
                %178 = sbr.rel (%p176) target = $region35
              $region32: #{discriminator_forward.9} parent=27 // loop_body
                %v182 = vld [vmem:[%s180] sm:$0xff]
                %183 = vst [vmem:[%s181] sm:$0xff] %v182
                %v184 = vld [vmem:[%s180 + $0x8] sm:$0xff]
                %185 = vst [vmem:[%s181 + $0x8] sm:$0xff] %v184
                %v186 = vld [vmem:[%s180 + $0x40] sm:$0xff]
                %187 = vst [vmem:[%s181 + $0x10] sm:$0xff] %v186
                %v188 = vld [vmem:[%s180 + $0x48] sm:$0xff]
                %189 = vst [vmem:[%s181 + $0x18] sm:$0xff] %v188
                %v190 = vld [vmem:[%s180 + $0x80] sm:$0xff]
                %191 = vst [vmem:[%s181 + $0x20] sm:$0xff] %v190
                %v192 = vld [vmem:[%s180 + $0x88] sm:$0xff]
                %193 = vst [vmem:[%s181 + $0x28] sm:$0xff] %v192
                %v194 = vld [vmem:[%s180 + $0xc0] sm:$0xff]
                %195 = vst [vmem:[%s181 + $0x30] sm:$0xff] %v194
                %v196 = vld [vmem:[%s180 + $0xc8] sm:$0xff]
                %197 = vst [vmem:[%s181 + $0x38] sm:$0xff] %v196
              $region33: #{discriminator_forward.9} parent=27 // loop_footer
                %s179 = sadd.s32 1, %s175
              $region34: #{discriminator_forward.9} parent=27 // loop_footer_branch
                %174 = sbr.rel target = $region30
              $region35: #{discriminator_forward.9} parent=27 // loop_exit
                _
            $region28: #{discriminator_forward.9} parent=23 // pred_fallthru
              _
            // Predicated region
            $region36: #{discriminator_forward.9} parent=23 // pred_check
              _
            $region37: #{discriminator_forward.9} parent=23 // pred_check_branch
              %199 = sbr.rel target = $region39
            $region38: #{discriminator_forward.9} parent=23 // pred_region
              _
            $region39: #{discriminator_forward.9} parent=23 // pred_fallthru
              _
          $region24: #{discriminator_forward.9} parent=19 // pred_fallthru
            _
          %200 = vnop
        $region20: #{discriminator_forward.9} parent=15 // pred_fallthru
          _
        // Predicated region
        $region40: #{discriminator_forward.9} parent=15 // pred_check
          %p201 = pneg %p78
        $region41: #{discriminator_forward.9} parent=15 // pred_check_branch
          %203 = sbr.rel (%p201) target = $region43
        $region42: #{discriminator_forward.9} parent=15 // pred_region
          %s204 = sand.u32 %s68, 1
          %s205 = sand.u32 %s68, 1
          %s206 = smul.addr %s205, 256
          %s207 = scalar_lea.vmem [#allocation4], %s206
          %s208 = smul.u32 64, %s18
          %s209 = smul.addr %s208, 2
          %s210 = sadd.s32 %s17, %s209
          %s211 = smul.addr %s210, 4
          %s212 = scalar_lea.vmem %s1, %s211
          // Predicated region
          $region44: #{discriminator_forward.9} parent=42 // pred_check
            _
          $region45: #{discriminator_forward.9} parent=42 // pred_check_branch
            %214 = sbr.rel (0) target = $region47
          $region46: #{discriminator_forward.9} parent=42 // pred_region
            // Predicated region
            $region48: #{discriminator_forward.9} parent=46 // pred_check
              _
            $region49: #{discriminator_forward.9} parent=46 // pred_check_branch
              %216 = sbr.rel target = $region51
            $region50: #{discriminator_forward.9} parent=46 // pred_region
              // Predicated region
              $region63: #{discriminator_forward.9} parent=50 // pred_check
                _
              $region64: #{discriminator_forward.9} parent=50 // pred_check_branch
                %358 = sbr.rel (0) target = $region66
              $region65: #{discriminator_forward.9} parent=50 // pred_region
                loop: start=0, step=1, limit=1
                $region67: #{discriminator_forward.9} parent=65 // loop_pre_header
                  _
                $region68: #{discriminator_forward.9} parent=65 // loop_header
                  %s360 = sphi 0, %s364
                  %p361 = scmp.ge.s32.totalorder %s360, 1
                  %s365 = sphi %s212, %s212
                  %s366 = sphi %s207, %s207
                $region69: #{discriminator_forward.9} parent=65 // loop_header_branch
                  %363 = sbr.rel (%p361) target = $region73
                $region70: #{discriminator_forward.9} parent=65 // loop_body
                  _
                $region71: #{discriminator_forward.9} parent=65 // loop_footer
                  %s364 = sadd.s32 1, %s360
                $region72: #{discriminator_forward.9} parent=65 // loop_footer_branch
                  %359 = sbr.rel target = $region68
                $region73: #{discriminator_forward.9} parent=65 // loop_exit
                  _
                %s368 = ssub.s32 16, 1
                loop: start=0, step=1, limit=1
                $region74: #{discriminator_forward.9} parent=65 // loop_pre_header
                  _
                $region75: #{discriminator_forward.9} parent=65 // loop_header
                  %s370 = sphi 0, %s374
                  %p371 = scmp.ge.s32.totalorder %s370, 1
                  %s375 = sphi %s212, %s212
                  %s376 = sphi %s207, %s207
                $region76: #{discriminator_forward.9} parent=65 // loop_header_branch
                  %373 = sbr.rel (%p371) target = $region80
                $region77: #{discriminator_forward.9} parent=65 // loop_body
                  %v377 = vld [vmem:[%s375] sm:%s368]
                  %378 = vst [vmem:[%s376] sm:%s368] %v377
                  %v379 = vld [vmem:[%s375 + $0x8] sm:%s368]
                  %380 = vst [vmem:[%s376 + $0x4] sm:%s368] %v379
                  %v381 = vld [vmem:[%s375 + $0x10] sm:%s368]
                  %382 = vst [vmem:[%s376 + $0x8] sm:%s368] %v381
                  %v383 = vld [vmem:[%s375 + $0x18] sm:%s368]
                  %384 = vst [vmem:[%s376 + $0xc] sm:%s368] %v383
                  %v385 = vld [vmem:[%s375 + $0x20] sm:%s368]
                  %386 = vst [vmem:[%s376 + $0x10] sm:%s368] %v385
                  %v387 = vld [vmem:[%s375 + $0x28] sm:%s368]
                  %388 = vst [vmem:[%s376 + $0x14] sm:%s368] %v387
                  %v389 = vld [vmem:[%s375 + $0x30] sm:%s368]
                  %390 = vst [vmem:[%s376 + $0x18] sm:%s368] %v389
                  %v391 = vld [vmem:[%s375 + $0x38] sm:%s368]
                  %392 = vst [vmem:[%s376 + $0x1c] sm:%s368] %v391
                  %v393 = vld [vmem:[%s375 + $0x40] sm:%s368]
                  %394 = vst [vmem:[%s376 + $0x20] sm:%s368] %v393
                  %v395 = vld [vmem:[%s375 + $0x48] sm:%s368]
                  %396 = vst [vmem:[%s376 + $0x24] sm:%s368] %v395
                  %v397 = vld [vmem:[%s375 + $0x50] sm:%s368]
                  %398 = vst [vmem:[%s376 + $0x28] sm:%s368] %v397
                  %v399 = vld [vmem:[%s375 + $0x58] sm:%s368]
                  %400 = vst [vmem:[%s376 + $0x2c] sm:%s368] %v399
                  %v401 = vld [vmem:[%s375 + $0x60] sm:%s368]
                  %402 = vst [vmem:[%s376 + $0x30] sm:%s368] %v401
                  %v403 = vld [vmem:[%s375 + $0x68] sm:%s368]
                  %404 = vst [vmem:[%s376 + $0x34] sm:%s368] %v403
                  %v405 = vld [vmem:[%s375 + $0x70] sm:%s368]
                  %406 = vst [vmem:[%s376 + $0x38] sm:%s368] %v405
                  %v407 = vld [vmem:[%s375 + $0x78] sm:%s368]
                  %408 = vst [vmem:[%s376 + $0x3c] sm:%s368] %v407
                  %v409 = vld [vmem:[%s375 + $0x80] sm:%s368]
                  %410 = vst [vmem:[%s376 + $0x40] sm:%s368] %v409
                  %v411 = vld [vmem:[%s375 + $0x88] sm:%s368]
                  %412 = vst [vmem:[%s376 + $0x44] sm:%s368] %v411
                  %v413 = vld [vmem:[%s375 + $0x90] sm:%s368]
                  %414 = vst [vmem:[%s376 + $0x48] sm:%s368] %v413
                  %v415 = vld [vmem:[%s375 + $0x98] sm:%s368]
                  %416 = vst [vmem:[%s376 + $0x4c] sm:%s368] %v415
                  %v417 = vld [vmem:[%s375 + $0xa0] sm:%s368]
                  %418 = vst [vmem:[%s376 + $0x50] sm:%s368] %v417
                  %v419 = vld [vmem:[%s375 + $0xa8] sm:%s368]
                  %420 = vst [vmem:[%s376 + $0x54] sm:%s368] %v419
                  %v421 = vld [vmem:[%s375 + $0xb0] sm:%s368]
                  %422 = vst [vmem:[%s376 + $0x58] sm:%s368] %v421
                  %v423 = vld [vmem:[%s375 + $0xb8] sm:%s368]
                  %424 = vst [vmem:[%s376 + $0x5c] sm:%s368] %v423
                  %v425 = vld [vmem:[%s375 + $0xc0] sm:%s368]
                  %426 = vst [vmem:[%s376 + $0x60] sm:%s368] %v425
                  %v427 = vld [vmem:[%s375 + $0xc8] sm:%s368]
                  %428 = vst [vmem:[%s376 + $0x64] sm:%s368] %v427
                  %v429 = vld [vmem:[%s375 + $0xd0] sm:%s368]
                  %430 = vst [vmem:[%s376 + $0x68] sm:%s368] %v429
                  %v431 = vld [vmem:[%s375 + $0xd8] sm:%s368]
                  %432 = vst [vmem:[%s376 + $0x6c] sm:%s368] %v431
                  %v433 = vld [vmem:[%s375 + $0xe0] sm:%s368]
                  %434 = vst [vmem:[%s376 + $0x70] sm:%s368] %v433
                  %v435 = vld [vmem:[%s375 + $0xe8] sm:%s368]
                  %436 = vst [vmem:[%s376 + $0x74] sm:%s368] %v435
                  %v437 = vld [vmem:[%s375 + $0xf0] sm:%s368]
                  %438 = vst [vmem:[%s376 + $0x78] sm:%s368] %v437
                  %v439 = vld [vmem:[%s375 + $0xf8] sm:%s368]
                  %440 = vst [vmem:[%s376 + $0x7c] sm:%s368] %v439
                  %v441 = vld [vmem:[%s375 + $0x100] sm:%s368]
                  %442 = vst [vmem:[%s376 + $0x80] sm:%s368] %v441
                  %v443 = vld [vmem:[%s375 + $0x108] sm:%s368]
                  %444 = vst [vmem:[%s376 + $0x84] sm:%s368] %v443
                  %v445 = vld [vmem:[%s375 + $0x110] sm:%s368]
                  %446 = vst [vmem:[%s376 + $0x88] sm:%s368] %v445
                  %v447 = vld [vmem:[%s375 + $0x118] sm:%s368]
                  %448 = vst [vmem:[%s376 + $0x8c] sm:%s368] %v447
                  %v449 = vld [vmem:[%s375 + $0x120] sm:%s368]
                  %450 = vst [vmem:[%s376 + $0x90] sm:%s368] %v449
                  %v451 = vld [vmem:[%s375 + $0x128] sm:%s368]
                  %452 = vst [vmem:[%s376 + $0x94] sm:%s368] %v451
                  %v453 = vld [vmem:[%s375 + $0x130] sm:%s368]
                  %454 = vst [vmem:[%s376 + $0x98] sm:%s368] %v453
                  %v455 = vld [vmem:[%s375 + $0x138] sm:%s368]
                  %456 = vst [vmem:[%s376 + $0x9c] sm:%s368] %v455
                  %v457 = vld [vmem:[%s375 + $0x140] sm:%s368]
                  %458 = vst [vmem:[%s376 + $0xa0] sm:%s368] %v457
                  %v459 = vld [vmem:[%s375 + $0x148] sm:%s368]
                  %460 = vst [vmem:[%s376 + $0xa4] sm:%s368] %v459
                  %v461 = vld [vmem:[%s375 + $0x150] sm:%s368]
                  %462 = vst [vmem:[%s376 + $0xa8] sm:%s368] %v461
                  %v463 = vld [vmem:[%s375 + $0x158] sm:%s368]
                  %464 = vst [vmem:[%s376 + $0xac] sm:%s368] %v463
                  %v465 = vld [vmem:[%s375 + $0x160] sm:%s368]
                  %466 = vst [vmem:[%s376 + $0xb0] sm:%s368] %v465
                  %v467 = vld [vmem:[%s375 + $0x168] sm:%s368]
                  %468 = vst [vmem:[%s376 + $0xb4] sm:%s368] %v467
                  %v469 = vld [vmem:[%s375 + $0x170] sm:%s368]
                  %470 = vst [vmem:[%s376 + $0xb8] sm:%s368] %v469
                  %v471 = vld [vmem:[%s375 + $0x178] sm:%s368]
                  %472 = vst [vmem:[%s376 + $0xbc] sm:%s368] %v471
                  %v473 = vld [vmem:[%s375 + $0x180] sm:%s368]
                  %474 = vst [vmem:[%s376 + $0xc0] sm:%s368] %v473
                  %v475 = vld [vmem:[%s375 + $0x188] sm:%s368]
                  %476 = vst [vmem:[%s376 + $0xc4] sm:%s368] %v475
                  %v477 = vld [vmem:[%s375 + $0x190] sm:%s368]
                  %478 = vst [vmem:[%s376 + $0xc8] sm:%s368] %v477
                  %v479 = vld [vmem:[%s375 + $0x198] sm:%s368]
                  %480 = vst [vmem:[%s376 + $0xcc] sm:%s368] %v479
                  %v481 = vld [vmem:[%s375 + $0x1a0] sm:%s368]
                  %482 = vst [vmem:[%s376 + $0xd0] sm:%s368] %v481
                  %v483 = vld [vmem:[%s375 + $0x1a8] sm:%s368]
                  %484 = vst [vmem:[%s376 + $0xd4] sm:%s368] %v483
                  %v485 = vld [vmem:[%s375 + $0x1b0] sm:%s368]
                  %486 = vst [vmem:[%s376 + $0xd8] sm:%s368] %v485
                  %v487 = vld [vmem:[%s375 + $0x1b8] sm:%s368]
                  %488 = vst [vmem:[%s376 + $0xdc] sm:%s368] %v487
                  %v489 = vld [vmem:[%s375 + $0x1c0] sm:%s368]
                  %490 = vst [vmem:[%s376 + $0xe0] sm:%s368] %v489
                  %v491 = vld [vmem:[%s375 + $0x1c8] sm:%s368]
                  %492 = vst [vmem:[%s376 + $0xe4] sm:%s368] %v491
                  %v493 = vld [vmem:[%s375 + $0x1d0] sm:%s368]
                  %494 = vst [vmem:[%s376 + $0xe8] sm:%s368] %v493
                  %v495 = vld [vmem:[%s375 + $0x1d8] sm:%s368]
                  %496 = vst [vmem:[%s376 + $0xec] sm:%s368] %v495
                  %v497 = vld [vmem:[%s375 + $0x1e0] sm:%s368]
                  %498 = vst [vmem:[%s376 + $0xf0] sm:%s368] %v497
                  %v499 = vld [vmem:[%s375 + $0x1e8] sm:%s368]
                  %500 = vst [vmem:[%s376 + $0xf4] sm:%s368] %v499
                  %v501 = vld [vmem:[%s375 + $0x1f0] sm:%s368]
                  %502 = vst [vmem:[%s376 + $0xf8] sm:%s368] %v501
                  %v503 = vld [vmem:[%s375 + $0x1f8] sm:%s368]
                  %504 = vst [vmem:[%s376 + $0xfc] sm:%s368] %v503
                $region78: #{discriminator_forward.9} parent=65 // loop_footer
                  %s374 = sadd.s32 1, %s370
                $region79: #{discriminator_forward.9} parent=65 // loop_footer_branch
                  %369 = sbr.rel target = $region75
                $region80: #{discriminator_forward.9} parent=65 // loop_exit
                  _
              $region66: #{discriminator_forward.9} parent=50 // pred_fallthru
                _
            $region51: #{discriminator_forward.9} parent=46 // pred_fallthru
              _
            // Predicated region
            $region52: #{discriminator_forward.9} parent=46 // pred_check
              _
            $region53: #{discriminator_forward.9} parent=46 // pred_check_branch
              %218 = sbr.rel (0) target = $region55
            $region54: #{discriminator_forward.9} parent=46 // pred_region
              %s220 = ssub.s32 16, 1
              loop: start=0, step=1, limit=1
              $region56: #{discriminator_forward.9} parent=54 // loop_pre_header
                _
              $region57: #{discriminator_forward.9} parent=54 // loop_header
                %s222 = sphi 0, %s226
                %p223 = scmp.ge.s32.totalorder %s222, 1
                %s227 = sphi %s212, %s212
                %s228 = sphi %s207, %s207
              $region58: #{discriminator_forward.9} parent=54 // loop_header_branch
                %225 = sbr.rel (%p223) target = $region62
              $region59: #{discriminator_forward.9} parent=54 // loop_body
                %v229 = vld [vmem:[%s227] sm:%s220]
                %230 = vst [vmem:[%s228] sm:%s220] %v229
                %v231 = vld [vmem:[%s227 + $0x8] sm:%s220]
                %232 = vst [vmem:[%s228 + $0x4] sm:%s220] %v231
                %v233 = vld [vmem:[%s227 + $0x10] sm:%s220]
                %234 = vst [vmem:[%s228 + $0x8] sm:%s220] %v233
                %v235 = vld [vmem:[%s227 + $0x18] sm:%s220]
                %236 = vst [vmem:[%s228 + $0xc] sm:%s220] %v235
                %v237 = vld [vmem:[%s227 + $0x20] sm:%s220]
                %238 = vst [vmem:[%s228 + $0x10] sm:%s220] %v237
                %v239 = vld [vmem:[%s227 + $0x28] sm:%s220]
                %240 = vst [vmem:[%s228 + $0x14] sm:%s220] %v239
                %v241 = vld [vmem:[%s227 + $0x30] sm:%s220]
                %242 = vst [vmem:[%s228 + $0x18] sm:%s220] %v241
                %v243 = vld [vmem:[%s227 + $0x38] sm:%s220]
                %244 = vst [vmem:[%s228 + $0x1c] sm:%s220] %v243
                %v245 = vld [vmem:[%s227 + $0x40] sm:%s220]
                %246 = vst [vmem:[%s228 + $0x20] sm:%s220] %v245
                %v247 = vld [vmem:[%s227 + $0x48] sm:%s220]
                %248 = vst [vmem:[%s228 + $0x24] sm:%s220] %v247
                %v249 = vld [vmem:[%s227 + $0x50] sm:%s220]
                %250 = vst [vmem:[%s228 + $0x28] sm:%s220] %v249
                %v251 = vld [vmem:[%s227 + $0x58] sm:%s220]
                %252 = vst [vmem:[%s228 + $0x2c] sm:%s220] %v251
                %v253 = vld [vmem:[%s227 + $0x60] sm:%s220]
                %254 = vst [vmem:[%s228 + $0x30] sm:%s220] %v253
                %v255 = vld [vmem:[%s227 + $0x68] sm:%s220]
                %256 = vst [vmem:[%s228 + $0x34] sm:%s220] %v255
                %v257 = vld [vmem:[%s227 + $0x70] sm:%s220]
                %258 = vst [vmem:[%s228 + $0x38] sm:%s220] %v257
                %v259 = vld [vmem:[%s227 + $0x78] sm:%s220]
                %260 = vst [vmem:[%s228 + $0x3c] sm:%s220] %v259
                %v261 = vld [vmem:[%s227 + $0x80] sm:%s220]
                %262 = vst [vmem:[%s228 + $0x40] sm:%s220] %v261
                %v263 = vld [vmem:[%s227 + $0x88] sm:%s220]
                %264 = vst [vmem:[%s228 + $0x44] sm:%s220] %v263
                %v265 = vld [vmem:[%s227 + $0x90] sm:%s220]
                %266 = vst [vmem:[%s228 + $0x48] sm:%s220] %v265
                %v267 = vld [vmem:[%s227 + $0x98] sm:%s220]
                %268 = vst [vmem:[%s228 + $0x4c] sm:%s220] %v267
                %v269 = vld [vmem:[%s227 + $0xa0] sm:%s220]
                %270 = vst [vmem:[%s228 + $0x50] sm:%s220] %v269
                %v271 = vld [vmem:[%s227 + $0xa8] sm:%s220]
                %272 = vst [vmem:[%s228 + $0x54] sm:%s220] %v271
                %v273 = vld [vmem:[%s227 + $0xb0] sm:%s220]
                %274 = vst [vmem:[%s228 + $0x58] sm:%s220] %v273
                %v275 = vld [vmem:[%s227 + $0xb8] sm:%s220]
                %276 = vst [vmem:[%s228 + $0x5c] sm:%s220] %v275
                %v277 = vld [vmem:[%s227 + $0xc0] sm:%s220]
                %278 = vst [vmem:[%s228 + $0x60] sm:%s220] %v277
                %v279 = vld [vmem:[%s227 + $0xc8] sm:%s220]
                %280 = vst [vmem:[%s228 + $0x64] sm:%s220] %v279
                %v281 = vld [vmem:[%s227 + $0xd0] sm:%s220]
                %282 = vst [vmem:[%s228 + $0x68] sm:%s220] %v281
                %v283 = vld [vmem:[%s227 + $0xd8] sm:%s220]
                %284 = vst [vmem:[%s228 + $0x6c] sm:%s220] %v283
                %v285 = vld [vmem:[%s227 + $0xe0] sm:%s220]
                %286 = vst [vmem:[%s228 + $0x70] sm:%s220] %v285
                %v287 = vld [vmem:[%s227 + $0xe8] sm:%s220]
                %288 = vst [vmem:[%s228 + $0x74] sm:%s220] %v287
                %v289 = vld [vmem:[%s227 + $0xf0] sm:%s220]
                %290 = vst [vmem:[%s228 + $0x78] sm:%s220] %v289
                %v291 = vld [vmem:[%s227 + $0xf8] sm:%s220]
                %292 = vst [vmem:[%s228 + $0x7c] sm:%s220] %v291
                %v293 = vld [vmem:[%s227 + $0x100] sm:%s220]
                %294 = vst [vmem:[%s228 + $0x80] sm:%s220] %v293
                %v295 = vld [vmem:[%s227 + $0x108] sm:%s220]
                %296 = vst [vmem:[%s228 + $0x84] sm:%s220] %v295
                %v297 = vld [vmem:[%s227 + $0x110] sm:%s220]
                %298 = vst [vmem:[%s228 + $0x88] sm:%s220] %v297
                %v299 = vld [vmem:[%s227 + $0x118] sm:%s220]
                %300 = vst [vmem:[%s228 + $0x8c] sm:%s220] %v299
                %v301 = vld [vmem:[%s227 + $0x120] sm:%s220]
                %302 = vst [vmem:[%s228 + $0x90] sm:%s220] %v301
                %v303 = vld [vmem:[%s227 + $0x128] sm:%s220]
                %304 = vst [vmem:[%s228 + $0x94] sm:%s220] %v303
                %v305 = vld [vmem:[%s227 + $0x130] sm:%s220]
                %306 = vst [vmem:[%s228 + $0x98] sm:%s220] %v305
                %v307 = vld [vmem:[%s227 + $0x138] sm:%s220]
                %308 = vst [vmem:[%s228 + $0x9c] sm:%s220] %v307
                %v309 = vld [vmem:[%s227 + $0x140] sm:%s220]
                %310 = vst [vmem:[%s228 + $0xa0] sm:%s220] %v309
                %v311 = vld [vmem:[%s227 + $0x148] sm:%s220]
                %312 = vst [vmem:[%s228 + $0xa4] sm:%s220] %v311
                %v313 = vld [vmem:[%s227 + $0x150] sm:%s220]
                %314 = vst [vmem:[%s228 + $0xa8] sm:%s220] %v313
                %v315 = vld [vmem:[%s227 + $0x158] sm:%s220]
                %316 = vst [vmem:[%s228 + $0xac] sm:%s220] %v315
                %v317 = vld [vmem:[%s227 + $0x160] sm:%s220]
                %318 = vst [vmem:[%s228 + $0xb0] sm:%s220] %v317
                %v319 = vld [vmem:[%s227 + $0x168] sm:%s220]
                %320 = vst [vmem:[%s228 + $0xb4] sm:%s220] %v319
                %v321 = vld [vmem:[%s227 + $0x170] sm:%s220]
                %322 = vst [vmem:[%s228 + $0xb8] sm:%s220] %v321
                %v323 = vld [vmem:[%s227 + $0x178] sm:%s220]
                %324 = vst [vmem:[%s228 + $0xbc] sm:%s220] %v323
                %v325 = vld [vmem:[%s227 + $0x180] sm:%s220]
                %326 = vst [vmem:[%s228 + $0xc0] sm:%s220] %v325
                %v327 = vld [vmem:[%s227 + $0x188] sm:%s220]
                %328 = vst [vmem:[%s228 + $0xc4] sm:%s220] %v327
                %v329 = vld [vmem:[%s227 + $0x190] sm:%s220]
                %330 = vst [vmem:[%s228 + $0xc8] sm:%s220] %v329
                %v331 = vld [vmem:[%s227 + $0x198] sm:%s220]
                %332 = vst [vmem:[%s228 + $0xcc] sm:%s220] %v331
                %v333 = vld [vmem:[%s227 + $0x1a0] sm:%s220]
                %334 = vst [vmem:[%s228 + $0xd0] sm:%s220] %v333
                %v335 = vld [vmem:[%s227 + $0x1a8] sm:%s220]
                %336 = vst [vmem:[%s228 + $0xd4] sm:%s220] %v335
                %v337 = vld [vmem:[%s227 + $0x1b0] sm:%s220]
                %338 = vst [vmem:[%s228 + $0xd8] sm:%s220] %v337
                %v339 = vld [vmem:[%s227 + $0x1b8] sm:%s220]
                %340 = vst [vmem:[%s228 + $0xdc] sm:%s220] %v339
                %v341 = vld [vmem:[%s227 + $0x1c0] sm:%s220]
                %342 = vst [vmem:[%s228 + $0xe0] sm:%s220] %v341
                %v343 = vld [vmem:[%s227 + $0x1c8] sm:%s220]
                %344 = vst [vmem:[%s228 + $0xe4] sm:%s220] %v343
                %v345 = vld [vmem:[%s227 + $0x1d0] sm:%s220]
                %346 = vst [vmem:[%s228 + $0xe8] sm:%s220] %v345
                %v347 = vld [vmem:[%s227 + $0x1d8] sm:%s220]
                %348 = vst [vmem:[%s228 + $0xec] sm:%s220] %v347
                %v349 = vld [vmem:[%s227 + $0x1e0] sm:%s220]
                %350 = vst [vmem:[%s228 + $0xf0] sm:%s220] %v349
                %v351 = vld [vmem:[%s227 + $0x1e8] sm:%s220]
                %352 = vst [vmem:[%s228 + $0xf4] sm:%s220] %v351
                %v353 = vld [vmem:[%s227 + $0x1f0] sm:%s220]
                %354 = vst [vmem:[%s228 + $0xf8] sm:%s220] %v353
                %v355 = vld [vmem:[%s227 + $0x1f8] sm:%s220]
                %356 = vst [vmem:[%s228 + $0xfc] sm:%s220] %v355
              $region60: #{discriminator_forward.9} parent=54 // loop_footer
                %s226 = sadd.s32 1, %s222
              $region61: #{discriminator_forward.9} parent=54 // loop_footer_branch
                %221 = sbr.rel target = $region57
              $region62: #{discriminator_forward.9} parent=54 // loop_exit
                _
            $region55: #{discriminator_forward.9} parent=46 // pred_fallthru
              _
          $region47: #{discriminator_forward.9} parent=42 // pred_fallthru
            _
          %505 = vnop
        $region43: #{discriminator_forward.9} parent=15 // pred_fallthru
          _
        // Predicated region
        $region81: #{discriminator_forward.9} parent=15 // pred_check
          %p506 = pneg %p104
        $region82: #{discriminator_forward.9} parent=15 // pred_check_branch
          %508 = sbr.rel (%p506) target = $region84
        $region83: #{discriminator_forward.9} parent=15 // pred_region
          %p509 = scmp.lt.s32.totalorder %s17, 1
          %s510 = scalar_select %p509, %s17, 1
          %s511 = scalar_lea.vmem %s2, %s510
        $region84: #{discriminator_forward.9} parent=15 // pred_fallthru
          _
      $region16: #{discriminator_forward.9} parent=5 // pred_fallthru
        _
      %p512 = scmp.le.s32.totalorder 1, %s9
      %p513 = scmp.lt.s32.totalorder %s9, 9
      %p514 = pnand %p512, %p513
      %p515 = pneg %p514
      // Predicated region
      $region85: #{discriminator_forward.9} parent=5 // pred_check
        _
      $region86: #{discriminator_forward.9} parent=5 // pred_check_branch
        %517 = sbr.rel (%p514) target = $region88
      $region87: #{discriminator_forward.9} parent=5 // pred_region
        %s518 = ssub.s32 %s9, 1
        %s519 = sand.u32 %s43, 1
        %s520 = sand.u32 %s43, 1
        %s521 = smul.addr %s520, 64
        %s522 = scalar_lea.vmem [#allocation3], %s521
        // Predicated region
        $region89: #{discriminator_forward.9} parent=87 // pred_check
          %p523 = pneg %p56
        $region90: #{discriminator_forward.9} parent=87 // pred_check_branch
          %525 = sbr.rel (%p523) target = $region92
        $region91: #{discriminator_forward.9} parent=87 // pred_region
          _
        $region92: #{discriminator_forward.9} parent=87 // pred_fallthru
          _
        %s526 = sand.u32 %s71, 1
        %s527 = sand.u32 %s71, 1
        %s528 = smul.addr %s527, 256
        %s529 = scalar_lea.vmem [#allocation4], %s528
        // Predicated region
        $region93: #{discriminator_forward.9} parent=87 // pred_check
          %p530 = pneg %p84
        $region94: #{discriminator_forward.9} parent=87 // pred_check_branch
          %532 = sbr.rel (%p530) target = $region96
        $region95: #{discriminator_forward.9} parent=87 // pred_region
          _
        $region96: #{discriminator_forward.9} parent=87 // pred_fallthru
          _
        %s533 = sand.u32 %s43, 1
        %s534 = sand.u32 %s43, 1
        %s535 = smul.addr %s534, 64
        %s536 = scalar_lea.vmem [#allocation3], %s535
        %p537 = pneg %p56
        %p538 = pneg %p53
        %s539 = sand.u32 %s71, 1
        %s540 = sand.u32 %s71, 1
        %s541 = smul.addr %s540, 256
        %s542 = scalar_lea.vmem [#allocation4], %s541
        %p543 = pneg %p84
        %p544 = pneg %p81
        %p545 = scmp.lt.s32.totalorder %s20, 1
        %s546 = scalar_select %p545, %s20, 1
        %s547 = scalar_lea.vmem %s2, %s546
        %p548 = pneg %p110
        %p549 = pneg %p107
        %p550 = pneg %p138
        %p551 = pneg %p135
        %s552 = sand.u32 %s125, 1
        %s553 = sand.u32 %s125, 1
        %s554 = smul.addr %s553, 16
        %s555 = scalar_lea.vmem [#allocation5], %s554
        %s556 = smul.u32 4, %s19
        %s557 = smul.u32 4, %s21
        %s558 = smul.u32 64, %s21
        %p559 = scmp.lt.s32.totalorder %s20, 1
        %s560 = scalar_select %p559, %s20, 1
        %s561 = scalar_lea.vmem %s2, %s560
        %s562 = smul.u32 4, %s19
        %p563 = scmp.eq.s32.totalorder %s21, 0
        // Predicated region
        $region97: #{discriminator_forward.9} parent=87 // pred_check
          %p564 = pneg %p563
        $region98: #{discriminator_forward.9} parent=87 // pred_check_branch
          %566 = sbr.rel (%p564) target = $region100
        $region99: #{discriminator_forward.9} parent=87 // pred_region
          %567 = vst [vmem:[#allocation2] sm:$0xff] 0.0
          %568 = vst [vmem:[#allocation2 + $0x8] sm:$0xff] 0.0
          %569 = vst [vmem:[#allocation2 + $0x10] sm:$0xff] 0.0
          %570 = vst [vmem:[#allocation2 + $0x18] sm:$0xff] 0.0
        $region100: #{discriminator_forward.9} parent=87 // pred_fallthru
          _
        %v571 = vld [vmem:[#allocation2] sm:$0xff]
        %v572 = vld [vmem:[#allocation2 + $0x8] sm:$0xff]
        %v573 = vld [vmem:[#allocation2 + $0x10] sm:$0xff]
        %v574 = vld [vmem:[#allocation2 + $0x18] sm:$0xff]
        %v575 = vld [vmem:[%s522] sm:$0xff]
        %v576 = vld [vmem:[%s522 + $0x8] sm:$0xff]
        %v577 = vld [vmem:[%s522 + $0x10] sm:$0xff]
        %v578 = vld [vmem:[%s522 + $0x18] sm:$0xff]
        %v579 = vld [vmem:[%s522 + $0x20] sm:$0xff]
        %v580 = vld [vmem:[%s522 + $0x28] sm:$0xff]
        %v581 = vld [vmem:[%s522 + $0x30] sm:$0xff]
        %v582 = vld [vmem:[%s522 + $0x38] sm:$0xff]
        %v583 = vld [vmem:[%s529] sm:$0xf]
        %v584 = vld [vmem:[%s529 + $0x4] sm:$0xf]
        %v585 = vld [vmem:[%s529 + $0x8] sm:$0xf]
        %v586 = vld [vmem:[%s529 + $0xc] sm:$0xf]
        %v587 = vld [vmem:[%s529 + $0x10] sm:$0xf]
        %v588 = vld [vmem:[%s529 + $0x14] sm:$0xf]
        %v589 = vld [vmem:[%s529 + $0x18] sm:$0xf]
        %v590 = vld [vmem:[%s529 + $0x1c] sm:$0xf]
        %v591 = vld [vmem:[%s529 + $0x20] sm:$0xf]
        %v592 = vld [vmem:[%s529 + $0x24] sm:$0xf]
        %v593 = vld [vmem:[%s529 + $0x28] sm:$0xf]
        %v594 = vld [vmem:[%s529 + $0x2c] sm:$0xf]
        %v595 = vld [vmem:[%s529 + $0x30] sm:$0xf]
        %v596 = vld [vmem:[%s529 + $0x34] sm:$0xf]
        %v597 = vld [vmem:[%s529 + $0x38] sm:$0xf]
        %v598 = vld [vmem:[%s529 + $0x3c] sm:$0xf]
        %v599 = vld [vmem:[%s529 + $0x40] sm:$0xf]
        %v600 = vld [vmem:[%s529 + $0x44] sm:$0xf]
        %v601 = vld [vmem:[%s529 + $0x48] sm:$0xf]
        %v602 = vld [vmem:[%s529 + $0x4c] sm:$0xf]
        %v603 = vld [vmem:[%s529 + $0x50] sm:$0xf]
        %v604 = vld [vmem:[%s529 + $0x54] sm:$0xf]
        %v605 = vld [vmem:[%s529 + $0x58] sm:$0xf]
        %v606 = vld [vmem:[%s529 + $0x5c] sm:$0xf]
        %v607 = vld [vmem:[%s529 + $0x60] sm:$0xf]
        %v608 = vld [vmem:[%s529 + $0x64] sm:$0xf]
        %v609 = vld [vmem:[%s529 + $0x68] sm:$0xf]
        %v610 = vld [vmem:[%s529 + $0x6c] sm:$0xf]
        %v611 = vld [vmem:[%s529 + $0x70] sm:$0xf]
        %v612 = vld [vmem:[%s529 + $0x74] sm:$0xf]
        %v613 = vld [vmem:[%s529 + $0x78] sm:$0xf]
        %v614 = vld [vmem:[%s529 + $0x7c] sm:$0xf]
        %v615 = vld [vmem:[%s529 + $0x80] sm:$0xf]
        %v616 = vld [vmem:[%s529 + $0x84] sm:$0xf]
        %v617 = vld [vmem:[%s529 + $0x88] sm:$0xf]
        %v618 = vld [vmem:[%s529 + $0x8c] sm:$0xf]
        %v619 = vld [vmem:[%s529 + $0x90] sm:$0xf]
        %v620 = vld [vmem:[%s529 + $0x94] sm:$0xf]
        %v621 = vld [vmem:[%s529 + $0x98] sm:$0xf]
        %v622 = vld [vmem:[%s529 + $0x9c] sm:$0xf]
        %v623 = vld [vmem:[%s529 + $0xa0] sm:$0xf]
        %v624 = vld [vmem:[%s529 + $0xa4] sm:$0xf]
        %v625 = vld [vmem:[%s529 + $0xa8] sm:$0xf]
        %v626 = vld [vmem:[%s529 + $0xac] sm:$0xf]
        %v627 = vld [vmem:[%s529 + $0xb0] sm:$0xf]
        %v628 = vld [vmem:[%s529 + $0xb4] sm:$0xf]
        %v629 = vld [vmem:[%s529 + $0xb8] sm:$0xf]
        %v630 = vld [vmem:[%s529 + $0xbc] sm:$0xf]
        %v631 = vld [vmem:[%s529 + $0xc0] sm:$0xf]
        %v632 = vld [vmem:[%s529 + $0xc4] sm:$0xf]
        %v633 = vld [vmem:[%s529 + $0xc8] sm:$0xf]
        %v634 = vld [vmem:[%s529 + $0xcc] sm:$0xf]
        %v635 = vld [vmem:[%s529 + $0xd0] sm:$0xf]
        %v636 = vld [vmem:[%s529 + $0xd4] sm:$0xf]
        %v637 = vld [vmem:[%s529 + $0xd8] sm:$0xf]
        %v638 = vld [vmem:[%s529 + $0xdc] sm:$0xf]
        %v639 = vld [vmem:[%s529 + $0xe0] sm:$0xf]
        %v640 = vld [vmem:[%s529 + $0xe4] sm:$0xf]
        %v641 = vld [vmem:[%s529 + $0xe8] sm:$0xf]
        %v642 = vld [vmem:[%s529 + $0xec] sm:$0xf]
        %v643 = vld [vmem:[%s529 + $0xf0] sm:$0xf]
        %v644 = vld [vmem:[%s529 + $0xf4] sm:$0xf]
        %v645 = vld [vmem:[%s529 + $0xf8] sm:$0xf]
        %v646 = vld [vmem:[%s529 + $0xfc] sm:$0xf]
        %v655 = vunpack.c.l.b16 %v575
        %v656 = vunpack.c.h.b16 %v575
        %v657 = vunpack.c.l.b16 %v576
        %v658 = vunpack.c.h.b16 %v576
        %v659 = vunpack.c.l.b16 %v577
        %v660 = vunpack.c.h.b16 %v577
        %v661 = vunpack.c.l.b16 %v578
        %v662 = vunpack.c.h.b16 %v578
        %v663 = vunpack.c.l.b16 %v579
        %v664 = vunpack.c.h.b16 %v579
        %v665 = vunpack.c.l.b16 %v580
        %v666 = vunpack.c.h.b16 %v580
        %v667 = vunpack.c.l.b16 %v581
        %v668 = vunpack.c.h.b16 %v581
        %v669 = vunpack.c.l.b16 %v582
        %v670 = vunpack.c.h.b16 %v582
        %v671 = vpack.c.b16 %v659, %v655
        %v672 = vpack.c.b16 %v660, %v656
        %v673 = vpack.c.b16 %v661, %v657
        %v674 = vpack.c.b16 %v662, %v658
        %v675 = vpack.c.b16 %v667, %v663
        %v676 = vpack.c.b16 %v668, %v664
        %v677 = vpack.c.b16 %v669, %v665
        %v678 = vpack.c.b16 %v670, %v666
        %v751 = vunpack.c.l.b16 %v583
        %v752 = vunpack.c.l.b16 %v584
        %v753 = vunpack.c.l.b16 %v585
        %v754 = vunpack.c.l.b16 %v586
        %v755 = vunpack.c.l.b16 %v587
        %v756 = vunpack.c.l.b16 %v588
        %v757 = vunpack.c.l.b16 %v589
        %v758 = vunpack.c.l.b16 %v590
        %v759 = vunpack.c.l.b16 %v591
        %v760 = vunpack.c.l.b16 %v592
        %v761 = vunpack.c.l.b16 %v593
        %v762 = vunpack.c.l.b16 %v594
        %v763 = vunpack.c.l.b16 %v595
        %v764 = vunpack.c.l.b16 %v596
        %v765 = vunpack.c.l.b16 %v597
        %v766 = vunpack.c.l.b16 %v598
        %v767 = vunpack.c.l.b16 %v599
        %v768 = vunpack.c.l.b16 %v600
        %v769 = vunpack.c.l.b16 %v601
        %v770 = vunpack.c.l.b16 %v602
        %v771 = vunpack.c.l.b16 %v603
        %v772 = vunpack.c.l.b16 %v604
        %v773 = vunpack.c.l.b16 %v605
        %v774 = vunpack.c.l.b16 %v606
        %v775 = vunpack.c.l.b16 %v607
        %v776 = vunpack.c.l.b16 %v608
        %v777 = vunpack.c.l.b16 %v609
        %v778 = vunpack.c.l.b16 %v610
        %v779 = vunpack.c.l.b16 %v611
        %v780 = vunpack.c.l.b16 %v612
        %v781 = vunpack.c.l.b16 %v613
        %v782 = vunpack.c.l.b16 %v614
        %v783 = vunpack.c.l.b16 %v615
        %v784 = vunpack.c.l.b16 %v616
        %v785 = vunpack.c.l.b16 %v617
        %v786 = vunpack.c.l.b16 %v618
        %v787 = vunpack.c.l.b16 %v619
        %v788 = vunpack.c.l.b16 %v620
        %v789 = vunpack.c.l.b16 %v621
        %v790 = vunpack.c.l.b16 %v622
        %v791 = vunpack.c.l.b16 %v623
        %v792 = vunpack.c.l.b16 %v624
        %v793 = vunpack.c.l.b16 %v625
        %v794 = vunpack.c.l.b16 %v626
        %v795 = vunpack.c.l.b16 %v627
        %v796 = vunpack.c.l.b16 %v628
        %v797 = vunpack.c.l.b16 %v629
        %v798 = vunpack.c.l.b16 %v630
        %v799 = vunpack.c.l.b16 %v631
        %v800 = vunpack.c.l.b16 %v632
        %v801 = vunpack.c.l.b16 %v633
        %v802 = vunpack.c.l.b16 %v634
        %v803 = vunpack.c.l.b16 %v635
        %v804 = vunpack.c.l.b16 %v636
        %v805 = vunpack.c.l.b16 %v637
        %v806 = vunpack.c.l.b16 %v638
        %v807 = vunpack.c.l.b16 %v639
        %v808 = vunpack.c.l.b16 %v640
        %v809 = vunpack.c.l.b16 %v641
        %v810 = vunpack.c.l.b16 %v642
        %v811 = vunpack.c.l.b16 %v643
        %v812 = vunpack.c.l.b16 %v644
        %v813 = vunpack.c.l.b16 %v645
        %v814 = vunpack.c.l.b16 %v646
        %v815 = vpack.c.b16 %v752, %v751
        %v816 = vpack.c.b16 %v754, %v753
        %v817 = vpack.c.b16 %v756, %v755
        %v818 = vpack.c.b16 %v758, %v757
        %v819 = vpack.c.b16 %v760, %v759
        %v820 = vpack.c.b16 %v762, %v761
        %v821 = vpack.c.b16 %v764, %v763
        %v822 = vpack.c.b16 %v766, %v765
        %v823 = vpack.c.b16 %v768, %v767
        %v824 = vpack.c.b16 %v770, %v769
        %v825 = vpack.c.b16 %v772, %v771
        %v826 = vpack.c.b16 %v774, %v773
        %v827 = vpack.c.b16 %v776, %v775
        %v828 = vpack.c.b16 %v778, %v777
        %v829 = vpack.c.b16 %v780, %v779
        %v830 = vpack.c.b16 %v782, %v781
        %v831 = vpack.c.b16 %v784, %v783
        %v832 = vpack.c.b16 %v786, %v785
        %v833 = vpack.c.b16 %v788, %v787
        %v834 = vpack.c.b16 %v790, %v789
        %v835 = vpack.c.b16 %v792, %v791
        %v836 = vpack.c.b16 %v794, %v793
        %v837 = vpack.c.b16 %v796, %v795
        %v838 = vpack.c.b16 %v798, %v797
        %v839 = vpack.c.b16 %v800, %v799
        %v840 = vpack.c.b16 %v802, %v801
        %v841 = vpack.c.b16 %v804, %v803
        %v842 = vpack.c.b16 %v806, %v805
        %v843 = vpack.c.b16 %v808, %v807
        %v844 = vpack.c.b16 %v810, %v809
        %v845 = vpack.c.b16 %v812, %v811
        %v846 = vpack.c.b16 %v814, %v813
        %879 = vmatpush.bf16.msra.mxu0 %v822
        %880 = vmatpush.bf16.msra.mxu0 %v821
        %881 = vmatpush.bf16.msra.mxu0 %v820
        %882 = vmatpush.bf16.msra.mxu0 %v819
        %883 = vmatpush.bf16.msra.mxu0 %v818
        %884 = vmatpush.bf16.msra.mxu0 %v817
        %885 = vmatpush.bf16.msra.mxu0 %v816
        %886 = vmatpush.bf16.msra.mxu0 %v815
        %887 = vmatmul.bf16.gmra.mxu0 %v671
        %v888 = vpop.f32.mrf.mxu0
        %v889 = vadd.f32 0.0, %v888
        %v890 = vpop.f32.mrf.mxu0
        %v891 = vadd.f32 0.0, %v890
        %892 = vmatmul.bf16.gmra.mxu0 %v675
        %v893 = vpop.f32.mrf.mxu0
        %v894 = vadd.f32 0.0, %v893
        %v895 = vpop.f32.mrf.mxu0
        %v896 = vadd.f32 0.0, %v895
        %897 = vdwg.mxu0
        %898 = vmatpush.bf16.msra.mxu0 %v830
        %899 = vmatpush.bf16.msra.mxu0 %v829
        %900 = vmatpush.bf16.msra.mxu0 %v828
        %901 = vmatpush.bf16.msra.mxu0 %v827
        %902 = vmatpush.bf16.msra.mxu0 %v826
        %903 = vmatpush.bf16.msra.mxu0 %v825
        %904 = vmatpush.bf16.msra.mxu0 %v824
        %905 = vmatpush.bf16.msra.mxu0 %v823
        %906 = vmatmul.bf16.gmra.mxu0 %v672
        %v907 = vpop.f32.mrf.mxu0
        %v908 = vadd.f32 %v889, %v907
        %v909 = vpop.f32.mrf.mxu0
        %v910 = vadd.f32 %v891, %v909
        %911 = vmatmul.bf16.gmra.mxu0 %v676
        %v912 = vpop.f32.mrf.mxu0
        %v913 = vadd.f32 %v894, %v912
        %v914 = vpop.f32.mrf.mxu0
        %v915 = vadd.f32 %v896, %v914
        %916 = vdwg.mxu0
        %917 = vmatpush.bf16.msra.mxu0 %v838
        %918 = vmatpush.bf16.msra.mxu0 %v837
        %919 = vmatpush.bf16.msra.mxu0 %v836
        %920 = vmatpush.bf16.msra.mxu0 %v835
        %921 = vmatpush.bf16.msra.mxu0 %v834
        %922 = vmatpush.bf16.msra.mxu0 %v833
        %923 = vmatpush.bf16.msra.mxu0 %v832
        %924 = vmatpush.bf16.msra.mxu0 %v831
        %925 = vmatmul.bf16.gmra.mxu0 %v673
        %v926 = vpop.f32.mrf.mxu0
        %v927 = vadd.f32 %v908, %v926
        %v928 = vpop.f32.mrf.mxu0
        %v929 = vadd.f32 %v910, %v928
        %930 = vmatmul.bf16.gmra.mxu0 %v677
        %v931 = vpop.f32.mrf.mxu0
        %v932 = vadd.f32 %v913, %v931
        %v933 = vpop.f32.mrf.mxu0
        %v934 = vadd.f32 %v915, %v933
        %935 = vdwg.mxu0
        %936 = vmatpush.bf16.msra.mxu0 %v846
        %937 = vmatpush.bf16.msra.mxu0 %v845
        %938 = vmatpush.bf16.msra.mxu0 %v844
        %939 = vmatpush.bf16.msra.mxu0 %v843
        %940 = vmatpush.bf16.msra.mxu0 %v842
        %941 = vmatpush.bf16.msra.mxu0 %v841
        %942 = vmatpush.bf16.msra.mxu0 %v840
        %943 = vmatpush.bf16.msra.mxu0 %v839
        %944 = vmatmul.bf16.gmra.mxu0 %v674
        %v945 = vpop.f32.mrf.mxu0
        %v946 = vadd.f32 %v927, %v945
        %v947 = vpop.f32.mrf.mxu0
        %v948 = vadd.f32 %v929, %v947
        %949 = vmatmul.bf16.gmra.mxu0 %v678
        %v950 = vpop.f32.mrf.mxu0
        %v951 = vadd.f32 %v932, %v950
        %v952 = vpop.f32.mrf.mxu0
        %v953 = vadd.f32 %v934, %v952
        %954 = vdwg.mxu0
        %v955 = vadd.f32 %v571, %v946
        %v956 = vadd.f32 %v572, %v948
        %v957 = vadd.f32 %v573, %v951
        %v958 = vadd.f32 %v574, %v953
        %959 = vst [vmem:[#allocation2] sm:$0xff] %v955
        %960 = vst [vmem:[#allocation2 + $0x8] sm:$0xff] %v956
        %961 = vst [vmem:[#allocation2 + $0x10] sm:$0xff] %v957
        %962 = vst [vmem:[#allocation2 + $0x18] sm:$0xff] %v958
        %p963 = scmp.eq.s32.totalorder %s21, 3
        // Predicated region
        $region101: #{discriminator_forward.9} parent=87 // pred_check
          %p964 = pneg %p963
        $region102: #{discriminator_forward.9} parent=87 // pred_check_branch
          %966 = sbr.rel (%p964) target = $region104
        $region103: #{discriminator_forward.9} parent=87 // pred_region
          %v967 = vld [vmem:[#allocation2] sm:$0xff]
          %v968 = vld [vmem:[#allocation2 + $0x8] sm:$0xff]
          %v969 = vld [vmem:[#allocation2 + $0x10] sm:$0xff]
          %v970 = vld [vmem:[#allocation2 + $0x18] sm:$0xff]
          %v971 = vld [vmem:[%s561] sm:$0x1]
          %v973 = vperm.slane %v971, 0
          %v975 = vadd.f32 %v967, %v973
          %v976 = vadd.f32 %v968, %v973
          %v977 = vadd.f32 %v969, %v973
          %v978 = vadd.f32 %v970, %v973
          %v979 = vpack.c.bf16 %v975, %v975
          %v980 = vpack.c.bf16 %v976, %v976
          %v981 = vpack.c.bf16 %v977, %v977
          %v982 = vpack.c.bf16 %v978, %v978
          %983 = vst [vmem:[%s555] sm:$0xf] %v979
          %984 = vst [vmem:[%s555 + $0x4] sm:$0xf] %v980
          %985 = vst [vmem:[%s555 + $0x8] sm:$0xf] %v981
          %986 = vst [vmem:[%s555 + $0xc] sm:$0xf] %v982
        $region104: #{discriminator_forward.9} parent=87 // pred_fallthru
          _
        %s987 = sand.u32 %s125, 1
        %s988 = sand.u32 %s125, 1
        %s989 = smul.addr %s988, 16
        %s990 = scalar_lea.vmem [#allocation5], %s989
        // Predicated region
        $region105: #{discriminator_forward.9} parent=87 // pred_check
          %p991 = pneg %p135
        $region106: #{discriminator_forward.9} parent=87 // pred_check_branch
          %993 = sbr.rel (%p991) target = $region108
        $region107: #{discriminator_forward.9} parent=87 // pred_region
          %s994 = smul.u32 4, %s19
          %s995 = smul.addr %s994, 2
          %s996 = sadd.s32 %s20, %s995
          %s997 = smul.addr %s996, 4
          %s998 = scalar_lea.vmem %s3, %s997
          // Predicated region
          $region109: #{discriminator_forward.9} parent=107 // pred_check
            _
          $region110: #{discriminator_forward.9} parent=107 // pred_check_branch
            %1000 = sbr.rel (0) target = $region112
          $region111: #{discriminator_forward.9} parent=107 // pred_region
            // Predicated region
            $region113: #{discriminator_forward.9} parent=111 // pred_check
              _
            $region114: #{discriminator_forward.9} parent=111 // pred_check_branch
              %1002 = sbr.rel target = $region116
            $region115: #{discriminator_forward.9} parent=111 // pred_region
              // Predicated region
              $region128: #{discriminator_forward.9} parent=115 // pred_check
                _
              $region129: #{discriminator_forward.9} parent=115 // pred_check_branch
                %1024 = sbr.rel (0) target = $region131
              $region130: #{discriminator_forward.9} parent=115 // pred_region
                loop: start=0, step=1, limit=1
                $region132: #{discriminator_forward.9} parent=130 // loop_pre_header
                  _
                $region133: #{discriminator_forward.9} parent=130 // loop_header
                  %s1026 = sphi 0, %s1030
                  %p1027 = scmp.ge.s32.totalorder %s1026, 1
                  %s1031 = sphi %s990, %s990
                  %s1032 = sphi %s998, %s998
                $region134: #{discriminator_forward.9} parent=130 // loop_header_branch
                  %1029 = sbr.rel (%p1027) target = $region138
                $region135: #{discriminator_forward.9} parent=130 // loop_body
                  _
                $region136: #{discriminator_forward.9} parent=130 // loop_footer
                  %s1030 = sadd.s32 1, %s1026
                $region137: #{discriminator_forward.9} parent=130 // loop_footer_branch
                  %1025 = sbr.rel target = $region133
                $region138: #{discriminator_forward.9} parent=130 // loop_exit
                  _
                %s1034 = ssub.s32 16, 1
                loop: start=0, step=1, limit=1
                $region139: #{discriminator_forward.9} parent=130 // loop_pre_header
                  _
                $region140: #{discriminator_forward.9} parent=130 // loop_header
                  %s1036 = sphi 0, %s1040
                  %p1037 = scmp.ge.s32.totalorder %s1036, 1
                  %s1041 = sphi %s990, %s990
                  %s1042 = sphi %s998, %s998
                $region141: #{discriminator_forward.9} parent=130 // loop_header_branch
                  %1039 = sbr.rel (%p1037) target = $region145
                $region142: #{discriminator_forward.9} parent=130 // loop_body
                  %v1043 = vld [vmem:[%s1041] sm:%s1034]
                  %1044 = vst [vmem:[%s1042] sm:%s1034] %v1043
                  %v1045 = vld [vmem:[%s1041 + $0x4] sm:%s1034]
                  %1046 = vst [vmem:[%s1042 + $0x8] sm:%s1034] %v1045
                  %v1047 = vld [vmem:[%s1041 + $0x8] sm:%s1034]
                  %1048 = vst [vmem:[%s1042 + $0x10] sm:%s1034] %v1047
                  %v1049 = vld [vmem:[%s1041 + $0xc] sm:%s1034]
                  %1050 = vst [vmem:[%s1042 + $0x18] sm:%s1034] %v1049
                $region143: #{discriminator_forward.9} parent=130 // loop_footer
                  %s1040 = sadd.s32 1, %s1036
                $region144: #{discriminator_forward.9} parent=130 // loop_footer_branch
                  %1035 = sbr.rel target = $region140
                $region145: #{discriminator_forward.9} parent=130 // loop_exit
                  _
              $region131: #{discriminator_forward.9} parent=115 // pred_fallthru
                _
            $region116: #{discriminator_forward.9} parent=111 // pred_fallthru
              _
            // Predicated region
            $region117: #{discriminator_forward.9} parent=111 // pred_check
              _
            $region118: #{discriminator_forward.9} parent=111 // pred_check_branch
              %1004 = sbr.rel (0) target = $region120
            $region119: #{discriminator_forward.9} parent=111 // pred_region
              %s1006 = ssub.s32 16, 1
              loop: start=0, step=1, limit=1
              $region121: #{discriminator_forward.9} parent=119 // loop_pre_header
                _
              $region122: #{discriminator_forward.9} parent=119 // loop_header
                %s1008 = sphi 0, %s1012
                %p1009 = scmp.ge.s32.totalorder %s1008, 1
                %s1013 = sphi %s990, %s990
                %s1014 = sphi %s998, %s998
              $region123: #{discriminator_forward.9} parent=119 // loop_header_branch
                %1011 = sbr.rel (%p1009) target = $region127
              $region124: #{discriminator_forward.9} parent=119 // loop_body
                %v1015 = vld [vmem:[%s1013] sm:%s1006]
                %1016 = vst [vmem:[%s1014] sm:%s1006] %v1015
                %v1017 = vld [vmem:[%s1013 + $0x4] sm:%s1006]
                %1018 = vst [vmem:[%s1014 + $0x8] sm:%s1006] %v1017
                %v1019 = vld [vmem:[%s1013 + $0x8] sm:%s1006]
                %1020 = vst [vmem:[%s1014 + $0x10] sm:%s1006] %v1019
                %v1021 = vld [vmem:[%s1013 + $0xc] sm:%s1006]
                %1022 = vst [vmem:[%s1014 + $0x18] sm:%s1006] %v1021
              $region125: #{discriminator_forward.9} parent=119 // loop_footer
                %s1012 = sadd.s32 1, %s1008
              $region126: #{discriminator_forward.9} parent=119 // loop_footer_branch
                %1007 = sbr.rel target = $region122
              $region127: #{discriminator_forward.9} parent=119 // loop_exit
                _
            $region120: #{discriminator_forward.9} parent=111 // pred_fallthru
              _
          $region112: #{discriminator_forward.9} parent=107 // pred_fallthru
            _
          %1051 = vnop
        $region108: #{discriminator_forward.9} parent=87 // pred_fallthru
          _
      $region88: #{discriminator_forward.9} parent=5 // pred_fallthru
        _
      %p1052 = scmp.le.s32.totalorder 2, %s9
      // Predicated region
      $region146: #{discriminator_forward.9} parent=5 // pred_check
        %p1053 = pneg %p1052
      $region147: #{discriminator_forward.9} parent=5 // pred_check_branch
        %1055 = sbr.rel (%p1053) target = $region149
      $region148: #{discriminator_forward.9} parent=5 // pred_region
        %s1056 = ssub.s32 %s9, 2
        // Predicated region
        $region150: #{discriminator_forward.9} parent=148 // pred_check
          %p1057 = pneg %p141
        $region151: #{discriminator_forward.9} parent=148 // pred_check_branch
          %1059 = sbr.rel (%p1057) target = $region153
        $region152: #{discriminator_forward.9} parent=148 // pred_region
          %s1060 = sand.u32 %s126, 1
          %s1061 = sand.u32 %s126, 1
          %s1062 = smul.addr %s1061, 16
          %s1063 = scalar_lea.vmem [#allocation5], %s1062
        $region153: #{discriminator_forward.9} parent=148 // pred_fallthru
          _
      $region149: #{discriminator_forward.9} parent=5 // pred_fallthru
        _
    $region6: #{discriminator_forward.9} parent=1 // loop_footer
      %s13 = sadd.s32 1, %s9
    $region7: #{discriminator_forward.9} parent=1 // loop_footer_branch
      %8 = sbr.rel target = $region3
    $region8: #{discriminator_forward.9} parent=1 // loop_exit
      _

// kernel: discriminator_forward.11
$region0: #{discriminator_forward.11}
  #allocation0 [shape = 'u32[]', space=smem, size = 0x4, offset = 0x4, fixed_abs, tag = 'smem constant byte address 0x4 - core index']
  #allocation1 [shape = 'u32[72,128]{1,0:T(1,128)}', space=vmem, size = 0x9000, scoped, tag = 'internal scratch']
  #allocation2 [shape = 'f32[8,128]{1,0:T(8,128)}', space=vmem, size = 0x1000, scoped, tag = 'scratch operand']
  %s0 = inlined_call_operand.vmem [shape: bf16[8,4096], index: 0, kind: input, shape index: {}]
  %s1 = inlined_call_operand.vmem [shape: bf16[4096,128], index: 1, kind: input, shape index: {}]
  %s2 = inlined_call_operand.vmem [shape: f32[1,128], index: 2, kind: input, shape index: {}]
  %s3 = inlined_call_operand.vmem [shape: f32[8,128], index: 3, kind: output, shape index: {}]
  %s4 = sld [smem:[#allocation0]]
  $region53: #{discriminator_forward.11} parent=0
    _
  %s6 = ssub.s32 1, %s4
  %s7 = scalar_select 0, %s6, %s4
  loop: start=0, step=1, limit=10
  $region2: #{discriminator_forward.11} parent=0 // loop_pre_header
    _
  $region3: #{discriminator_forward.11} parent=0 // loop_header
    %s9 = sphi 0, %s13
    %p10 = scmp.ge.s32.totalorder %s9, 10
    %s16 = sphi 0, %s35
    %s17 = sphi 0, %s31
    %s18 = sphi 0, %s27
    %s19 = sphi 0, %s16
    %s20 = sphi 0, %s17
    %s21 = sphi 0, %s18
    %s22 = sphi 0, %s19
    %s23 = sphi 0, %s20
    %s24 = sphi 0, %s21
    %s40 = sphi 0, %s42
    %s43 = sphi 0, %s40
    %s44 = sphi 0, %s43
    %s60 = sphi 0, %s44
    %s68 = sphi 0, %s70
    %s71 = sphi 0, %s68
    %s72 = sphi 0, %s71
    %s88 = sphi 0, %s72
    %s94 = sphi 0, %s96
    %s97 = sphi 0, %s94
    %s98 = sphi 0, %s97
    %s114 = sphi 0, %s98
    %s122 = sphi 0, %s124
    %s125 = sphi 0, %s122
    %s126 = sphi 0, %s125
    %s142 = sphi 0, %s126
  $region4: #{discriminator_forward.11} parent=0 // loop_header_branch
    %12 = sbr.rel (%p10) target = $region8
  $region5: #{discriminator_forward.11} parent=0 // loop_body
    %s14 = ssub.s32 %s9, 1
    %s15 = ssub.s32 %s9, 2
    %s25 = sadd.s32 1, %s18
    %p26 = scmp.ge.s32.totalorder %s25, 8
    %s27 = scalar_select %p26, 0, %s25
    %s28 = sadd.s32 1, %s17
    %s29 = scalar_select %p26, %s28, %s17
    %p30 = scmp.ge.s32.totalorder %s29, 1
    %s31 = scalar_select %p30, 0, %s29
    %s32 = sadd.s32 1, %s16
    %s33 = scalar_select %p30, %s32, %s16
    %p34 = scmp.ge.s32.totalorder %s33, 1
    %s35 = scalar_select %p34, 0, %s33
    %s36 = ssub.s32 %s16, %s35
    %s37 = ssub.s32 %s18, %s27
    %s38 = sor.u32 %s36, %s37
    %p39 = scmp.eq.s32.totalorder %s38, 0
    %s41 = sadd.s32 %s40, 1
    %s42 = scalar_select %p39, %s40, %s41
    %p45 = pneg %p39
    %p46 = scmp.eq.s32.totalorder %s9, 7
    %p47 = por %p45, %p46
    %p48 = scmp.ne.s32.totalorder %s40, %s43
    %p49 = scmp.eq.s32.totalorder %s9, 0
    %p50 = por %p48, %p49
    %p51 = scmp.ne.s32.totalorder %s40, %s43
    %p52 = scmp.eq.s32.totalorder %s14, 7
    %p53 = por %p51, %p52
    %p54 = scmp.ne.s32.totalorder %s43, %s44
    %p55 = scmp.eq.s32.totalorder %s14, 0
    %p56 = por %p54, %p55
    %p57 = scmp.ne.s32.totalorder %s43, %s44
    %p58 = scmp.eq.s32.totalorder %s15, 7
    %p59 = por %p57, %p58
    %p61 = scmp.ne.s32.totalorder %s44, %s60
    %p62 = scmp.eq.s32.totalorder %s15, 0
    %p63 = por %p61, %p62
    %s64 = ssub.s32 %s18, %s27
    %s65 = ssub.s32 %s17, %s31
    %s66 = sor.u32 %s64, %s65
    %p67 = scmp.eq.s32.totalorder %s66, 0
    %s69 = sadd.s32 %s68, 1
    %s70 = scalar_select %p67, %s68, %s69
    %p73 = pneg %p67
    %p74 = scmp.eq.s32.totalorder %s9, 7
    %p75 = por %p73, %p74
    %p76 = scmp.ne.s32.totalorder %s68, %s71
    %p77 = scmp.eq.s32.totalorder %s9, 0
    %p78 = por %p76, %p77
    %p79 = scmp.ne.s32.totalorder %s68, %s71
    %p80 = scmp.eq.s32.totalorder %s14, 7
    %p81 = por %p79, %p80
    %p82 = scmp.ne.s32.totalorder %s71, %s72
    %p83 = scmp.eq.s32.totalorder %s14, 0
    %p84 = por %p82, %p83
    %p85 = scmp.ne.s32.totalorder %s71, %s72
    %p86 = scmp.eq.s32.totalorder %s15, 7
    %p87 = por %p85, %p86
    %p89 = scmp.ne.s32.totalorder %s72, %s88
    %p90 = scmp.eq.s32.totalorder %s15, 0
    %p91 = por %p89, %p90
    %s92 = ssub.s32 %s17, %s31
    %p93 = scmp.eq.s32.totalorder %s92, 0
    %s95 = sadd.s32 %s94, 1
    %s96 = scalar_select %p93, %s94, %s95
    %p99 = pneg %p93
    %p100 = scmp.eq.s32.totalorder %s9, 7
    %p101 = por %p99, %p100
    %p102 = scmp.ne.s32.totalorder %s94, %s97
    %p103 = scmp.eq.s32.totalorder %s9, 0
    %p104 = por %p102, %p103
    %p105 = scmp.ne.s32.totalorder %s94, %s97
    %p106 = scmp.eq.s32.totalorder %s14, 7
    %p107 = por %p105, %p106
    %p108 = scmp.ne.s32.totalorder %s97, %s98
    %p109 = scmp.eq.s32.totalorder %s14, 0
    %p110 = por %p108, %p109
    %p111 = scmp.ne.s32.totalorder %s97, %s98
    %p112 = scmp.eq.s32.totalorder %s15, 7
    %p113 = por %p111, %p112
    %p115 = scmp.ne.s32.totalorder %s98, %s114
    %p116 = scmp.eq.s32.totalorder %s15, 0
    %p117 = por %p115, %p116
    %s118 = ssub.s32 %s16, %s35
    %s119 = ssub.s32 %s17, %s31
    %s120 = sor.u32 %s118, %s119
    %p121 = scmp.eq.s32.totalorder %s120, 0
    %s123 = sadd.s32 %s122, 1
    %s124 = scalar_select %p121, %s122, %s123
    %p127 = pneg %p121
    %p128 = scmp.eq.s32.totalorder %s9, 7
    %p129 = por %p127, %p128
    %p130 = scmp.ne.s32.totalorder %s122, %s125
    %p131 = scmp.eq.s32.totalorder %s9, 0
    %p132 = por %p130, %p131
    %p133 = scmp.ne.s32.totalorder %s122, %s125
    %p134 = scmp.eq.s32.totalorder %s14, 7
    %p135 = por %p133, %p134
    %p136 = scmp.ne.s32.totalorder %s125, %s126
    %p137 = scmp.eq.s32.totalorder %s14, 0
    %p138 = por %p136, %p137
    %p139 = scmp.ne.s32.totalorder %s125, %s126
    %p140 = scmp.eq.s32.totalorder %s15, 7
    %p141 = por %p139, %p140
    %p143 = scmp.ne.s32.totalorder %s126, %s142
    %p144 = scmp.eq.s32.totalorder %s15, 0
    %p145 = por %p143, %p144
    %p146 = scmp.le.s32.totalorder 1, %s9
    %p147 = scmp.lt.s32.totalorder %s9, 9
    %p148 = pnand %p146, %p147
    %p149 = pneg %p148
    // Predicated region
    $region9: #{discriminator_forward.11} parent=5 // pred_check
      _
    $region10: #{discriminator_forward.11} parent=5 // pred_check_branch
      %151 = sbr.rel (%p148) target = $region12
    $region11: #{discriminator_forward.11} parent=5 // pred_region
      %s152 = ssub.s32 %s9, 1
      // Predicated region
      $region13: #{discriminator_forward.11} parent=11 // pred_check
        %p153 = pneg %p110
      $region14: #{discriminator_forward.11} parent=11 // pred_check_branch
        %155 = sbr.rel (%p153) target = $region16
      $region15: #{discriminator_forward.11} parent=11 // pred_region
        %p156 = scmp.lt.s32.totalorder %s20, 0
        %s157 = scalar_select %p156, %s20, 0
        %s158 = scalar_lea.vmem %s2, %s157
      $region16: #{discriminator_forward.11} parent=11 // pred_fallthru
        _
    $region12: #{discriminator_forward.11} parent=5 // pred_fallthru
      _
    %p159 = scmp.lt.s32.totalorder %s9, 8
    // Predicated region
    $region17: #{discriminator_forward.11} parent=5 // pred_check
      %p160 = pneg %p159
    $region18: #{discriminator_forward.11} parent=5 // pred_check_branch
      %162 = sbr.rel (%p160) target = $region20
    $region19: #{discriminator_forward.11} parent=5 // pred_region
      // Predicated region
      $region21: #{discriminator_forward.11} parent=19 // pred_check
        %p163 = pneg %p50
      $region22: #{discriminator_forward.11} parent=19 // pred_check_branch
        %165 = sbr.rel (%p163) target = $region24
      $region23: #{discriminator_forward.11} parent=19 // pred_region
        %s166 = smul.u32 4, %s18
        %p167 = scmp.lt.s32.totalorder %s16, 0
        %s168 = scalar_select %p167, %s16, 0
        %p169 = scmp.lt.s32.totalorder %s166, 31
        %s170 = scalar_select %p169, %s166, 31
        %s171 = smul.addr %s168, 32
        %s172 = sadd.s32 %s170, %s171
        %s173 = smul.addr %s172, 4
        %s174 = scalar_lea.vmem %s0, %s173
        %s175 = smul.u32 4, %s18
      $region24: #{discriminator_forward.11} parent=19 // pred_fallthru
        _
      // Predicated region
      $region25: #{discriminator_forward.11} parent=19 // pred_check
        %p176 = pneg %p78
      $region26: #{discriminator_forward.11} parent=19 // pred_check_branch
        %178 = sbr.rel (%p176) target = $region28
      $region27: #{discriminator_forward.11} parent=19 // pred_region
        %s179 = smul.u32 64, %s18
        %p180 = scmp.lt.s32.totalorder %s179, 511
        %s181 = scalar_select %p180, %s179, 511
        %p182 = scmp.lt.s32.totalorder %s17, 0
        %s183 = scalar_select %p182, %s17, 0
        %s184 = sadd.s32 %s183, %s181
        %s185 = smul.addr %s184, 4
        %s186 = scalar_lea.vmem %s1, %s185
        %s187 = smul.u32 64, %s18
      $region28: #{discriminator_forward.11} parent=19 // pred_fallthru
        _
    $region20: #{discriminator_forward.11} parent=5 // pred_fallthru
      _
    %p188 = scmp.le.s32.totalorder 1, %s9
    %p189 = scmp.lt.s32.totalorder %s9, 9
    %p190 = pnand %p188, %p189
    %p191 = pneg %p190
    // Predicated region
    $region29: #{discriminator_forward.11} parent=5 // pred_check
      _
    $region30: #{discriminator_forward.11} parent=5 // pred_check_branch
      %193 = sbr.rel (%p190) target = $region32
    $region31: #{discriminator_forward.11} parent=5 // pred_region
      %s194 = ssub.s32 %s9, 1
      %s195 = smul.u32 4, %s21
      %p196 = scmp.lt.s32.totalorder %s19, 0
      %s197 = scalar_select %p196, %s19, 0
      %p198 = scmp.lt.s32.totalorder %s195, 31
      %s199 = scalar_select %p198, %s195, 31
      %s200 = smul.addr %s197, 32
      %s201 = sadd.s32 %s199, %s200
      %s202 = smul.addr %s201, 4
      %s203 = scalar_lea.vmem %s0, %s202
      %p204 = pneg %p56
      %p205 = pneg %p53
      %s206 = smul.u32 64, %s21
      %p207 = scmp.lt.s32.totalorder %s206, 511
      %s208 = scalar_select %p207, %s206, 511
      %p209 = scmp.lt.s32.totalorder %s20, 0
      %s210 = scalar_select %p209, %s20, 0
      %s211 = sadd.s32 %s210, %s208
      %s212 = smul.addr %s211, 4
      %s213 = scalar_lea.vmem %s1, %s212
      %p214 = pneg %p84
      %p215 = pneg %p81
      %p216 = scmp.lt.s32.totalorder %s20, 0
      %s217 = scalar_select %p216, %s20, 0
      %s218 = scalar_lea.vmem %s2, %s217
      %p219 = pneg %p110
      %p220 = pneg %p107
      %p221 = pneg %p138
      %p222 = pneg %p135
      %p223 = scmp.lt.s32.totalorder %s19, 0
      %s224 = scalar_select %p223, %s19, 0
      %p225 = scmp.lt.s32.totalorder %s20, 0
      %s226 = scalar_select %p225, %s20, 0
      %s227 = sadd.s32 %s226, %s224
      %s228 = smul.addr %s227, 8
      %s229 = scalar_lea.vmem %s3, %s228
      %s230 = smul.u32 4, %s21
      %p231 = scmp.lt.s32.totalorder %s19, 0
      %s232 = scalar_select %p231, %s19, 0
      %p233 = scmp.lt.s32.totalorder %s230, 31
      %s234 = scalar_select %p233, %s230, 31
      %s235 = smul.addr %s232, 32
      %s236 = sadd.s32 %s234, %s235
      %s237 = smul.addr %s236, 4
      %s238 = scalar_lea.vmem %s0, %s237
      %s239 = smul.u32 4, %s21
      %s240 = smul.u32 64, %s21
      %p241 = scmp.lt.s32.totalorder %s240, 511
      %s242 = scalar_select %p241, %s240, 511
      %p243 = scmp.lt.s32.totalorder %s20, 0
      %s244 = scalar_select %p243, %s20, 0
      %s245 = sadd.s32 %s244, %s242
      %s246 = smul.addr %s245, 4
      %s247 = scalar_lea.vmem %s1, %s246
      %s248 = smul.u32 64, %s21
      %p249 = scmp.lt.s32.totalorder %s20, 0
      %s250 = scalar_select %p249, %s20, 0
      %s251 = scalar_lea.vmem %s2, %s250
      %p252 = scmp.lt.s32.totalorder %s19, 0
      %s253 = scalar_select %p252, %s19, 0
      %p254 = scmp.lt.s32.totalorder %s20, 0
      %s255 = scalar_select %p254, %s20, 0
      %s256 = sadd.s32 %s255, %s253
      %s257 = smul.addr %s256, 8
      %s258 = scalar_lea.vmem %s3, %s257
      %p259 = scmp.eq.s32.totalorder %s21, 0
      // Predicated region
      $region33: #{discriminator_forward.11} parent=31 // pred_check
        %p260 = pneg %p259
      $region34: #{discriminator_forward.11} parent=31 // pred_check_branch
        %262 = sbr.rel (%p260) target = $region36
      $region35: #{discriminator_forward.11} parent=31 // pred_region
        %263 = vst [vmem:[#allocation2] sm:$0xff] 0.0
      $region36: #{discriminator_forward.11} parent=31 // pred_fallthru
        _
      %v264 = vld [vmem:[#allocation2] sm:$0xff]
      %v265 = vld [vmem:[%s238] sm:$0xff]
      %v266 = vld [vmem:[%s238 + $0x8] sm:$0xff]
      %v267 = vld [vmem:[%s247] sm:$0xf]
      %v268 = vld [vmem:[%s247 + $0x4] sm:$0xf]
      %v269 = vld [vmem:[%s247 + $0x8] sm:$0xf]
      %v270 = vld [vmem:[%s247 + $0xc] sm:$0xf]
      %v271 = vld [vmem:[%s247 + $0x10] sm:$0xf]
      %v272 = vld [vmem:[%s247 + $0x14] sm:$0xf]
      %v273 = vld [vmem:[%s247 + $0x18] sm:$0xf]
      %v274 = vld [vmem:[%s247 + $0x1c] sm:$0xf]
      %v275 = vld [vmem:[%s247 + $0x20] sm:$0xf]
      %v276 = vld [vmem:[%s247 + $0x24] sm:$0xf]
      %v277 = vld [vmem:[%s247 + $0x28] sm:$0xf]
      %v278 = vld [vmem:[%s247 + $0x2c] sm:$0xf]
      %v279 = vld [vmem:[%s247 + $0x30] sm:$0xf]
      %v280 = vld [vmem:[%s247 + $0x34] sm:$0xf]
      %v281 = vld [vmem:[%s247 + $0x38] sm:$0xf]
      %v282 = vld [vmem:[%s247 + $0x3c] sm:$0xf]
      %v283 = vld [vmem:[%s247 + $0x40] sm:$0xf]
      %v284 = vld [vmem:[%s247 + $0x44] sm:$0xf]
      %v285 = vld [vmem:[%s247 + $0x48] sm:$0xf]
      %v286 = vld [vmem:[%s247 + $0x4c] sm:$0xf]
      %v287 = vld [vmem:[%s247 + $0x50] sm:$0xf]
      %v288 = vld [vmem:[%s247 + $0x54] sm:$0xf]
      %v289 = vld [vmem:[%s247 + $0x58] sm:$0xf]
      %v290 = vld [vmem:[%s247 + $0x5c] sm:$0xf]
      %v291 = vld [vmem:[%s247 + $0x60] sm:$0xf]
      %v292 = vld [vmem:[%s247 + $0x64] sm:$0xf]
      %v293 = vld [vmem:[%s247 + $0x68] sm:$0xf]
      %v294 = vld [vmem:[%s247 + $0x6c] sm:$0xf]
      %v295 = vld [vmem:[%s247 + $0x70] sm:$0xf]
      %v296 = vld [vmem:[%s247 + $0x74] sm:$0xf]
      %v297 = vld [vmem:[%s247 + $0x78] sm:$0xf]
      %v298 = vld [vmem:[%s247 + $0x7c] sm:$0xf]
      %v299 = vld [vmem:[%s247 + $0x80] sm:$0xf]
      %v300 = vld [vmem:[%s247 + $0x84] sm:$0xf]
      %v301 = vld [vmem:[%s247 + $0x88] sm:$0xf]
      %v302 = vld [vmem:[%s247 + $0x8c] sm:$0xf]
      %v303 = vld [vmem:[%s247 + $0x90] sm:$0xf]
      %v304 = vld [vmem:[%s247 + $0x94] sm:$0xf]
      %v305 = vld [vmem:[%s247 + $0x98] sm:$0xf]
      %v306 = vld [vmem:[%s247 + $0x9c] sm:$0xf]
      %v307 = vld [vmem:[%s247 + $0xa0] sm:$0xf]
      %v308 = vld [vmem:[%s247 + $0xa4] sm:$0xf]
      %v309 = vld [vmem:[%s247 + $0xa8] sm:$0xf]
      %v310 = vld [vmem:[%s247 + $0xac] sm:$0xf]
      %v311 = vld [vmem:[%s247 + $0xb0] sm:$0xf]
      %v312 = vld [vmem:[%s247 + $0xb4] sm:$0xf]
      %v313 = vld [vmem:[%s247 + $0xb8] sm:$0xf]
      %v314 = vld [vmem:[%s247 + $0xbc] sm:$0xf]
      %v315 = vld [vmem:[%s247 + $0xc0] sm:$0xf]
      %v316 = vld [vmem:[%s247 + $0xc4] sm:$0xf]
      %v317 = vld [vmem:[%s247 + $0xc8] sm:$0xf]
      %v318 = vld [vmem:[%s247 + $0xcc] sm:$0xf]
      %v319 = vld [vmem:[%s247 + $0xd0] sm:$0xf]
      %v320 = vld [vmem:[%s247 + $0xd4] sm:$0xf]
      %v321 = vld [vmem:[%s247 + $0xd8] sm:$0xf]
      %v322 = vld [vmem:[%s247 + $0xdc] sm:$0xf]
      %v323 = vld [vmem:[%s247 + $0xe0] sm:$0xf]
      %v324 = vld [vmem:[%s247 + $0xe4] sm:$0xf]
      %v325 = vld [vmem:[%s247 + $0xe8] sm:$0xf]
      %v326 = vld [vmem:[%s247 + $0xec] sm:$0xf]
      %v327 = vld [vmem:[%s247 + $0xf0] sm:$0xf]
      %v328 = vld [vmem:[%s247 + $0xf4] sm:$0xf]
      %v329 = vld [vmem:[%s247 + $0xf8] sm:$0xf]
      %v330 = vld [vmem:[%s247 + $0xfc] sm:$0xf]
      %v333 = vunpack.c.l.b16 %v265
      %v334 = vunpack.c.h.b16 %v265
      %v335 = vunpack.c.l.b16 %v266
      %v336 = vunpack.c.h.b16 %v266
      %v337 = vpack.c.b16 %v333, %v333
      %v338 = vpack.c.b16 %v334, %v334
      %v339 = vpack.c.b16 %v335, %v335
      %v340 = vpack.c.b16 %v336, %v336
      %v409 = vunpack.c.l.b16 %v267
      %v410 = vunpack.c.l.b16 %v268
      %v411 = vunpack.c.l.b16 %v269
      %v412 = vunpack.c.l.b16 %v270
      %v413 = vunpack.c.l.b16 %v271
      %v414 = vunpack.c.l.b16 %v272
      %v415 = vunpack.c.l.b16 %v273
      %v416 = vunpack.c.l.b16 %v274
      %v417 = vunpack.c.l.b16 %v275
      %v418 = vunpack.c.l.b16 %v276
      %v419 = vunpack.c.l.b16 %v277
      %v420 = vunpack.c.l.b16 %v278
      %v421 = vunpack.c.l.b16 %v279
      %v422 = vunpack.c.l.b16 %v280
      %v423 = vunpack.c.l.b16 %v281
      %v424 = vunpack.c.l.b16 %v282
      %v425 = vunpack.c.l.b16 %v283
      %v426 = vunpack.c.l.b16 %v284
      %v427 = vunpack.c.l.b16 %v285
      %v428 = vunpack.c.l.b16 %v286
      %v429 = vunpack.c.l.b16 %v287
      %v430 = vunpack.c.l.b16 %v288
      %v431 = vunpack.c.l.b16 %v289
      %v432 = vunpack.c.l.b16 %v290
      %v433 = vunpack.c.l.b16 %v291
      %v434 = vunpack.c.l.b16 %v292
      %v435 = vunpack.c.l.b16 %v293
      %v436 = vunpack.c.l.b16 %v294
      %v437 = vunpack.c.l.b16 %v295
      %v438 = vunpack.c.l.b16 %v296
      %v439 = vunpack.c.l.b16 %v297
      %v440 = vunpack.c.l.b16 %v298
      %v441 = vunpack.c.l.b16 %v299
      %v442 = vunpack.c.l.b16 %v300
      %v443 = vunpack.c.l.b16 %v301
      %v444 = vunpack.c.l.b16 %v302
      %v445 = vunpack.c.l.b16 %v303
      %v446 = vunpack.c.l.b16 %v304
      %v447 = vunpack.c.l.b16 %v305
      %v448 = vunpack.c.l.b16 %v306
      %v449 = vunpack.c.l.b16 %v307
      %v450 = vunpack.c.l.b16 %v308
      %v451 = vunpack.c.l.b16 %v309
      %v452 = vunpack.c.l.b16 %v310
      %v453 = vunpack.c.l.b16 %v311
      %v454 = vunpack.c.l.b16 %v312
      %v455 = vunpack.c.l.b16 %v313
      %v456 = vunpack.c.l.b16 %v314
      %v457 = vunpack.c.l.b16 %v315
      %v458 = vunpack.c.l.b16 %v316
      %v459 = vunpack.c.l.b16 %v317
      %v460 = vunpack.c.l.b16 %v318
      %v461 = vunpack.c.l.b16 %v319
      %v462 = vunpack.c.l.b16 %v320
      %v463 = vunpack.c.l.b16 %v321
      %v464 = vunpack.c.l.b16 %v322
      %v465 = vunpack.c.l.b16 %v323
      %v466 = vunpack.c.l.b16 %v324
      %v467 = vunpack.c.l.b16 %v325
      %v468 = vunpack.c.l.b16 %v326
      %v469 = vunpack.c.l.b16 %v327
      %v470 = vunpack.c.l.b16 %v328
      %v471 = vunpack.c.l.b16 %v329
      %v472 = vunpack.c.l.b16 %v330
      %v473 = vpack.c.b16 %v410, %v409
      %v474 = vpack.c.b16 %v412, %v411
      %v475 = vpack.c.b16 %v414, %v413
      %v476 = vpack.c.b16 %v416, %v415
      %v477 = vpack.c.b16 %v418, %v417
      %v478 = vpack.c.b16 %v420, %v419
      %v479 = vpack.c.b16 %v422, %v421
      %v480 = vpack.c.b16 %v424, %v423
      %v481 = vpack.c.b16 %v426, %v425
      %v482 = vpack.c.b16 %v428, %v427
      %v483 = vpack.c.b16 %v430, %v429
      %v484 = vpack.c.b16 %v432, %v431
      %v485 = vpack.c.b16 %v434, %v433
      %v486 = vpack.c.b16 %v436, %v435
      %v487 = vpack.c.b16 %v438, %v437
      %v488 = vpack.c.b16 %v440, %v439
      %v489 = vpack.c.b16 %v442, %v441
      %v490 = vpack.c.b16 %v444, %v443
      %v491 = vpack.c.b16 %v446, %v445
      %v492 = vpack.c.b16 %v448, %v447
      %v493 = vpack.c.b16 %v450, %v449
      %v494 = vpack.c.b16 %v452, %v451
      %v495 = vpack.c.b16 %v454, %v453
      %v496 = vpack.c.b16 %v456, %v455
      %v497 = vpack.c.b16 %v458, %v457
      %v498 = vpack.c.b16 %v460, %v459
      %v499 = vpack.c.b16 %v462, %v461
      %v500 = vpack.c.b16 %v464, %v463
      %v501 = vpack.c.b16 %v466, %v465
      %v502 = vpack.c.b16 %v468, %v467
      %v503 = vpack.c.b16 %v470, %v469
      %v504 = vpack.c.b16 %v472, %v471
      %537 = vmatpush.bf16.msra.mxu0 %v480
      %538 = vmatpush.bf16.msra.mxu0 %v479
      %539 = vmatpush.bf16.msra.mxu0 %v478
      %540 = vmatpush.bf16.msra.mxu0 %v477
      %541 = vmatpush.bf16.msra.mxu0 %v476
      %542 = vmatpush.bf16.msra.mxu0 %v475
      %543 = vmatpush.bf16.msra.mxu0 %v474
      %544 = vmatpush.bf16.msra.mxu0 %v473
      %545 = vmatmul.bf16.gmra.mxu0 %v337
      %v546 = vpop.f32.mrf.mxu0
      %v547 = vadd.f32 0.0, %v546
      %v548 = vpop.f32.mrf.mxu0
      %549 = vdwg.mxu0
      %550 = vmatpush.bf16.msra.mxu0 %v488
      %551 = vmatpush.bf16.msra.mxu0 %v487
      %552 = vmatpush.bf16.msra.mxu0 %v486
      %553 = vmatpush.bf16.msra.mxu0 %v485
      %554 = vmatpush.bf16.msra.mxu0 %v484
      %555 = vmatpush.bf16.msra.mxu0 %v483
      %556 = vmatpush.bf16.msra.mxu0 %v482
      %557 = vmatpush.bf16.msra.mxu0 %v481
      %558 = vmatmul.bf16.gmra.mxu0 %v338
      %v559 = vpop.f32.mrf.mxu0
      %v560 = vadd.f32 %v547, %v559
      %v561 = vpop.f32.mrf.mxu0
      %562 = vdwg.mxu0
      %563 = vmatpush.bf16.msra.mxu0 %v496
      %564 = vmatpush.bf16.msra.mxu0 %v495
      %565 = vmatpush.bf16.msra.mxu0 %v494
      %566 = vmatpush.bf16.msra.mxu0 %v493
      %567 = vmatpush.bf16.msra.mxu0 %v492
      %568 = vmatpush.bf16.msra.mxu0 %v491
      %569 = vmatpush.bf16.msra.mxu0 %v490
      %570 = vmatpush.bf16.msra.mxu0 %v489
      %571 = vmatmul.bf16.gmra.mxu0 %v339
      %v572 = vpop.f32.mrf.mxu0
      %v573 = vadd.f32 %v560, %v572
      %v574 = vpop.f32.mrf.mxu0
      %575 = vdwg.mxu0
      %576 = vmatpush.bf16.msra.mxu0 %v504
      %577 = vmatpush.bf16.msra.mxu0 %v503
      %578 = vmatpush.bf16.msra.mxu0 %v502
      %579 = vmatpush.bf16.msra.mxu0 %v501
      %580 = vmatpush.bf16.msra.mxu0 %v500
      %581 = vmatpush.bf16.msra.mxu0 %v499
      %582 = vmatpush.bf16.msra.mxu0 %v498
      %583 = vmatpush.bf16.msra.mxu0 %v497
      %584 = vmatmul.bf16.gmra.mxu0 %v340
      %v585 = vpop.f32.mrf.mxu0
      %v586 = vadd.f32 %v573, %v585
      %v587 = vpop.f32.mrf.mxu0
      %588 = vdwg.mxu0
      %v589 = vadd.f32 %v264, %v586
      %590 = vst [vmem:[#allocation2] sm:$0xff] %v589
      %p591 = scmp.eq.s32.totalorder %s21, 7
      // Predicated region
      $region37: #{discriminator_forward.11} parent=31 // pred_check
        %p592 = pneg %p591
      $region38: #{discriminator_forward.11} parent=31 // pred_check_branch
        %594 = sbr.rel (%p592) target = $region40
      $region39: #{discriminator_forward.11} parent=31 // pred_region
        %v595 = vld [vmem:[#allocation2] sm:$0xff]
        %v596 = vld [vmem:[%s251] sm:$0x1]
        %v598 = vperm.slane %v596, 0
        %v600 = vadd.f32 %v595, %v598
        %v601 = vsub.f32 0.0, %v600
        %v602 = vmul.f32 %v601, 1.442695
        %v603 = vpow.pop %v602
        %v604 = vadd.f32 %v603, 1.0
        %v605 = vrcp.pop %v604
        %606 = vst [vmem:[%s258] sm:$0xff] %v605
      $region40: #{discriminator_forward.11} parent=31 // pred_fallthru
        _
      %p607 = scmp.lt.s32.totalorder %s19, 0
      %s608 = scalar_select %p607, %s19, 0
      %p609 = scmp.lt.s32.totalorder %s20, 0
      %s610 = scalar_select %p609, %s20, 0
      %s611 = sadd.s32 %s610, %s608
      %s612 = smul.addr %s611, 8
      %s613 = scalar_lea.vmem %s3, %s612
      // Predicated region
      $region41: #{discriminator_forward.11} parent=31 // pred_check
        %p614 = pneg %p135
      $region42: #{discriminator_forward.11} parent=31 // pred_check_branch
        %616 = sbr.rel (%p614) target = $region44
      $region43: #{discriminator_forward.11} parent=31 // pred_region
        _
      $region44: #{discriminator_forward.11} parent=31 // pred_fallthru
        _
      // Predicated region
      $region45: #{discriminator_forward.11} parent=31 // pred_check
        %p617 = pneg %p135
      $region46: #{discriminator_forward.11} parent=31 // pred_check_branch
        %619 = sbr.rel (%p617) target = $region48
      $region47: #{discriminator_forward.11} parent=31 // pred_region
        %p620 = scmp.lt.s32.totalorder %s19, 0
        %s621 = scalar_select %p620, %s19, 0
        %p622 = scmp.lt.s32.totalorder %s20, 0
        %s623 = scalar_select %p622, %s20, 0
        %s624 = sadd.s32 %s623, %s621
        %s625 = smul.addr %s624, 8
        %s626 = scalar_lea.vmem %s3, %s625
      $region48: #{discriminator_forward.11} parent=31 // pred_fallthru
        _
    $region32: #{discriminator_forward.11} parent=5 // pred_fallthru
      _
    %p627 = scmp.le.s32.totalorder 2, %s9
    // Predicated region
    $region49: #{discriminator_forward.11} parent=5 // pred_check
      %p628 = pneg %p627
    $region50: #{discriminator_forward.11} parent=5 // pred_check_branch
      %630 = sbr.rel (%p628) target = $region52
    $region51: #{discriminator_forward.11} parent=5 // pred_region
      %s631 = ssub.s32 %s9, 2
    $region52: #{discriminator_forward.11} parent=5 // pred_fallthru
      _
  $region6: #{discriminator_forward.11} parent=0 // loop_footer
    %s13 = sadd.s32 1, %s9
  $region7: #{discriminator_forward.11} parent=0 // loop_footer_branch
    %8 = sbr.rel target = $region3
  $region8: #{discriminator_forward.11} parent=0 // loop_exit
    _

</llo_original>
